<compile_context>
chip_gen: v7x
topology: tpu7x:2x2x1
jax: 0.10.0
libtpu: 0.0.40
codegen_flags: <defaults>
</compile_context>

<pallas_src>
import functools

import jax
import jax.numpy as jnp
import numpy as np
from jax.experimental import pallas as pl
from jax.experimental.pallas import tpu as pltpu


def _round_up(x, m):
    return (x + m - 1) // m * m


def _largest_even_divisor(h, cap):
    best = 2
    for th in range(2, min(h, cap) + 1, 2):
        if h % th == 0:
            best = th
    return best


def _basic_block_kernel(x_ref, w1_ref, b1_ref, w2_ref, ws_ref, bc_ref, out_ref,
                        *, H, W, TH, W1, W2):
    # Per grid step (channels compact, no lane padding in HBM):
    #   x_ref : (1, TH+4, W1+2, Cin) bf16  zero-haloed input rows [r0-2, r0+TH+2)
    #   w1_ref: (3, 3, Cin, Cin)     bf16  conv1 (HWIO)
    #   b1_ref: (1, Cin)             f32
    #   w2_ref: (3, 3, Cin, Cout)    bf16  conv2 (HWIO)
    #   ws_ref: (Cin, Cout)          bf16  shortcut 1x1
    #   bc_ref: (1, Cout)            f32   b2 + bs (avgpool of a constant is itself)
    #   out   : (1, TH//2, W//2, Cout) f32
    Cin = x_ref.shape[3]
    Cout = out_ref.shape[3]
    t = pl.program_id(1)
    r0 = t * TH                                   # first (pre-pool) row of this tile

    xt = x_ref[0]                                 # (TH+4, W1+2, Cin) bf16
    a = jnp.maximum(xt, 0.0)                      # first ReLU; relu(0)=0 keeps halo valid

    def conv3x3_acc(src, w_ref, rows, cols, acc):
        # 3x3 conv as 9 accumulated per-tap GEMMs (K = Cin): no im2col patch
        # matrix, no lane concatenation.  dx shift taken once per dx and reused
        # for the 3 dy taps; dy slicing is on the outer axis; cols % 16 == 0 so
        # the 2-D merge for the GEMM operand is layout-free.
        for dx in range(3):
            s_dx = src[:, dx:dx + cols, :]
            for dy in range(3):
                op = s_dx[dy:dy + rows, :, :].reshape(rows * cols, Cin)
                acc = acc + jnp.dot(op, w_ref[dy, dx, :, :],
                                    preferred_element_type=jnp.float32)
        return acc

    # ---- conv1 (Cin -> Cin), evaluated on the 1-pixel-padded grid so its
    # masked output IS conv2's zero-padded input (rows r0-1 .. r0+TH).
    M1 = (TH + 2) * W1
    acc1 = conv3x3_acc(a, w1_ref, TH + 2, W1, jnp.zeros((M1, Cin), jnp.float32))
    h = acc1.reshape(TH + 2, W1, Cin) + b1_ref[...]

    # Zero everything outside the real image: exactly the zero padding conv2
    # needs (top/bottom rows handled per-tile via r0; right edge static).
    ii = jax.lax.broadcasted_iota(jnp.int32, (TH + 2, W1, 1), 0)
    jj = jax.lax.broadcasted_iota(jnp.int32, (TH + 2, W1, 1), 1)
    interior = (ii >= 1 - r0) & (ii <= H - r0) & (jj >= 1) & (jj <= W)
    g = jnp.where(interior, jnp.maximum(h, 0.0), 0.0).astype(jnp.bfloat16)

    # ---- conv2 (Cin -> Cout) + shortcut 1x1, accumulated into one f32 buffer.
    M2 = TH * W2
    acc2 = conv3x3_acc(g, w2_ref, TH, W2, jnp.zeros((M2, Cout), jnp.float32))
    x_core = xt[2:2 + TH, 2:2 + W2, :].reshape(M2, Cin)        # pre-ReLU x
    acc2 = acc2 + jnp.dot(x_core, ws_ref[...], preferred_element_type=jnp.float32)

    # ---- shared AvgPool2d(2, 2): row pairs summed on the cheap outer axis,
    # then one sublane pair-select on the half-height tensor.
    f = acc2.reshape(TH // 2, 2, W2, Cout)
    rsum = f[:, 0] + f[:, 1]                                   # (TH//2, W2, Cout)
    csplit = rsum.reshape(TH // 2, W2 // 2, 2, Cout)
    pooled = (csplit[:, :, 0, :] + csplit[:, :, 1, :]) * 0.25  # (TH//2, W2//2, Cout)

    out_ref[0] = (pooled[:, :W // 2, :] + bc_ref[...]).astype(out_ref.dtype)


def basic_block_forward(x_nchw, params, *, tile_h=None):
    """x_nchw: (N, Cin, H, W) f32, H and W even. Returns (N, Cout, H//2, W//2) f32."""
    w1, b1, w2, b2, ws, bs = params   # w1:(3,3,Cin,Cin), w2:(3,3,Cin,Cout) HWIO, ws:(Cin,Cout)
    N, Cin, H, W = x_nchw.shape
    Cout = w2.shape[-1]
    assert H % 2 == 0 and W % 2 == 0, "AvgPool2d(2,2) requires even H, W"

    if tile_h is None:
        tile_h = _largest_even_divisor(H, 32)
    assert tile_h % 2 == 0 and H % tile_h == 0
    TH = tile_h
    nT = H // TH

    # In-kernel evaluation widths, multiples of 16 so every (rows, cols, C) ->
    # (rows*cols, C) merge in the kernel is a free view.
    W2g = _round_up(W, 16)          # conv2 / shortcut grid width
    W1g = W2g + 16                  # conv1 grid width (>= W2g + 2)
    Win = W1g + 2                   # input tile width (2-col halo for conv1)

    # NCHW -> NHWC, bf16 activations in HBM (halves the dominant DMA stream),
    # channels kept compact (no 128-lane padding; Mosaic pads the MXU internally).
    x = jnp.transpose(x_nchw, (0, 2, 3, 1)).astype(jnp.bfloat16)
    xp = jnp.pad(x, ((0, 0), (2, 2), (2, Win - W - 2), (0, 0)))      # (N, H+4, Win, Cin)

    # H tiling with a 2-row halo; overlapping tiles materialized in the wrapper
    # (~4/TH extra HBM for the halo rows).
    # TODO(synk): switch to pl.Element row offsets (or a manual make_async_copy
    # halo fetch) to avoid the wrapper-side halo duplication.
    xt = jnp.stack([xp[:, t * TH:t * TH + TH + 4] for t in range(nT)], axis=1)
    xt = xt.reshape(N * nT, TH + 4, Win, Cin)

    w1b = w1.astype(jnp.bfloat16)
    w2b = w2.astype(jnp.bfloat16)
    wsb = ws.astype(jnp.bfloat16)
    b1r = b1.reshape(1, Cin).astype(jnp.float32)
    bcr = (b2 + bs).reshape(1, Cout).astype(jnp.float32)   # bias after the (linear) pool

    # Per-generation VMEM budget: ~3/4 of physical (96 MiB v5e/v6e, 48 MiB v7x).
    try:
        vmem_cap = pltpu.get_tpu_info().vmem_capacity_bytes
    except Exception:
        vmem_cap = 64 * 1024 * 1024
    vmem_limit = (3 * vmem_cap) // 4

    kernel = functools.partial(_basic_block_kernel, H=H, W=W, TH=TH, W1=W1g, W2=W2g)

    # TODO(synk): weight/bias specs could be single-buffered (pipeline_mode=
    # pl.Buffered(1)) since their index_map is constant across the grid.
    out = pl.pallas_call(
        kernel,
        out_shape=jax.ShapeDtypeStruct((N, H // 2, W // 2, Cout), jnp.float32),
        grid=(N, nT),
        in_specs=[
            pl.BlockSpec((1, TH + 4, Win, Cin), lambda n, t: (n * nT + t, 0, 0, 0)),
            pl.BlockSpec((3, 3, Cin, Cin), lambda n, t: (0, 0, 0, 0)),
            pl.BlockSpec((1, Cin), lambda n, t: (0, 0)),
            pl.BlockSpec((3, 3, Cin, Cout), lambda n, t: (0, 0, 0, 0)),
            pl.BlockSpec((Cin, Cout), lambda n, t: (0, 0)),
            pl.BlockSpec((1, Cout), lambda n, t: (0, 0)),
        ],
        out_specs=pl.BlockSpec((1, TH // 2, W // 2, Cout), lambda n, t: (n, t, 0, 0)),
        compiler_params=pltpu.CompilerParams(
            dimension_semantics=("parallel", "parallel"),
            vmem_limit_bytes=vmem_limit),
    )(xt, w1b, b1r, w2b, wsb, bcr)

    return jnp.transpose(out, (0, 3, 1, 2))     # NHWC -> NCHW


def reference_forward(x_nchw, params):
    """Plain-JAX f32 reference (mirrors the PyTorch forward) for validation."""
    w1, b1, w2, b2, ws, bs = params
    x = jnp.transpose(x_nchw, (0, 2, 3, 1))
    dn = jax.lax.conv_dimension_numbers(x.shape, w1.shape, ("NHWC", "HWIO", "NHWC"))

    a = jax.nn.relu(x)
    h = jax.lax.conv_general_dilated(a, w1, (1, 1), "SAME", dimension_numbers=dn) + b1
    h = jax.nn.relu(h)
    h = jax.lax.conv_general_dilated(h, w2, (1, 1), "SAME", dimension_numbers=dn) + b2

    def avgpool(t):
        n, hh, ww, c = t.shape
        return t.reshape(n, hh // 2, 2, ww // 2, 2, c).mean(axis=(2, 4))

    conv_path = avgpool(h)
    short = jnp.einsum("nhwc,cd->nhwd", avgpool(x), ws) + bs
    return jnp.transpose(conv_path + short, (0, 3, 1, 2))


if __name__ == "__main__":
    key = jax.random.PRNGKey(0)
    kx, k1, kb1, k2, kb2, ks, kbs = jax.random.split(key, 7)

    N, Cin, Cout, H, W = 2, 4, 8, 16, 16
    x = jax.random.normal(kx, (N, Cin, H, W), dtype=jnp.float32)

    # Deterministic synthetic parameters (HWIO layout for the conv weights).
    w1 = 0.1 * jax.random.normal(k1, (3, 3, Cin, Cin), dtype=jnp.float32)
    b1 = 0.1 * jax.random.normal(kb1, (Cin,), dtype=jnp.float32)
    w2 = 0.1 * jax.random.normal(k2, (3, 3, Cin, Cout), dtype=jnp.float32)
    b2 = 0.1 * jax.random.normal(kb2, (Cout,), dtype=jnp.float32)
    ws = 0.1 * jax.random.normal(ks, (Cin, Cout), dtype=jnp.float32)
    bs = 0.1 * jax.random.normal(kbs, (Cout,), dtype=jnp.float32)
    params = (w1, b1, w2, b2, ws, bs)

    # tile_h=8 -> two H-tiles per image, exercising the haloed/masked tiling path.
    out = jax.block_until_ready(basic_block_forward(x, params, tile_h=8))
    ref = jax.block_until_ready(reference_forward(x, params))

    assert out.shape == (N, Cout, H // 2, W // 2), out.shape
    # bf16 MXU operands with f32 accumulation -> bf16-level tolerance vs f32 ref.
    np.testing.assert_allclose(np.asarray(out), np.asarray(ref), atol=5e-2, rtol=5e-2)
    print("KERNEL_OK")
</pallas_src>

<mosaic_0001>
module attributes {stable_mosaic.version = 11 : i64} {
  func.func @_basic_block_kernel(%arg0: i32, %arg1: i32, %arg2: memref<1x12x34x4xbf16, #tpu.memory_space<vmem>>, %arg3: memref<3x3x4x4xbf16, #tpu.memory_space<vmem>>, %arg4: memref<1x4xf32, #tpu.memory_space<vmem>>, %arg5: memref<3x3x4x8xbf16, #tpu.memory_space<vmem>>, %arg6: memref<4x8xbf16, #tpu.memory_space<vmem>>, %arg7: memref<1x8xf32, #tpu.memory_space<vmem>>, %arg8: memref<1x4x8x8xf32, #tpu.memory_space<vmem>>) attributes {dimension_semantics = [#tpu.dimension_semantics<parallel>, #tpu.dimension_semantics<parallel>], iteration_bounds = array<i64: 2, 2>, scalar_prefetch = 0 : i64, scratch_operands = 0 : i64, tpu.core_type = #tpu.core_type<tc>, window_params = [{transform_indices = @transform_0, window_bounds = array<i64: 1, 12, 34, 4>}, {pipeline_mode = #tpu.pipeline_mode<synchronous>, transform_indices = @transform_1, window_bounds = array<i64: 3, 3, 4, 4>}, {pipeline_mode = #tpu.pipeline_mode<synchronous>, transform_indices = @transform_2, window_bounds = array<i64: 1, 4>}, {pipeline_mode = #tpu.pipeline_mode<synchronous>, transform_indices = @transform_3, window_bounds = array<i64: 3, 3, 4, 8>}, {pipeline_mode = #tpu.pipeline_mode<synchronous>, transform_indices = @transform_4, window_bounds = array<i64: 4, 8>}, {pipeline_mode = #tpu.pipeline_mode<synchronous>, transform_indices = @transform_5, window_bounds = array<i64: 1, 8>}, {transform_indices = @transform_6, window_bounds = array<i64: 1, 4, 8, 8>}]} {
    %c8_i32 = arith.constant 8 : i32
    %0 = arith.muli %arg1, %c8_i32 : i32
    %c0 = arith.constant 0 : index
    %c0_0 = arith.constant 0 : index
    %c0_1 = arith.constant 0 : index
    %c0_2 = arith.constant 0 : index
    %1 = vector.load %arg2[%c0, %c0_0, %c0_1, %c0_2] : memref<1x12x34x4xbf16, #tpu.memory_space<vmem>>, vector<1x12x34x4xbf16>
    %2 = vector.shape_cast %1 : vector<1x12x34x4xbf16> to vector<12x34x4xbf16>
    %cst = arith.constant 0.000000e+00 : bf16
    %3 = vector.broadcast %cst : bf16 to vector<12x34x4xbf16>
    %4 = arith.maximumf %2, %3 : vector<12x34x4xbf16>
    %cst_3 = arith.constant 0.000000e+00 : f32
    %5 = vector.broadcast %cst_3 : f32 to vector<320x4xf32>
    %6 = vector.extract_strided_slice %4 {offsets = [0, 0, 0], sizes = [12, 32, 4], strides = [1, 1, 1]} : vector<12x34x4xbf16> to vector<12x32x4xbf16>
    %7 = vector.extract_strided_slice %6 {offsets = [0, 0, 0], sizes = [10, 32, 4], strides = [1, 1, 1]} : vector<12x32x4xbf16> to vector<10x32x4xbf16>
    %8 = vector.shape_cast %7 : vector<10x32x4xbf16> to vector<320x4xbf16>
    %c0_4 = arith.constant 0 : index
    %c0_5 = arith.constant 0 : index
    %c0_6 = arith.constant 0 : index
    %c0_7 = arith.constant 0 : index
    %9 = vector.load %arg3[%c0_4, %c0_5, %c0_6, %c0_7] : memref<3x3x4x4xbf16, #tpu.memory_space<vmem>>, vector<1x1x4x4xbf16>
    %10 = vector.shape_cast %9 : vector<1x1x4x4xbf16> to vector<4x4xbf16>
    %cst_8 = arith.constant dense<0.000000e+00> : vector<320x4xf32>
    %11 = tpu.matmul %8, %10, %cst_8 {dimension_numbers = #tpu.dot_dimension_numbers<[1], [0], [0], [1], [0, 0, 1, 1], [], []>} : vector<320x4xbf16>, vector<4x4xbf16>, vector<320x4xf32> -> vector<320x4xf32>
    %12 = arith.addf %5, %11 : vector<320x4xf32>
    %13 = vector.extract_strided_slice %6 {offsets = [1, 0, 0], sizes = [10, 32, 4], strides = [1, 1, 1]} : vector<12x32x4xbf16> to vector<10x32x4xbf16>
    %14 = vector.shape_cast %13 : vector<10x32x4xbf16> to vector<320x4xbf16>
    %c1 = arith.constant 1 : index
    %c0_9 = arith.constant 0 : index
    %c0_10 = arith.constant 0 : index
    %c0_11 = arith.constant 0 : index
    %15 = vector.load %arg3[%c1, %c0_9, %c0_10, %c0_11] : memref<3x3x4x4xbf16, #tpu.memory_space<vmem>>, vector<1x1x4x4xbf16>
    %16 = vector.shape_cast %15 : vector<1x1x4x4xbf16> to vector<4x4xbf16>
    %cst_12 = arith.constant dense<0.000000e+00> : vector<320x4xf32>
    %17 = tpu.matmul %14, %16, %cst_12 {dimension_numbers = #tpu.dot_dimension_numbers<[1], [0], [0], [1], [0, 0, 1, 1], [], []>} : vector<320x4xbf16>, vector<4x4xbf16>, vector<320x4xf32> -> vector<320x4xf32>
    %18 = arith.addf %12, %17 : vector<320x4xf32>
    %19 = vector.extract_strided_slice %6 {offsets = [2, 0, 0], sizes = [10, 32, 4], strides = [1, 1, 1]} : vector<12x32x4xbf16> to vector<10x32x4xbf16>
    %20 = vector.shape_cast %19 : vector<10x32x4xbf16> to vector<320x4xbf16>
    %c2 = arith.constant 2 : index
    %c0_13 = arith.constant 0 : index
    %c0_14 = arith.constant 0 : index
    %c0_15 = arith.constant 0 : index
    %21 = vector.load %arg3[%c2, %c0_13, %c0_14, %c0_15] : memref<3x3x4x4xbf16, #tpu.memory_space<vmem>>, vector<1x1x4x4xbf16>
    %22 = vector.shape_cast %21 : vector<1x1x4x4xbf16> to vector<4x4xbf16>
    %cst_16 = arith.constant dense<0.000000e+00> : vector<320x4xf32>
    %23 = tpu.matmul %20, %22, %cst_16 {dimension_numbers = #tpu.dot_dimension_numbers<[1], [0], [0], [1], [0, 0, 1, 1], [], []>} : vector<320x4xbf16>, vector<4x4xbf16>, vector<320x4xf32> -> vector<320x4xf32>
    %24 = arith.addf %18, %23 : vector<320x4xf32>
    %25 = vector.extract_strided_slice %4 {offsets = [0, 1, 0], sizes = [12, 32, 4], strides = [1, 1, 1]} : vector<12x34x4xbf16> to vector<12x32x4xbf16>
    %26 = vector.extract_strided_slice %25 {offsets = [0, 0, 0], sizes = [10, 32, 4], strides = [1, 1, 1]} : vector<12x32x4xbf16> to vector<10x32x4xbf16>
    %27 = vector.shape_cast %26 : vector<10x32x4xbf16> to vector<320x4xbf16>
    %c0_17 = arith.constant 0 : index
    %c1_18 = arith.constant 1 : index
    %c0_19 = arith.constant 0 : index
    %c0_20 = arith.constant 0 : index
    %28 = vector.load %arg3[%c0_17, %c1_18, %c0_19, %c0_20] : memref<3x3x4x4xbf16, #tpu.memory_space<vmem>>, vector<1x1x4x4xbf16>
    %29 = vector.shape_cast %28 : vector<1x1x4x4xbf16> to vector<4x4xbf16>
    %cst_21 = arith.constant dense<0.000000e+00> : vector<320x4xf32>
    %30 = tpu.matmul %27, %29, %cst_21 {dimension_numbers = #tpu.dot_dimension_numbers<[1], [0], [0], [1], [0, 0, 1, 1], [], []>} : vector<320x4xbf16>, vector<4x4xbf16>, vector<320x4xf32> -> vector<320x4xf32>
    %31 = arith.addf %24, %30 : vector<320x4xf32>
    %32 = vector.extract_strided_slice %25 {offsets = [1, 0, 0], sizes = [10, 32, 4], strides = [1, 1, 1]} : vector<12x32x4xbf16> to vector<10x32x4xbf16>
    %33 = vector.shape_cast %32 : vector<10x32x4xbf16> to vector<320x4xbf16>
    %c1_22 = arith.constant 1 : index
    %c1_23 = arith.constant 1 : index
    %c0_24 = arith.constant 0 : index
    %c0_25 = arith.constant 0 : index
    %34 = vector.load %arg3[%c1_22, %c1_23, %c0_24, %c0_25] : memref<3x3x4x4xbf16, #tpu.memory_space<vmem>>, vector<1x1x4x4xbf16>
    %35 = vector.shape_cast %34 : vector<1x1x4x4xbf16> to vector<4x4xbf16>
    %cst_26 = arith.constant dense<0.000000e+00> : vector<320x4xf32>
    %36 = tpu.matmul %33, %35, %cst_26 {dimension_numbers = #tpu.dot_dimension_numbers<[1], [0], [0], [1], [0, 0, 1, 1], [], []>} : vector<320x4xbf16>, vector<4x4xbf16>, vector<320x4xf32> -> vector<320x4xf32>
    %37 = arith.addf %31, %36 : vector<320x4xf32>
    %38 = vector.extract_strided_slice %25 {offsets = [2, 0, 0], sizes = [10, 32, 4], strides = [1, 1, 1]} : vector<12x32x4xbf16> to vector<10x32x4xbf16>
    %39 = vector.shape_cast %38 : vector<10x32x4xbf16> to vector<320x4xbf16>
    %c2_27 = arith.constant 2 : index
    %c1_28 = arith.constant 1 : index
    %c0_29 = arith.constant 0 : index
    %c0_30 = arith.constant 0 : index
    %40 = vector.load %arg3[%c2_27, %c1_28, %c0_29, %c0_30] : memref<3x3x4x4xbf16, #tpu.memory_space<vmem>>, vector<1x1x4x4xbf16>
    %41 = vector.shape_cast %40 : vector<1x1x4x4xbf16> to vector<4x4xbf16>
    %cst_31 = arith.constant dense<0.000000e+00> : vector<320x4xf32>
    %42 = tpu.matmul %39, %41, %cst_31 {dimension_numbers = #tpu.dot_dimension_numbers<[1], [0], [0], [1], [0, 0, 1, 1], [], []>} : vector<320x4xbf16>, vector<4x4xbf16>, vector<320x4xf32> -> vector<320x4xf32>
    %43 = arith.addf %37, %42 : vector<320x4xf32>
    %44 = vector.extract_strided_slice %4 {offsets = [0, 2, 0], sizes = [12, 32, 4], strides = [1, 1, 1]} : vector<12x34x4xbf16> to vector<12x32x4xbf16>
    %45 = vector.extract_strided_slice %44 {offsets = [0, 0, 0], sizes = [10, 32, 4], strides = [1, 1, 1]} : vector<12x32x4xbf16> to vector<10x32x4xbf16>
    %46 = vector.shape_cast %45 : vector<10x32x4xbf16> to vector<320x4xbf16>
    %c0_32 = arith.constant 0 : index
    %c2_33 = arith.constant 2 : index
    %c0_34 = arith.constant 0 : index
    %c0_35 = arith.constant 0 : index
    %47 = vector.load %arg3[%c0_32, %c2_33, %c0_34, %c0_35] : memref<3x3x4x4xbf16, #tpu.memory_space<vmem>>, vector<1x1x4x4xbf16>
    %48 = vector.shape_cast %47 : vector<1x1x4x4xbf16> to vector<4x4xbf16>
    %cst_36 = arith.constant dense<0.000000e+00> : vector<320x4xf32>
    %49 = tpu.matmul %46, %48, %cst_36 {dimension_numbers = #tpu.dot_dimension_numbers<[1], [0], [0], [1], [0, 0, 1, 1], [], []>} : vector<320x4xbf16>, vector<4x4xbf16>, vector<320x4xf32> -> vector<320x4xf32>
    %50 = arith.addf %43, %49 : vector<320x4xf32>
    %51 = vector.extract_strided_slice %44 {offsets = [1, 0, 0], sizes = [10, 32, 4], strides = [1, 1, 1]} : vector<12x32x4xbf16> to vector<10x32x4xbf16>
    %52 = vector.shape_cast %51 : vector<10x32x4xbf16> to vector<320x4xbf16>
    %c1_37 = arith.constant 1 : index
    %c2_38 = arith.constant 2 : index
    %c0_39 = arith.constant 0 : index
    %c0_40 = arith.constant 0 : index
    %53 = vector.load %arg3[%c1_37, %c2_38, %c0_39, %c0_40] : memref<3x3x4x4xbf16, #tpu.memory_space<vmem>>, vector<1x1x4x4xbf16>
    %54 = vector.shape_cast %53 : vector<1x1x4x4xbf16> to vector<4x4xbf16>
    %cst_41 = arith.constant dense<0.000000e+00> : vector<320x4xf32>
    %55 = tpu.matmul %52, %54, %cst_41 {dimension_numbers = #tpu.dot_dimension_numbers<[1], [0], [0], [1], [0, 0, 1, 1], [], []>} : vector<320x4xbf16>, vector<4x4xbf16>, vector<320x4xf32> -> vector<320x4xf32>
    %56 = arith.addf %50, %55 : vector<320x4xf32>
    %57 = vector.extract_strided_slice %44 {offsets = [2, 0, 0], sizes = [10, 32, 4], strides = [1, 1, 1]} : vector<12x32x4xbf16> to vector<10x32x4xbf16>
    %58 = vector.shape_cast %57 : vector<10x32x4xbf16> to vector<320x4xbf16>
    %c2_42 = arith.constant 2 : index
    %c2_43 = arith.constant 2 : index
    %c0_44 = arith.constant 0 : index
    %c0_45 = arith.constant 0 : index
    %59 = vector.load %arg3[%c2_42, %c2_43, %c0_44, %c0_45] : memref<3x3x4x4xbf16, #tpu.memory_space<vmem>>, vector<1x1x4x4xbf16>
    %60 = vector.shape_cast %59 : vector<1x1x4x4xbf16> to vector<4x4xbf16>
    %cst_46 = arith.constant dense<0.000000e+00> : vector<320x4xf32>
    %61 = tpu.matmul %58, %60, %cst_46 {dimension_numbers = #tpu.dot_dimension_numbers<[1], [0], [0], [1], [0, 0, 1, 1], [], []>} : vector<320x4xbf16>, vector<4x4xbf16>, vector<320x4xf32> -> vector<320x4xf32>
    %62 = arith.addf %56, %61 : vector<320x4xf32>
    %63 = vector.shape_cast %62 : vector<320x4xf32> to vector<10x32x4xf32>
    %c0_47 = arith.constant 0 : index
    %c0_48 = arith.constant 0 : index
    %64 = vector.load %arg4[%c0_47, %c0_48] : memref<1x4xf32, #tpu.memory_space<vmem>>, vector<1x4xf32>
    %65 = vector.shape_cast %64 : vector<1x4xf32> to vector<1x1x4xf32>
    %66 = vector.broadcast %65 : vector<1x1x4xf32> to vector<10x32x4xf32>
    %67 = arith.addf %63, %66 : vector<10x32x4xf32>
    %68 = tpu.iota {dimensions = array<i32: 0>} : vector<10x32x1xi32>
    %69 = tpu.iota {dimensions = array<i32: 1>} : vector<10x32x1xi32>
    %c1_i32 = arith.constant 1 : i32
    %70 = arith.subi %c1_i32, %0 : i32
    %71 = vector.broadcast %70 : i32 to vector<10x32x1xi32>
    %72 = arith.cmpi sge, %68, %71 : vector<10x32x1xi32>
    %c16_i32 = arith.constant 16 : i32
    %73 = arith.subi %c16_i32, %0 : i32
    %74 = vector.broadcast %73 : i32 to vector<10x32x1xi32>
    %75 = arith.cmpi sle, %68, %74 : vector<10x32x1xi32>
    %76 = arith.andi %72, %75 : vector<10x32x1xi1>
    %c1_i32_49 = arith.constant 1 : i32
    %77 = vector.broadcast %c1_i32_49 : i32 to vector<10x32x1xi32>
    %78 = arith.cmpi sge, %69, %77 : vector<10x32x1xi32>
    %79 = arith.andi %76, %78 : vector<10x32x1xi1>
    %c16_i32_50 = arith.constant 16 : i32
    %80 = vector.broadcast %c16_i32_50 : i32 to vector<10x32x1xi32>
    %81 = arith.cmpi sle, %69, %80 : vector<10x32x1xi32>
    %82 = arith.andi %79, %81 : vector<10x32x1xi1>
    %cst_51 = arith.constant 0.000000e+00 : f32
    %83 = vector.broadcast %cst_51 : f32 to vector<10x32x4xf32>
    %84 = arith.maximumf %67, %83 : vector<10x32x4xf32>
    %cst_52 = arith.constant 0.000000e+00 : f32
    %85 = vector.shape_cast %82 : vector<10x32x1xi1> to vector<10x32x1xi1>
    %86 = vector.broadcast %85 : vector<10x32x1xi1> to vector<10x32x4xi1>
    %87 = vector.broadcast %cst_52 : f32 to vector<10x32x4xf32>
    %88 = arith.select %86, %84, %87 : vector<10x32x4xi1>, vector<10x32x4xf32>
    %89 = arith.truncf %88 : vector<10x32x4xf32> to vector<10x32x4xbf16>
    %cst_53 = arith.constant 0.000000e+00 : f32
    %90 = vector.broadcast %cst_53 : f32 to vector<128x8xf32>
    %91 = vector.extract_strided_slice %89 {offsets = [0, 0, 0], sizes = [10, 16, 4], strides = [1, 1, 1]} : vector<10x32x4xbf16> to vector<10x16x4xbf16>
    %92 = vector.extract_strided_slice %91 {offsets = [0, 0, 0], sizes = [8, 16, 4], strides = [1, 1, 1]} : vector<10x16x4xbf16> to vector<8x16x4xbf16>
    %93 = vector.shape_cast %92 : vector<8x16x4xbf16> to vector<128x4xbf16>
    %c0_54 = arith.constant 0 : index
    %c0_55 = arith.constant 0 : index
    %c0_56 = arith.constant 0 : index
    %c0_57 = arith.constant 0 : index
    %94 = vector.load %arg5[%c0_54, %c0_55, %c0_56, %c0_57] : memref<3x3x4x8xbf16, #tpu.memory_space<vmem>>, vector<1x1x4x8xbf16>
    %95 = vector.shape_cast %94 : vector<1x1x4x8xbf16> to vector<4x8xbf16>
    %cst_58 = arith.constant dense<0.000000e+00> : vector<128x8xf32>
    %96 = tpu.matmul %93, %95, %cst_58 {dimension_numbers = #tpu.dot_dimension_numbers<[1], [0], [0], [1], [0, 0, 1, 1], [], []>} : vector<128x4xbf16>, vector<4x8xbf16>, vector<128x8xf32> -> vector<128x8xf32>
    %97 = arith.addf %90, %96 : vector<128x8xf32>
    %98 = vector.extract_strided_slice %91 {offsets = [1, 0, 0], sizes = [8, 16, 4], strides = [1, 1, 1]} : vector<10x16x4xbf16> to vector<8x16x4xbf16>
    %99 = vector.shape_cast %98 : vector<8x16x4xbf16> to vector<128x4xbf16>
    %c1_59 = arith.constant 1 : index
    %c0_60 = arith.constant 0 : index
    %c0_61 = arith.constant 0 : index
    %c0_62 = arith.constant 0 : index
    %100 = vector.load %arg5[%c1_59, %c0_60, %c0_61, %c0_62] : memref<3x3x4x8xbf16, #tpu.memory_space<vmem>>, vector<1x1x4x8xbf16>
    %101 = vector.shape_cast %100 : vector<1x1x4x8xbf16> to vector<4x8xbf16>
    %cst_63 = arith.constant dense<0.000000e+00> : vector<128x8xf32>
    %102 = tpu.matmul %99, %101, %cst_63 {dimension_numbers = #tpu.dot_dimension_numbers<[1], [0], [0], [1], [0, 0, 1, 1], [], []>} : vector<128x4xbf16>, vector<4x8xbf16>, vector<128x8xf32> -> vector<128x8xf32>
    %103 = arith.addf %97, %102 : vector<128x8xf32>
    %104 = vector.extract_strided_slice %91 {offsets = [2, 0, 0], sizes = [8, 16, 4], strides = [1, 1, 1]} : vector<10x16x4xbf16> to vector<8x16x4xbf16>
    %105 = vector.shape_cast %104 : vector<8x16x4xbf16> to vector<128x4xbf16>
    %c2_64 = arith.constant 2 : index
    %c0_65 = arith.constant 0 : index
    %c0_66 = arith.constant 0 : index
    %c0_67 = arith.constant 0 : index
    %106 = vector.load %arg5[%c2_64, %c0_65, %c0_66, %c0_67] : memref<3x3x4x8xbf16, #tpu.memory_space<vmem>>, vector<1x1x4x8xbf16>
    %107 = vector.shape_cast %106 : vector<1x1x4x8xbf16> to vector<4x8xbf16>
    %cst_68 = arith.constant dense<0.000000e+00> : vector<128x8xf32>
    %108 = tpu.matmul %105, %107, %cst_68 {dimension_numbers = #tpu.dot_dimension_numbers<[1], [0], [0], [1], [0, 0, 1, 1], [], []>} : vector<128x4xbf16>, vector<4x8xbf16>, vector<128x8xf32> -> vector<128x8xf32>
    %109 = arith.addf %103, %108 : vector<128x8xf32>
    %110 = vector.extract_strided_slice %89 {offsets = [0, 1, 0], sizes = [10, 16, 4], strides = [1, 1, 1]} : vector<10x32x4xbf16> to vector<10x16x4xbf16>
    %111 = vector.extract_strided_slice %110 {offsets = [0, 0, 0], sizes = [8, 16, 4], strides = [1, 1, 1]} : vector<10x16x4xbf16> to vector<8x16x4xbf16>
    %112 = vector.shape_cast %111 : vector<8x16x4xbf16> to vector<128x4xbf16>
    %c0_69 = arith.constant 0 : index
    %c1_70 = arith.constant 1 : index
    %c0_71 = arith.constant 0 : index
    %c0_72 = arith.constant 0 : index
    %113 = vector.load %arg5[%c0_69, %c1_70, %c0_71, %c0_72] : memref<3x3x4x8xbf16, #tpu.memory_space<vmem>>, vector<1x1x4x8xbf16>
    %114 = vector.shape_cast %113 : vector<1x1x4x8xbf16> to vector<4x8xbf16>
    %cst_73 = arith.constant dense<0.000000e+00> : vector<128x8xf32>
    %115 = tpu.matmul %112, %114, %cst_73 {dimension_numbers = #tpu.dot_dimension_numbers<[1], [0], [0], [1], [0, 0, 1, 1], [], []>} : vector<128x4xbf16>, vector<4x8xbf16>, vector<128x8xf32> -> vector<128x8xf32>
    %116 = arith.addf %109, %115 : vector<128x8xf32>
    %117 = vector.extract_strided_slice %110 {offsets = [1, 0, 0], sizes = [8, 16, 4], strides = [1, 1, 1]} : vector<10x16x4xbf16> to vector<8x16x4xbf16>
    %118 = vector.shape_cast %117 : vector<8x16x4xbf16> to vector<128x4xbf16>
    %c1_74 = arith.constant 1 : index
    %c1_75 = arith.constant 1 : index
    %c0_76 = arith.constant 0 : index
    %c0_77 = arith.constant 0 : index
    %119 = vector.load %arg5[%c1_74, %c1_75, %c0_76, %c0_77] : memref<3x3x4x8xbf16, #tpu.memory_space<vmem>>, vector<1x1x4x8xbf16>
    %120 = vector.shape_cast %119 : vector<1x1x4x8xbf16> to vector<4x8xbf16>
    %cst_78 = arith.constant dense<0.000000e+00> : vector<128x8xf32>
    %121 = tpu.matmul %118, %120, %cst_78 {dimension_numbers = #tpu.dot_dimension_numbers<[1], [0], [0], [1], [0, 0, 1, 1], [], []>} : vector<128x4xbf16>, vector<4x8xbf16>, vector<128x8xf32> -> vector<128x8xf32>
    %122 = arith.addf %116, %121 : vector<128x8xf32>
    %123 = vector.extract_strided_slice %110 {offsets = [2, 0, 0], sizes = [8, 16, 4], strides = [1, 1, 1]} : vector<10x16x4xbf16> to vector<8x16x4xbf16>
    %124 = vector.shape_cast %123 : vector<8x16x4xbf16> to vector<128x4xbf16>
    %c2_79 = arith.constant 2 : index
    %c1_80 = arith.constant 1 : index
    %c0_81 = arith.constant 0 : index
    %c0_82 = arith.constant 0 : index
    %125 = vector.load %arg5[%c2_79, %c1_80, %c0_81, %c0_82] : memref<3x3x4x8xbf16, #tpu.memory_space<vmem>>, vector<1x1x4x8xbf16>
    %126 = vector.shape_cast %125 : vector<1x1x4x8xbf16> to vector<4x8xbf16>
    %cst_83 = arith.constant dense<0.000000e+00> : vector<128x8xf32>
    %127 = tpu.matmul %124, %126, %cst_83 {dimension_numbers = #tpu.dot_dimension_numbers<[1], [0], [0], [1], [0, 0, 1, 1], [], []>} : vector<128x4xbf16>, vector<4x8xbf16>, vector<128x8xf32> -> vector<128x8xf32>
    %128 = arith.addf %122, %127 : vector<128x8xf32>
    %129 = vector.extract_strided_slice %89 {offsets = [0, 2, 0], sizes = [10, 16, 4], strides = [1, 1, 1]} : vector<10x32x4xbf16> to vector<10x16x4xbf16>
    %130 = vector.extract_strided_slice %129 {offsets = [0, 0, 0], sizes = [8, 16, 4], strides = [1, 1, 1]} : vector<10x16x4xbf16> to vector<8x16x4xbf16>
    %131 = vector.shape_cast %130 : vector<8x16x4xbf16> to vector<128x4xbf16>
    %c0_84 = arith.constant 0 : index
    %c2_85 = arith.constant 2 : index
    %c0_86 = arith.constant 0 : index
    %c0_87 = arith.constant 0 : index
    %132 = vector.load %arg5[%c0_84, %c2_85, %c0_86, %c0_87] : memref<3x3x4x8xbf16, #tpu.memory_space<vmem>>, vector<1x1x4x8xbf16>
    %133 = vector.shape_cast %132 : vector<1x1x4x8xbf16> to vector<4x8xbf16>
    %cst_88 = arith.constant dense<0.000000e+00> : vector<128x8xf32>
    %134 = tpu.matmul %131, %133, %cst_88 {dimension_numbers = #tpu.dot_dimension_numbers<[1], [0], [0], [1], [0, 0, 1, 1], [], []>} : vector<128x4xbf16>, vector<4x8xbf16>, vector<128x8xf32> -> vector<128x8xf32>
    %135 = arith.addf %128, %134 : vector<128x8xf32>
    %136 = vector.extract_strided_slice %129 {offsets = [1, 0, 0], sizes = [8, 16, 4], strides = [1, 1, 1]} : vector<10x16x4xbf16> to vector<8x16x4xbf16>
    %137 = vector.shape_cast %136 : vector<8x16x4xbf16> to vector<128x4xbf16>
    %c1_89 = arith.constant 1 : index
    %c2_90 = arith.constant 2 : index
    %c0_91 = arith.constant 0 : index
    %c0_92 = arith.constant 0 : index
    %138 = vector.load %arg5[%c1_89, %c2_90, %c0_91, %c0_92] : memref<3x3x4x8xbf16, #tpu.memory_space<vmem>>, vector<1x1x4x8xbf16>
    %139 = vector.shape_cast %138 : vector<1x1x4x8xbf16> to vector<4x8xbf16>
    %cst_93 = arith.constant dense<0.000000e+00> : vector<128x8xf32>
    %140 = tpu.matmul %137, %139, %cst_93 {dimension_numbers = #tpu.dot_dimension_numbers<[1], [0], [0], [1], [0, 0, 1, 1], [], []>} : vector<128x4xbf16>, vector<4x8xbf16>, vector<128x8xf32> -> vector<128x8xf32>
    %141 = arith.addf %135, %140 : vector<128x8xf32>
    %142 = vector.extract_strided_slice %129 {offsets = [2, 0, 0], sizes = [8, 16, 4], strides = [1, 1, 1]} : vector<10x16x4xbf16> to vector<8x16x4xbf16>
    %143 = vector.shape_cast %142 : vector<8x16x4xbf16> to vector<128x4xbf16>
    %c2_94 = arith.constant 2 : index
    %c2_95 = arith.constant 2 : index
    %c0_96 = arith.constant 0 : index
    %c0_97 = arith.constant 0 : index
    %144 = vector.load %arg5[%c2_94, %c2_95, %c0_96, %c0_97] : memref<3x3x4x8xbf16, #tpu.memory_space<vmem>>, vector<1x1x4x8xbf16>
    %145 = vector.shape_cast %144 : vector<1x1x4x8xbf16> to vector<4x8xbf16>
    %cst_98 = arith.constant dense<0.000000e+00> : vector<128x8xf32>
    %146 = tpu.matmul %143, %145, %cst_98 {dimension_numbers = #tpu.dot_dimension_numbers<[1], [0], [0], [1], [0, 0, 1, 1], [], []>} : vector<128x4xbf16>, vector<4x8xbf16>, vector<128x8xf32> -> vector<128x8xf32>
    %147 = arith.addf %141, %146 : vector<128x8xf32>
    %148 = vector.extract_strided_slice %2 {offsets = [2, 2, 0], sizes = [8, 16, 4], strides = [1, 1, 1]} : vector<12x34x4xbf16> to vector<8x16x4xbf16>
    %149 = vector.shape_cast %148 : vector<8x16x4xbf16> to vector<128x4xbf16>
    %c0_99 = arith.constant 0 : index
    %c0_100 = arith.constant 0 : index
    %150 = vector.load %arg6[%c0_99, %c0_100] : memref<4x8xbf16, #tpu.memory_space<vmem>>, vector<4x8xbf16>
    %cst_101 = arith.constant dense<0.000000e+00> : vector<128x8xf32>
    %151 = tpu.matmul %149, %150, %cst_101 {dimension_numbers = #tpu.dot_dimension_numbers<[1], [0], [0], [1], [0, 0, 1, 1], [], []>} : vector<128x4xbf16>, vector<4x8xbf16>, vector<128x8xf32> -> vector<128x8xf32>
    %152 = arith.addf %147, %151 : vector<128x8xf32>
    %153 = vector.shape_cast %152 : vector<128x8xf32> to vector<4x2x16x8xf32>
    %154 = vector.extract_strided_slice %153 {offsets = [0, 0, 0, 0], sizes = [4, 1, 16, 8], strides = [1, 1, 1, 1]} : vector<4x2x16x8xf32> to vector<4x1x16x8xf32>
    %155 = vector.shape_cast %154 : vector<4x1x16x8xf32> to vector<4x16x8xf32>
    %156 = vector.extract_strided_slice %153 {offsets = [0, 1, 0, 0], sizes = [4, 1, 16, 8], strides = [1, 1, 1, 1]} : vector<4x2x16x8xf32> to vector<4x1x16x8xf32>
    %157 = vector.shape_cast %156 : vector<4x1x16x8xf32> to vector<4x16x8xf32>
    %158 = arith.addf %155, %157 : vector<4x16x8xf32>
    %159 = vector.shape_cast %158 : vector<4x16x8xf32> to vector<4x8x2x8xf32>
    %160 = vector.extract_strided_slice %159 {offsets = [0, 0, 0, 0], sizes = [4, 8, 1, 8], strides = [1, 1, 1, 1]} : vector<4x8x2x8xf32> to vector<4x8x1x8xf32>
    %161 = vector.shape_cast %160 : vector<4x8x1x8xf32> to vector<4x8x8xf32>
    %162 = vector.extract_strided_slice %159 {offsets = [0, 0, 1, 0], sizes = [4, 8, 1, 8], strides = [1, 1, 1, 1]} : vector<4x8x2x8xf32> to vector<4x8x1x8xf32>
    %163 = vector.shape_cast %162 : vector<4x8x1x8xf32> to vector<4x8x8xf32>
    %164 = arith.addf %161, %163 : vector<4x8x8xf32>
    %cst_102 = arith.constant 2.500000e-01 : f32
    %165 = vector.broadcast %cst_102 : f32 to vector<4x8x8xf32>
    %166 = arith.mulf %164, %165 : vector<4x8x8xf32>
    %c0_103 = arith.constant 0 : index
    %c0_104 = arith.constant 0 : index
    %167 = vector.load %arg7[%c0_103, %c0_104] : memref<1x8xf32, #tpu.memory_space<vmem>>, vector<1x8xf32>
    %168 = vector.shape_cast %167 : vector<1x8xf32> to vector<1x1x8xf32>
    %169 = vector.broadcast %168 : vector<1x1x8xf32> to vector<4x8x8xf32>
    %170 = arith.addf %166, %169 : vector<4x8x8xf32>
    %c0_105 = arith.constant 0 : index
    %c0_106 = arith.constant 0 : index
    %c0_107 = arith.constant 0 : index
    %c0_108 = arith.constant 0 : index
    %171 = vector.load %arg8[%c0_105, %c0_106, %c0_107, %c0_108] : memref<1x4x8x8xf32, #tpu.memory_space<vmem>>, vector<1x4x8x8xf32>
    %172 = vector.shape_cast %171 : vector<1x4x8x8xf32> to vector<4x8x8xf32>
    %173 = vector.shape_cast %170 : vector<4x8x8xf32> to vector<1x4x8x8xf32>
    tpu.vector_store %arg8[%c0_105, %c0_106, %c0_107, %c0_108], %173 {strides = array<i32>} : memref<1x4x8x8xf32, #tpu.memory_space<vmem>>, vector<1x4x8x8xf32>,
    return
  }
  func.func @transform_0(%arg0: i32, %arg1: i32) -> (i32, i32, i32, i32) {
    %c2_i32 = arith.constant 2 : i32
    %0 = arith.muli %arg0, %c2_i32 : i32
    %1 = arith.addi %0, %arg1 : i32
    %c0_i32 = arith.constant 0 : i32
    %c0_i32_0 = arith.constant 0 : i32
    %c0_i32_1 = arith.constant 0 : i32
    %c0_i32_2 = arith.constant 0 : i32
    return %1, %c0_i32, %c0_i32_0, %c0_i32_1 : i32, i32, i32, i32
  }
  func.func @transform_1(%arg0: i32, %arg1: i32) -> (i32, i32, i32, i32) {
    %c0_i32 = arith.constant 0 : i32
    %c0_i32_0 = arith.constant 0 : i32
    %c0_i32_1 = arith.constant 0 : i32
    %c0_i32_2 = arith.constant 0 : i32
    %c0_i32_3 = arith.constant 0 : i32
    return %c0_i32, %c0_i32_0, %c0_i32_1, %c0_i32_2 : i32, i32, i32, i32
  }
  func.func @transform_2(%arg0: i32, %arg1: i32) -> (i32, i32) {
    %c0_i32 = arith.constant 0 : i32
    %c0_i32_0 = arith.constant 0 : i32
    %c0_i32_1 = arith.constant 0 : i32
    return %c0_i32, %c0_i32_0 : i32, i32
  }
  func.func @transform_3(%arg0: i32, %arg1: i32) -> (i32, i32, i32, i32) {
    %c0_i32 = arith.constant 0 : i32
    %c0_i32_0 = arith.constant 0 : i32
    %c0_i32_1 = arith.constant 0 : i32
    %c0_i32_2 = arith.constant 0 : i32
    %c0_i32_3 = arith.constant 0 : i32
    return %c0_i32, %c0_i32_0, %c0_i32_1, %c0_i32_2 : i32, i32, i32, i32
  }
  func.func @transform_4(%arg0: i32, %arg1: i32) -> (i32, i32) {
    %c0_i32 = arith.constant 0 : i32
    %c0_i32_0 = arith.constant 0 : i32
    %c0_i32_1 = arith.constant 0 : i32
    return %c0_i32, %c0_i32_0 : i32, i32
  }
  func.func @transform_5(%arg0: i32, %arg1: i32) -> (i32, i32) {
    %c0_i32 = arith.constant 0 : i32
    %c0_i32_0 = arith.constant 0 : i32
    %c0_i32_1 = arith.constant 0 : i32
    return %c0_i32, %c0_i32_0 : i32, i32
  }
  func.func @transform_6(%arg0: i32, %arg1: i32) -> (i32, i32, i32, i32) {
    %c0_i32 = arith.constant 0 : i32
    %c0_i32_0 = arith.constant 0 : i32
    %c0_i32_1 = arith.constant 0 : i32
    return %arg0, %arg1, %c0_i32, %c0_i32_0 : i32, i32, i32, i32
  }
}

</mosaic_0001>

<llo_original>
// kernel: tpu_custom_call.1
$region0: #{tpu_custom_call.1}
  #allocation0 [shape = 'u32[]', space=smem, size = 0x4, offset = 0x4, fixed_abs, tag = 'smem constant byte address 0x4 - core index']
  #allocation1 [shape = 'u32[144,128]{1,0:T(1,128)}', space=vmem, size = 0x12000, scoped, tag = 'internal scratch']
  %s0 = inlined_call_operand.vmem [shape: bf16[4,12,34,4], index: 0, kind: input, shape index: {}]
  %s1 = inlined_call_operand.vmem [shape: bf16[3,3,4,4], index: 1, kind: input, shape index: {}]
  %s2 = inlined_call_operand.vmem [shape: f32[1,4], index: 2, kind: input, shape index: {}]
  %s3 = inlined_call_operand.vmem [shape: bf16[3,3,4,8], index: 3, kind: input, shape index: {}]
  %s4 = inlined_call_operand.vmem [shape: bf16[4,8], index: 4, kind: input, shape index: {}]
  %s5 = inlined_call_operand.vmem [shape: f32[1,8], index: 5, kind: input, shape index: {}]
  %s6 = inlined_call_operand.hbm [shape: f32[2,8,8,8], index: 6, kind: output, shape index: {}]
  %s7 = sld [smem:[#allocation0]]
  $region57: #{tpu_custom_call.1} parent=0
    _
  %s9 = ssub.s32 1, %s7
  %s10 = scalar_select 0, %s9, %s7
  $region1: #{tpu_custom_call.1} parent=0
    #allocation2 [shape = 'u8[32768]{0}', space=vmem, size = 0x8000, scoped, tag = 'output window, operand 0']
    #allocation3 [shape = 's32[2]{0}', space=sflag, size = 0x8, scoped, tag = 'scoped memory for tpu_custom_call.1']
    %11 = vsyncpa [#allocation3], 0
    %s12 = scalar_lea.sflag [#allocation3], 1
    %13 = vsyncpa %s12, 0
    loop: start=0, step=1, limit=6
    $region2: #{tpu_custom_call.1} parent=1 // loop_pre_header
      _
    $region3: #{tpu_custom_call.1} parent=1 // loop_header
      %s15 = sphi 0, %s19
      %p16 = scmp.ge.s32.totalorder %s15, 6
      %s22 = sphi 0, %s34
      %s23 = sphi 0, %s30
      %s24 = sphi 0, %s22
      %s25 = sphi 0, %s23
      %s26 = sphi 0, %s24
      %s27 = sphi 0, %s25
      %s41 = sphi 0, %s43
      %s44 = sphi 0, %s41
      %s45 = sphi 0, %s44
      %s61 = sphi 0, %s45
      %s65 = sphi 0, %s65
      %s67 = sphi 0, %s65
      %s68 = sphi 0, %s67
      %s82 = sphi 0, %s68
      %s86 = sphi 0, %s86
      %s88 = sphi 0, %s86
      %s89 = sphi 0, %s88
      %s103 = sphi 0, %s89
      %s107 = sphi 0, %s107
      %s109 = sphi 0, %s107
      %s110 = sphi 0, %s109
      %s124 = sphi 0, %s110
      %s128 = sphi 0, %s128
      %s130 = sphi 0, %s128
      %s131 = sphi 0, %s130
      %s145 = sphi 0, %s131
      %s149 = sphi 0, %s149
      %s151 = sphi 0, %s149
      %s152 = sphi 0, %s151
      %s166 = sphi 0, %s152
      %s174 = sphi 0, %s176
      %s177 = sphi 0, %s174
      %s178 = sphi 0, %s177
      %s194 = sphi 0, %s178
    $region4: #{tpu_custom_call.1} parent=1 // loop_header_branch
      %18 = sbr.rel (%p16) target = $region8
    $region5: #{tpu_custom_call.1} parent=1 // loop_body
      %s20 = ssub.s32 %s15, 1
      %s21 = ssub.s32 %s15, 2
      %s28 = sadd.s32 1, %s23
      %p29 = scmp.ge.s32.totalorder %s28, 2
      %s30 = scalar_select %p29, 0, %s28
      %s31 = sadd.s32 1, %s22
      %s32 = scalar_select %p29, %s31, %s22
      %p33 = scmp.ge.s32.totalorder %s32, 2
      %s34 = scalar_select %p33, 0, %s32
      %s35 = smul.u32 %s22, 2
      %s36 = sadd.s32 %s35, %s23
      %s37 = smul.u32 %s34, 2
      %s38 = sadd.s32 %s37, %s30
      %s39 = ssub.s32 %s36, %s38
      %p40 = scmp.eq.s32.totalorder %s39, 0
      %s42 = sadd.s32 %s41, 1
      %s43 = scalar_select %p40, %s41, %s42
      %p46 = pneg %p40
      %p47 = scmp.eq.s32.totalorder %s15, 3
      %p48 = por %p46, %p47
      %p49 = scmp.ne.s32.totalorder %s41, %s44
      %p50 = scmp.eq.s32.totalorder %s15, 0
      %p51 = por %p49, %p50
      %p52 = scmp.ne.s32.totalorder %s41, %s44
      %p53 = scmp.eq.s32.totalorder %s20, 3
      %p54 = por %p52, %p53
      %p55 = scmp.ne.s32.totalorder %s44, %s45
      %p56 = scmp.eq.s32.totalorder %s20, 0
      %p57 = por %p55, %p56
      %p58 = scmp.ne.s32.totalorder %s44, %s45
      %p59 = scmp.eq.s32.totalorder %s21, 3
      %p60 = por %p58, %p59
      %p62 = scmp.ne.s32.totalorder %s45, %s61
      %p63 = scmp.eq.s32.totalorder %s21, 0
      %p64 = por %p62, %p63
      %s66 = sadd.s32 %s65, 1
      %p69 = scmp.eq.s32.totalorder %s15, 3
      %p70 = scmp.ne.s32.totalorder %s65, %s67
      %p71 = scmp.eq.s32.totalorder %s15, 0
      %p72 = por %p70, %p71
      %p73 = scmp.ne.s32.totalorder %s65, %s67
      %p74 = scmp.eq.s32.totalorder %s20, 3
      %p75 = por %p73, %p74
      %p76 = scmp.ne.s32.totalorder %s67, %s68
      %p77 = scmp.eq.s32.totalorder %s20, 0
      %p78 = por %p76, %p77
      %p79 = scmp.ne.s32.totalorder %s67, %s68
      %p80 = scmp.eq.s32.totalorder %s21, 3
      %p81 = por %p79, %p80
      %p83 = scmp.ne.s32.totalorder %s68, %s82
      %p84 = scmp.eq.s32.totalorder %s21, 0
      %p85 = por %p83, %p84
      %s87 = sadd.s32 %s86, 1
      %p90 = scmp.eq.s32.totalorder %s15, 3
      %p91 = scmp.ne.s32.totalorder %s86, %s88
      %p92 = scmp.eq.s32.totalorder %s15, 0
      %p93 = por %p91, %p92
      %p94 = scmp.ne.s32.totalorder %s86, %s88
      %p95 = scmp.eq.s32.totalorder %s20, 3
      %p96 = por %p94, %p95
      %p97 = scmp.ne.s32.totalorder %s88, %s89
      %p98 = scmp.eq.s32.totalorder %s20, 0
      %p99 = por %p97, %p98
      %p100 = scmp.ne.s32.totalorder %s88, %s89
      %p101 = scmp.eq.s32.totalorder %s21, 3
      %p102 = por %p100, %p101
      %p104 = scmp.ne.s32.totalorder %s89, %s103
      %p105 = scmp.eq.s32.totalorder %s21, 0
      %p106 = por %p104, %p105
      %s108 = sadd.s32 %s107, 1
      %p111 = scmp.eq.s32.totalorder %s15, 3
      %p112 = scmp.ne.s32.totalorder %s107, %s109
      %p113 = scmp.eq.s32.totalorder %s15, 0
      %p114 = por %p112, %p113
      %p115 = scmp.ne.s32.totalorder %s107, %s109
      %p116 = scmp.eq.s32.totalorder %s20, 3
      %p117 = por %p115, %p116
      %p118 = scmp.ne.s32.totalorder %s109, %s110
      %p119 = scmp.eq.s32.totalorder %s20, 0
      %p120 = por %p118, %p119
      %p121 = scmp.ne.s32.totalorder %s109, %s110
      %p122 = scmp.eq.s32.totalorder %s21, 3
      %p123 = por %p121, %p122
      %p125 = scmp.ne.s32.totalorder %s110, %s124
      %p126 = scmp.eq.s32.totalorder %s21, 0
      %p127 = por %p125, %p126
      %s129 = sadd.s32 %s128, 1
      %p132 = scmp.eq.s32.totalorder %s15, 3
      %p133 = scmp.ne.s32.totalorder %s128, %s130
      %p134 = scmp.eq.s32.totalorder %s15, 0
      %p135 = por %p133, %p134
      %p136 = scmp.ne.s32.totalorder %s128, %s130
      %p137 = scmp.eq.s32.totalorder %s20, 3
      %p138 = por %p136, %p137
      %p139 = scmp.ne.s32.totalorder %s130, %s131
      %p140 = scmp.eq.s32.totalorder %s20, 0
      %p141 = por %p139, %p140
      %p142 = scmp.ne.s32.totalorder %s130, %s131
      %p143 = scmp.eq.s32.totalorder %s21, 3
      %p144 = por %p142, %p143
      %p146 = scmp.ne.s32.totalorder %s131, %s145
      %p147 = scmp.eq.s32.totalorder %s21, 0
      %p148 = por %p146, %p147
      %s150 = sadd.s32 %s149, 1
      %p153 = scmp.eq.s32.totalorder %s15, 3
      %p154 = scmp.ne.s32.totalorder %s149, %s151
      %p155 = scmp.eq.s32.totalorder %s15, 0
      %p156 = por %p154, %p155
      %p157 = scmp.ne.s32.totalorder %s149, %s151
      %p158 = scmp.eq.s32.totalorder %s20, 3
      %p159 = por %p157, %p158
      %p160 = scmp.ne.s32.totalorder %s151, %s152
      %p161 = scmp.eq.s32.totalorder %s20, 0
      %p162 = por %p160, %p161
      %p163 = scmp.ne.s32.totalorder %s151, %s152
      %p164 = scmp.eq.s32.totalorder %s21, 3
      %p165 = por %p163, %p164
      %p167 = scmp.ne.s32.totalorder %s152, %s166
      %p168 = scmp.eq.s32.totalorder %s21, 0
      %p169 = por %p167, %p168
      %s170 = ssub.s32 %s22, %s34
      %s171 = ssub.s32 %s23, %s30
      %s172 = sor.u32 %s170, %s171
      %p173 = scmp.eq.s32.totalorder %s172, 0
      %s175 = sadd.s32 %s174, 1
      %s176 = scalar_select %p173, %s174, %s175
      %p179 = pneg %p173
      %p180 = scmp.eq.s32.totalorder %s15, 3
      %p181 = por %p179, %p180
      %p182 = scmp.ne.s32.totalorder %s174, %s177
      %p183 = scmp.eq.s32.totalorder %s15, 0
      %p184 = por %p182, %p183
      %p185 = scmp.ne.s32.totalorder %s174, %s177
      %p186 = scmp.eq.s32.totalorder %s20, 3
      %p187 = por %p185, %p186
      %p188 = scmp.ne.s32.totalorder %s177, %s178
      %p189 = scmp.eq.s32.totalorder %s20, 0
      %p190 = por %p188, %p189
      %p191 = scmp.ne.s32.totalorder %s177, %s178
      %p192 = scmp.eq.s32.totalorder %s21, 3
      %p193 = por %p191, %p192
      %p195 = scmp.ne.s32.totalorder %s178, %s194
      %p196 = scmp.eq.s32.totalorder %s21, 0
      %p197 = por %p195, %p196
      %p198 = scmp.le.s32.totalorder 1, %s15
      %p199 = scmp.lt.s32.totalorder %s15, 5
      %p200 = pnand %p198, %p199
      %p201 = pneg %p200
      // Predicated region
      $region9: #{tpu_custom_call.1} parent=5 // pred_check
        _
      $region10: #{tpu_custom_call.1} parent=5 // pred_check_branch
        %203 = sbr.rel (%p200) target = $region12
      $region11: #{tpu_custom_call.1} parent=5 // pred_region
        %s204 = ssub.s32 %s15, 1
        // Predicated region
        $region13: #{tpu_custom_call.1} parent=11 // pred_check
          %p205 = pneg %p78
        $region14: #{tpu_custom_call.1} parent=11 // pred_check_branch
          %207 = sbr.rel (%p205) target = $region16
        $region15: #{tpu_custom_call.1} parent=11 // pred_region
          _
        $region16: #{tpu_custom_call.1} parent=11 // pred_fallthru
          _
        // Predicated region
        $region17: #{tpu_custom_call.1} parent=11 // pred_check
          %p208 = pneg %p99
        $region18: #{tpu_custom_call.1} parent=11 // pred_check_branch
          %210 = sbr.rel (%p208) target = $region20
        $region19: #{tpu_custom_call.1} parent=11 // pred_region
          _
        $region20: #{tpu_custom_call.1} parent=11 // pred_fallthru
          _
        // Predicated region
        $region21: #{tpu_custom_call.1} parent=11 // pred_check
          %p211 = pneg %p120
        $region22: #{tpu_custom_call.1} parent=11 // pred_check_branch
          %213 = sbr.rel (%p211) target = $region24
        $region23: #{tpu_custom_call.1} parent=11 // pred_region
          _
        $region24: #{tpu_custom_call.1} parent=11 // pred_fallthru
          _
        // Predicated region
        $region25: #{tpu_custom_call.1} parent=11 // pred_check
          %p214 = pneg %p141
        $region26: #{tpu_custom_call.1} parent=11 // pred_check_branch
          %216 = sbr.rel (%p214) target = $region28
        $region27: #{tpu_custom_call.1} parent=11 // pred_region
          _
        $region28: #{tpu_custom_call.1} parent=11 // pred_fallthru
          _
        // Predicated region
        $region29: #{tpu_custom_call.1} parent=11 // pred_check
          %p217 = pneg %p162
        $region30: #{tpu_custom_call.1} parent=11 // pred_check_branch
          %219 = sbr.rel (%p217) target = $region32
        $region31: #{tpu_custom_call.1} parent=11 // pred_region
          _
        $region32: #{tpu_custom_call.1} parent=11 // pred_fallthru
          _
      $region12: #{tpu_custom_call.1} parent=5 // pred_fallthru
        _
      %p220 = scmp.lt.s32.totalorder %s15, 4
      // Predicated region
      $region33: #{tpu_custom_call.1} parent=5 // pred_check
        %p221 = pneg %p220
      $region34: #{tpu_custom_call.1} parent=5 // pred_check_branch
        %223 = sbr.rel (%p221) target = $region36
      $region35: #{tpu_custom_call.1} parent=5 // pred_region
        // Predicated region
        $region37: #{tpu_custom_call.1} parent=35 // pred_check
          %p224 = pneg %p51
        $region38: #{tpu_custom_call.1} parent=35 // pred_check_branch
          %226 = sbr.rel (%p224) target = $region40
        $region39: #{tpu_custom_call.1} parent=35 // pred_region
          %s227 = smul.u32 %s22, 2
          %s228 = sadd.s32 %s227, %s23
          %p229 = scmp.lt.s32.totalorder %s228, 3
          %s230 = scalar_select %p229, %s228, 3
          %s231 = smul.addr %s230, 60
          %s232 = smul.addr %s231, 4
          %s233 = scalar_lea.vmem %s0, %s232
          %s234 = smul.u32 %s22, 2
          %s235 = sadd.s32 %s234, %s23
        $region40: #{tpu_custom_call.1} parent=35 // pred_fallthru
          _
      $region36: #{tpu_custom_call.1} parent=5 // pred_fallthru
        _
      %p236 = scmp.le.s32.totalorder 1, %s15
      %p237 = scmp.lt.s32.totalorder %s15, 5
      %p238 = pnand %p236, %p237
      %p239 = pneg %p238
      // Predicated region
      $region41: #{tpu_custom_call.1} parent=5 // pred_check
        _
      $region42: #{tpu_custom_call.1} parent=5 // pred_check_branch
        %241 = sbr.rel (%p238) target = $region44
      $region43: #{tpu_custom_call.1} parent=5 // pred_region
        %s242 = ssub.s32 %s15, 1
        %s243 = smul.u32 %s24, 2
        %s244 = sadd.s32 %s243, %s25
        %p245 = scmp.lt.s32.totalorder %s244, 3
        %s246 = scalar_select %p245, %s244, 3
        %s247 = smul.addr %s246, 60
        %s248 = smul.addr %s247, 4
        %s249 = scalar_lea.vmem %s0, %s248
        %p250 = pneg %p57
        %p251 = pneg %p54
        %p252 = pneg %p78
        %p253 = pneg %p75
        %p254 = pneg %p99
        %p255 = pneg %p96
        %p256 = pneg %p120
        %p257 = pneg %p117
        %p258 = pneg %p141
        %p259 = pneg %p138
        %p260 = pneg %p162
        %p261 = pneg %p159
        %p262 = pneg %p190
        %p263 = pneg %p187
        %s264 = sand.u32 %s177, 1
        %s265 = scalar_lea.sflag [#allocation3], %s264
        %s266 = sand.u32 %s177, 1
        %s267 = smul.addr %s266, 32
        %s268 = scalar_lea.vmem [#allocation2], %s267
        %s269 = smul.u32 %s24, 2
        %s270 = sadd.s32 %s269, %s25
        %p271 = scmp.lt.s32.totalorder %s270, 3
        %s272 = scalar_select %p271, %s270, 3
        %s273 = smul.addr %s272, 60
        %s274 = smul.addr %s273, 4
        %s275 = scalar_lea.vmem %s0, %s274
        %s276 = smul.u32 %s24, 2
        %s277 = sadd.s32 %s276, %s25
        %s278 = smul.u32 4, %s25
        %s280 = smul.u32 %s25, 8
        %v281 = vld [vmem:[%s275] sm:$0xf]
        %v282 = vld [vmem:[%s275 + $0x4] sm:$0xf]
        %v283 = vld [vmem:[%s275 + $0x8] sm:$0xf]
        %v284 = vld [vmem:[%s275 + $0xc] sm:$0xf]
        %v285 = vld [vmem:[%s275 + $0x10] sm:$0x1]
        %v286 = vld [vmem:[%s275 + $0x14] sm:$0xf]
        %v287 = vld [vmem:[%s275 + $0x18] sm:$0xf]
        %v288 = vld [vmem:[%s275 + $0x1c] sm:$0xf]
        %v289 = vld [vmem:[%s275 + $0x20] sm:$0xf]
        %v290 = vld [vmem:[%s275 + $0x24] sm:$0x1]
        %v291 = vld [vmem:[%s275 + $0x28] sm:$0xf]
        %v292 = vld [vmem:[%s275 + $0x2c] sm:$0xf]
        %v293 = vld [vmem:[%s275 + $0x30] sm:$0xf]
        %v294 = vld [vmem:[%s275 + $0x34] sm:$0xf]
        %v295 = vld [vmem:[%s275 + $0x38] sm:$0x1]
        %v296 = vld [vmem:[%s275 + $0x3c] sm:$0xf]
        %v297 = vld [vmem:[%s275 + $0x40] sm:$0xf]
        %v298 = vld [vmem:[%s275 + $0x44] sm:$0xf]
        %v299 = vld [vmem:[%s275 + $0x48] sm:$0xf]
        %v300 = vld [vmem:[%s275 + $0x4c] sm:$0x1]
        %v301 = vld [vmem:[%s275 + $0x50] sm:$0xf]
        %v302 = vld [vmem:[%s275 + $0x54] sm:$0xf]
        %v303 = vld [vmem:[%s275 + $0x58] sm:$0xf]
        %v304 = vld [vmem:[%s275 + $0x5c] sm:$0xf]
        %v305 = vld [vmem:[%s275 + $0x60] sm:$0x1]
        %v306 = vld [vmem:[%s275 + $0x64] sm:$0xf]
        %v307 = vld [vmem:[%s275 + $0x68] sm:$0xf]
        %v308 = vld [vmem:[%s275 + $0x6c] sm:$0xf]
        %v309 = vld [vmem:[%s275 + $0x70] sm:$0xf]
        %v310 = vld [vmem:[%s275 + $0x74] sm:$0x1]
        %v311 = vld [vmem:[%s275 + $0x78] sm:$0xf]
        %v312 = vld [vmem:[%s275 + $0x7c] sm:$0xf]
        %v313 = vld [vmem:[%s275 + $0x80] sm:$0xf]
        %v314 = vld [vmem:[%s275 + $0x84] sm:$0xf]
        %v315 = vld [vmem:[%s275 + $0x88] sm:$0x1]
        %v316 = vld [vmem:[%s275 + $0x8c] sm:$0xf]
        %v317 = vld [vmem:[%s275 + $0x90] sm:$0xf]
        %v318 = vld [vmem:[%s275 + $0x94] sm:$0xf]
        %v319 = vld [vmem:[%s275 + $0x98] sm:$0xf]
        %v320 = vld [vmem:[%s275 + $0x9c] sm:$0x1]
        %v321 = vld [vmem:[%s275 + $0xa0] sm:$0xf]
        %v322 = vld [vmem:[%s275 + $0xa4] sm:$0xf]
        %v323 = vld [vmem:[%s275 + $0xa8] sm:$0xf]
        %v324 = vld [vmem:[%s275 + $0xac] sm:$0xf]
        %v325 = vld [vmem:[%s275 + $0xb0] sm:$0x1]
        %v326 = vld [vmem:[%s275 + $0xb4] sm:$0xf]
        %v327 = vld [vmem:[%s275 + $0xb8] sm:$0xf]
        %v328 = vld [vmem:[%s275 + $0xbc] sm:$0xf]
        %v329 = vld [vmem:[%s275 + $0xc0] sm:$0xf]
        %v330 = vld [vmem:[%s275 + $0xc4] sm:$0x1]
        %v331 = vld [vmem:[%s275 + $0xc8] sm:$0xf]
        %v332 = vld [vmem:[%s275 + $0xcc] sm:$0xf]
        %v333 = vld [vmem:[%s275 + $0xd0] sm:$0xf]
        %v334 = vld [vmem:[%s275 + $0xd4] sm:$0xf]
        %v335 = vld [vmem:[%s275 + $0xd8] sm:$0x1]
        %v336 = vld [vmem:[%s275 + $0xdc] sm:$0xf]
        %v337 = vld [vmem:[%s275 + $0xe0] sm:$0xf]
        %v338 = vld [vmem:[%s275 + $0xe4] sm:$0xf]
        %v339 = vld [vmem:[%s275 + $0xe8] sm:$0xf]
        %v340 = vld [vmem:[%s275 + $0xec] sm:$0x1]
        %v341 = vmax.bf16 %v281, 0
        %v342 = vmax.bf16 %v282, 0
        %v343 = vmax.bf16 %v283, 0
        %v344 = vmax.bf16 %v284, 0
        %v345 = vmax.bf16 %v285, 0
        %v346 = vmax.bf16 %v286, 0
        %v347 = vmax.bf16 %v287, 0
        %v348 = vmax.bf16 %v288, 0
        %v349 = vmax.bf16 %v289, 0
        %v350 = vmax.bf16 %v290, 0
        %v351 = vmax.bf16 %v291, 0
        %v352 = vmax.bf16 %v292, 0
        %v353 = vmax.bf16 %v293, 0
        %v354 = vmax.bf16 %v294, 0
        %v355 = vmax.bf16 %v295, 0
        %v356 = vmax.bf16 %v296, 0
        %v357 = vmax.bf16 %v297, 0
        %v358 = vmax.bf16 %v298, 0
        %v359 = vmax.bf16 %v299, 0
        %v360 = vmax.bf16 %v300, 0
        %v361 = vmax.bf16 %v301, 0
        %v362 = vmax.bf16 %v302, 0
        %v363 = vmax.bf16 %v303, 0
        %v364 = vmax.bf16 %v304, 0
        %v365 = vmax.bf16 %v305, 0
        %v366 = vmax.bf16 %v306, 0
        %v367 = vmax.bf16 %v307, 0
        %v368 = vmax.bf16 %v308, 0
        %v369 = vmax.bf16 %v309, 0
        %v370 = vmax.bf16 %v310, 0
        %v371 = vmax.bf16 %v311, 0
        %v372 = vmax.bf16 %v312, 0
        %v373 = vmax.bf16 %v313, 0
        %v374 = vmax.bf16 %v314, 0
        %v375 = vmax.bf16 %v315, 0
        %v376 = vmax.bf16 %v316, 0
        %v377 = vmax.bf16 %v317, 0
        %v378 = vmax.bf16 %v318, 0
        %v379 = vmax.bf16 %v319, 0
        %v380 = vmax.bf16 %v320, 0
        %v381 = vmax.bf16 %v321, 0
        %v382 = vmax.bf16 %v322, 0
        %v383 = vmax.bf16 %v323, 0
        %v384 = vmax.bf16 %v324, 0
        %v385 = vmax.bf16 %v325, 0
        %v386 = vmax.bf16 %v326, 0
        %v387 = vmax.bf16 %v327, 0
        %v388 = vmax.bf16 %v328, 0
        %v389 = vmax.bf16 %v329, 0
        %v390 = vmax.bf16 %v330, 0
        %v391 = vmax.bf16 %v331, 0
        %v392 = vmax.bf16 %v332, 0
        %v393 = vmax.bf16 %v333, 0
        %v394 = vmax.bf16 %v334, 0
        %v395 = vmax.bf16 %v335, 0
        %v396 = vmax.bf16 %v336, 0
        %v397 = vmax.bf16 %v337, 0
        %v398 = vmax.bf16 %v338, 0
        %v399 = vmax.bf16 %v339, 0
        %v400 = vmax.bf16 %v340, 0
        %v401 = vld [vmem:[%s1] sm:$0x3]
        %s402 = scalar_lea.vmem %s1, 6
        %v403 = vld [vmem:[%s402] sm:$0x3]
        %v444 = vunpack.c.l.b16 %v346
        %v445 = vunpack.c.l.b16 %v347
        %v446 = vunpack.c.l.b16 %v348
        %v447 = vunpack.c.l.b16 %v349
        %v448 = vunpack.c.l.b16 %v351
        %v449 = vunpack.c.l.b16 %v352
        %v450 = vunpack.c.l.b16 %v353
        %v451 = vunpack.c.l.b16 %v354
        %v452 = vunpack.c.l.b16 %v356
        %v453 = vunpack.c.l.b16 %v357
        %v454 = vunpack.c.l.b16 %v358
        %v455 = vunpack.c.l.b16 %v359
        %v456 = vunpack.c.l.b16 %v361
        %v457 = vunpack.c.l.b16 %v362
        %v458 = vunpack.c.l.b16 %v363
        %v459 = vunpack.c.l.b16 %v364
        %v460 = vunpack.c.l.b16 %v366
        %v461 = vunpack.c.l.b16 %v367
        %v462 = vunpack.c.l.b16 %v368
        %v463 = vunpack.c.l.b16 %v369
        %v464 = vunpack.c.l.b16 %v371
        %v465 = vunpack.c.l.b16 %v372
        %v466 = vunpack.c.l.b16 %v373
        %v467 = vunpack.c.l.b16 %v374
        %v468 = vunpack.c.l.b16 %v376
        %v469 = vunpack.c.l.b16 %v377
        %v470 = vunpack.c.l.b16 %v378
        %v471 = vunpack.c.l.b16 %v379
        %v472 = vunpack.c.l.b16 %v381
        %v473 = vunpack.c.l.b16 %v382
        %v474 = vunpack.c.l.b16 %v383
        %v475 = vunpack.c.l.b16 %v384
        %v476 = vunpack.c.l.b16 %v386
        %v477 = vunpack.c.l.b16 %v387
        %v478 = vunpack.c.l.b16 %v388
        %v479 = vunpack.c.l.b16 %v389
        %v480 = vunpack.c.l.b16 %v391
        %v481 = vunpack.c.l.b16 %v392
        %v482 = vunpack.c.l.b16 %v393
        %v483 = vunpack.c.l.b16 %v394
        %v484 = vpack.c.b16 %v445, %v444
        %v485 = vpack.c.b16 %v447, %v446
        %v486 = vpack.c.b16 %v449, %v448
        %v487 = vpack.c.b16 %v451, %v450
        %v488 = vpack.c.b16 %v453, %v452
        %v489 = vpack.c.b16 %v455, %v454
        %v490 = vpack.c.b16 %v457, %v456
        %v491 = vpack.c.b16 %v459, %v458
        %v492 = vpack.c.b16 %v461, %v460
        %v493 = vpack.c.b16 %v463, %v462
        %v494 = vpack.c.b16 %v465, %v464
        %v495 = vpack.c.b16 %v467, %v466
        %v496 = vpack.c.b16 %v469, %v468
        %v497 = vpack.c.b16 %v471, %v470
        %v498 = vpack.c.b16 %v473, %v472
        %v499 = vpack.c.b16 %v475, %v474
        %v500 = vpack.c.b16 %v477, %v476
        %v501 = vpack.c.b16 %v479, %v478
        %v502 = vpack.c.b16 %v481, %v480
        %v503 = vpack.c.b16 %v483, %v482
        %vm504 = vcmask 31744
        %v506 = vsel %vm504, %v484, 0
        %v509 = vsel %vm504, %v485, 0
        %v512 = vsel %vm504, %v486, 0
        %v515 = vsel %vm504, %v487, 0
        %v518 = vsel %vm504, %v488, 0
        %v521 = vsel %vm504, %v489, 0
        %v524 = vsel %vm504, %v490, 0
        %v527 = vsel %vm504, %v491, 0
        %v530 = vsel %vm504, %v492, 0
        %v533 = vsel %vm504, %v493, 0
        %v536 = vsel %vm504, %v494, 0
        %v539 = vsel %vm504, %v495, 0
        %v542 = vsel %vm504, %v496, 0
        %v545 = vsel %vm504, %v497, 0
        %v548 = vsel %vm504, %v498, 0
        %v551 = vsel %vm504, %v499, 0
        %v554 = vsel %vm504, %v500, 0
        %v557 = vsel %vm504, %v501, 0
        %v560 = vsel %vm504, %v502, 0
        %v563 = vsel %vm504, %v503, 0
        %vm565 = vcmask 1041408
        %v567 = vsel %vm565, %v403, 0
        %569 = vmatprep.subr.bf16.mxu0 0
        %570 = vmatpush1.bf16.msra.mxu0 %v567
        %571 = vmatprep.subr.bf16.mxu0 0
        %572 = vmatpush1.bf16.msra.mxu0 0
        %573 = vmatprep.subr.bf16.mxu0 0
        %574 = vmatpush1.bf16.msra.mxu0 0
        %575 = vmatprep.subr.bf16.mxu0 0
        %576 = vmatpush1.bf16.msra.mxu0 0
        %577 = vmatprep.subr.bf16.mxu0 0
        %578 = vmatpush1.bf16.msra.mxu0 0
        %579 = vmatprep.subr.bf16.mxu0 0
        %580 = vmatpush1.bf16.msra.mxu0 0
        %581 = vmatprep.subr.bf16.mxu0 0
        %582 = vmatpush1.bf16.msra.mxu0 0
        %583 = vmatprep.subr.bf16.mxu0 0
        %584 = vmatpush1.bf16.msra.mxu0 0
        %585 = vmatprep.subr.bf16.mxu0 0
        %586 = vmatpush1.bf16.msra.mxu0 0
        %587 = vmatprep.subr.bf16.mxu0 0
        %588 = vmatpush1.bf16.msra.mxu0 0
        %589 = vmatprep.subr.bf16.mxu0 0
        %590 = vmatpush1.bf16.msra.mxu0 0
        %591 = vmatprep.subr.bf16.mxu0 0
        %592 = vmatpush1.bf16.msra.mxu0 0
        %593 = vmatprep.subr.bf16.mxu0 0
        %594 = vmatpush1.bf16.msra.mxu0 0
        %595 = vmatprep.subr.bf16.mxu0 0
        %596 = vmatpush1.bf16.msra.mxu0 0
        %597 = vmatprep.subr.bf16.mxu0 0
        %598 = vmatpush1.bf16.msra.mxu0 0
        %599 = vmatprep.subr.bf16.mxu0 0
        %600 = vmatpush1.bf16.msra.mxu0 0
        %601 = vmatprep.mubr.bf16.mxu0 0
        %602 = vmatmul.mubr.bf16.gmra.mrb[0].mxu0 %v506
        %v603 = vpop.f32.mrb[0].mxu0
        %v604 = vadd.f32 0.0, %v603
        %v605 = vpop.f32.mrb[0].mxu0
        %v606 = vpop.f32.mrb[0].mxu0
        %v607 = vadd.f32 0.0, %v606
        %v608 = vpop.f32.mrb[0].mxu0
        %609 = vmatprep.mubr.bf16.mxu0 0
        %610 = vmatmul.mubr.bf16.gmra.mrb[0].mxu0 %v509
        %v611 = vpop.f32.mrb[0].mxu0
        %v612 = vadd.f32 0.0, %v611
        %v613 = vpop.f32.mrb[0].mxu0
        %v614 = vpop.f32.mrb[0].mxu0
        %v615 = vadd.f32 0.0, %v614
        %v616 = vpop.f32.mrb[0].mxu0
        %617 = vmatprep.mubr.bf16.mxu0 0
        %618 = vmatmul.mubr.bf16.gmra.mrb[0].mxu0 %v512
        %v619 = vpop.f32.mrb[0].mxu0
        %v620 = vadd.f32 0.0, %v619
        %v621 = vpop.f32.mrb[0].mxu0
        %v622 = vpop.f32.mrb[0].mxu0
        %v623 = vadd.f32 0.0, %v622
        %v624 = vpop.f32.mrb[0].mxu0
        %625 = vmatprep.mubr.bf16.mxu0 0
        %626 = vmatmul.mubr.bf16.gmra.mrb[0].mxu0 %v515
        %v627 = vpop.f32.mrb[0].mxu0
        %v628 = vadd.f32 0.0, %v627
        %v629 = vpop.f32.mrb[0].mxu0
        %v630 = vpop.f32.mrb[0].mxu0
        %v631 = vadd.f32 0.0, %v630
        %v632 = vpop.f32.mrb[0].mxu0
        %633 = vmatprep.mubr.bf16.mxu0 0
        %634 = vmatmul.mubr.bf16.gmra.mrb[0].mxu0 %v518
        %v635 = vpop.f32.mrb[0].mxu0
        %v636 = vadd.f32 0.0, %v635
        %v637 = vpop.f32.mrb[0].mxu0
        %v638 = vpop.f32.mrb[0].mxu0
        %v639 = vadd.f32 0.0, %v638
        %v640 = vpop.f32.mrb[0].mxu0
        %641 = vmatprep.mubr.bf16.mxu0 0
        %642 = vmatmul.mubr.bf16.gmra.mrb[0].mxu0 %v521
        %v643 = vpop.f32.mrb[0].mxu0
        %v644 = vadd.f32 0.0, %v643
        %v645 = vpop.f32.mrb[0].mxu0
        %v646 = vpop.f32.mrb[0].mxu0
        %v647 = vadd.f32 0.0, %v646
        %v648 = vpop.f32.mrb[0].mxu0
        %649 = vmatprep.mubr.bf16.mxu0 0
        %650 = vmatmul.mubr.bf16.gmra.mrb[0].mxu0 %v524
        %v651 = vpop.f32.mrb[0].mxu0
        %v652 = vadd.f32 0.0, %v651
        %v653 = vpop.f32.mrb[0].mxu0
        %v654 = vpop.f32.mrb[0].mxu0
        %v655 = vadd.f32 0.0, %v654
        %v656 = vpop.f32.mrb[0].mxu0
        %657 = vmatprep.mubr.bf16.mxu0 0
        %658 = vmatmul.mubr.bf16.gmra.mrb[0].mxu0 %v527
        %v659 = vpop.f32.mrb[0].mxu0
        %v660 = vadd.f32 0.0, %v659
        %v661 = vpop.f32.mrb[0].mxu0
        %v662 = vpop.f32.mrb[0].mxu0
        %v663 = vadd.f32 0.0, %v662
        %v664 = vpop.f32.mrb[0].mxu0
        %665 = vmatprep.mubr.bf16.mxu0 0
        %666 = vmatmul.mubr.bf16.gmra.mrb[0].mxu0 %v530
        %v667 = vpop.f32.mrb[0].mxu0
        %v668 = vadd.f32 0.0, %v667
        %v669 = vpop.f32.mrb[0].mxu0
        %v670 = vpop.f32.mrb[0].mxu0
        %v671 = vadd.f32 0.0, %v670
        %v672 = vpop.f32.mrb[0].mxu0
        %673 = vmatprep.mubr.bf16.mxu0 0
        %674 = vmatmul.mubr.bf16.gmra.mrb[0].mxu0 %v533
        %v675 = vpop.f32.mrb[0].mxu0
        %v676 = vadd.f32 0.0, %v675
        %v677 = vpop.f32.mrb[0].mxu0
        %v678 = vpop.f32.mrb[0].mxu0
        %v679 = vadd.f32 0.0, %v678
        %v680 = vpop.f32.mrb[0].mxu0
        %681 = vmatprep.mubr.bf16.mxu0 0
        %682 = vmatmul.mubr.bf16.gmra.mrb[0].mxu0 %v536
        %v683 = vpop.f32.mrb[0].mxu0
        %v684 = vadd.f32 0.0, %v683
        %v685 = vpop.f32.mrb[0].mxu0
        %v686 = vpop.f32.mrb[0].mxu0
        %v687 = vadd.f32 0.0, %v686
        %v688 = vpop.f32.mrb[0].mxu0
        %689 = vmatprep.mubr.bf16.mxu0 0
        %690 = vmatmul.mubr.bf16.gmra.mrb[0].mxu0 %v539
        %v691 = vpop.f32.mrb[0].mxu0
        %v692 = vadd.f32 0.0, %v691
        %v693 = vpop.f32.mrb[0].mxu0
        %v694 = vpop.f32.mrb[0].mxu0
        %v695 = vadd.f32 0.0, %v694
        %v696 = vpop.f32.mrb[0].mxu0
        %697 = vmatprep.mubr.bf16.mxu0 0
        %698 = vmatmul.mubr.bf16.gmra.mrb[0].mxu0 %v542
        %v699 = vpop.f32.mrb[0].mxu0
        %v700 = vadd.f32 0.0, %v699
        %v701 = vpop.f32.mrb[0].mxu0
        %v702 = vpop.f32.mrb[0].mxu0
        %v703 = vadd.f32 0.0, %v702
        %v704 = vpop.f32.mrb[0].mxu0
        %705 = vmatprep.mubr.bf16.mxu0 0
        %706 = vmatmul.mubr.bf16.gmra.mrb[0].mxu0 %v545
        %v707 = vpop.f32.mrb[0].mxu0
        %v708 = vadd.f32 0.0, %v707
        %v709 = vpop.f32.mrb[0].mxu0
        %v710 = vpop.f32.mrb[0].mxu0
        %v711 = vadd.f32 0.0, %v710
        %v712 = vpop.f32.mrb[0].mxu0
        %713 = vmatprep.mubr.bf16.mxu0 0
        %714 = vmatmul.mubr.bf16.gmra.mrb[0].mxu0 %v548
        %v715 = vpop.f32.mrb[0].mxu0
        %v716 = vadd.f32 0.0, %v715
        %v717 = vpop.f32.mrb[0].mxu0
        %v718 = vpop.f32.mrb[0].mxu0
        %v719 = vadd.f32 0.0, %v718
        %v720 = vpop.f32.mrb[0].mxu0
        %721 = vmatprep.mubr.bf16.mxu0 0
        %722 = vmatmul.mubr.bf16.gmra.mrb[0].mxu0 %v551
        %v723 = vpop.f32.mrb[0].mxu0
        %v724 = vadd.f32 0.0, %v723
        %v725 = vpop.f32.mrb[0].mxu0
        %v726 = vpop.f32.mrb[0].mxu0
        %v727 = vadd.f32 0.0, %v726
        %v728 = vpop.f32.mrb[0].mxu0
        %729 = vmatprep.mubr.bf16.mxu0 0
        %730 = vmatmul.mubr.bf16.gmra.mrb[0].mxu0 %v554
        %v731 = vpop.f32.mrb[0].mxu0
        %v732 = vadd.f32 0.0, %v731
        %v733 = vpop.f32.mrb[0].mxu0
        %v734 = vpop.f32.mrb[0].mxu0
        %v735 = vadd.f32 0.0, %v734
        %v736 = vpop.f32.mrb[0].mxu0
        %737 = vmatprep.mubr.bf16.mxu0 0
        %738 = vmatmul.mubr.bf16.gmra.mrb[0].mxu0 %v557
        %v739 = vpop.f32.mrb[0].mxu0
        %v740 = vadd.f32 0.0, %v739
        %v741 = vpop.f32.mrb[0].mxu0
        %v742 = vpop.f32.mrb[0].mxu0
        %v743 = vadd.f32 0.0, %v742
        %v744 = vpop.f32.mrb[0].mxu0
        %745 = vmatprep.mubr.bf16.mxu0 0
        %746 = vmatmul.mubr.bf16.gmra.mrb[0].mxu0 %v560
        %v747 = vpop.f32.mrb[0].mxu0
        %v748 = vadd.f32 0.0, %v747
        %v749 = vpop.f32.mrb[0].mxu0
        %v750 = vpop.f32.mrb[0].mxu0
        %v751 = vadd.f32 0.0, %v750
        %v752 = vpop.f32.mrb[0].mxu0
        %753 = vmatprep.mubr.bf16.mxu0 0
        %754 = vmatmul.mubr.bf16.gmra.mrb[0].mxu0 %v563
        %v755 = vpop.f32.mrb[0].mxu0
        %v756 = vadd.f32 0.0, %v755
        %v757 = vpop.f32.mrb[0].mxu0
        %v758 = vpop.f32.mrb[0].mxu0
        %v759 = vadd.f32 0.0, %v758
        %v760 = vpop.f32.mrb[0].mxu0
        %761 = vdwg.mxu0
        %v766 = vunpack.c.l.b16 %v341
        %v767 = vunpack.c.l.b16 %v342
        %v768 = vunpack.c.l.b16 %v343
        %v769 = vunpack.c.l.b16 %v344
        %v770 = vpack.c.b16 %v767, %v766
        %v771 = vpack.c.b16 %v769, %v768
        %v773 = vsel %vm504, %v770, 0
        %v776 = vsel %vm504, %v771, 0
        %v779 = vsel %vm565, %v401, 0
        %781 = vmatprep.subr.bf16.mxu0 0
        %782 = vmatpush1.bf16.msra.mxu0 %v779
        %783 = vmatprep.subr.bf16.mxu0 0
        %784 = vmatpush1.bf16.msra.mxu0 0
        %785 = vmatprep.subr.bf16.mxu0 0
        %786 = vmatpush1.bf16.msra.mxu0 0
        %787 = vmatprep.subr.bf16.mxu0 0
        %788 = vmatpush1.bf16.msra.mxu0 0
        %789 = vmatprep.subr.bf16.mxu0 0
        %790 = vmatpush1.bf16.msra.mxu0 0
        %791 = vmatprep.subr.bf16.mxu0 0
        %792 = vmatpush1.bf16.msra.mxu0 0
        %793 = vmatprep.subr.bf16.mxu0 0
        %794 = vmatpush1.bf16.msra.mxu0 0
        %795 = vmatprep.subr.bf16.mxu0 0
        %796 = vmatpush1.bf16.msra.mxu0 0
        %797 = vmatprep.subr.bf16.mxu0 0
        %798 = vmatpush1.bf16.msra.mxu0 0
        %799 = vmatprep.subr.bf16.mxu0 0
        %800 = vmatpush1.bf16.msra.mxu0 0
        %801 = vmatprep.subr.bf16.mxu0 0
        %802 = vmatpush1.bf16.msra.mxu0 0
        %803 = vmatprep.subr.bf16.mxu0 0
        %804 = vmatpush1.bf16.msra.mxu0 0
        %805 = vmatprep.subr.bf16.mxu0 0
        %806 = vmatpush1.bf16.msra.mxu0 0
        %807 = vmatprep.subr.bf16.mxu0 0
        %808 = vmatpush1.bf16.msra.mxu0 0
        %809 = vmatprep.subr.bf16.mxu0 0
        %810 = vmatpush1.bf16.msra.mxu0 0
        %811 = vmatprep.subr.bf16.mxu0 0
        %812 = vmatpush1.bf16.msra.mxu0 0
        %813 = vmatprep.mubr.bf16.mxu0 0
        %814 = vmatmul.mubr.bf16.gmra.mrb[0].mxu0 %v773
        %v815 = vpop.f32.mrb[0].mxu0
        %v816 = vadd.f32 %v604, %v815
        %v817 = vpop.f32.mrb[0].mxu0
        %v818 = vpop.f32.mrb[0].mxu0
        %v819 = vadd.f32 %v607, %v818
        %v820 = vpop.f32.mrb[0].mxu0
        %821 = vmatprep.mubr.bf16.mxu0 0
        %822 = vmatmul.mubr.bf16.gmra.mrb[0].mxu0 %v776
        %v823 = vpop.f32.mrb[0].mxu0
        %v824 = vadd.f32 %v612, %v823
        %v825 = vpop.f32.mrb[0].mxu0
        %v826 = vpop.f32.mrb[0].mxu0
        %v827 = vadd.f32 %v615, %v826
        %v828 = vpop.f32.mrb[0].mxu0
        %829 = vmatprep.mubr.bf16.mxu0 0
        %830 = vmatmul.mubr.bf16.gmra.mrb[0].mxu0 %v506
        %v831 = vpop.f32.mrb[0].mxu0
        %v832 = vadd.f32 %v620, %v831
        %v833 = vpop.f32.mrb[0].mxu0
        %v834 = vpop.f32.mrb[0].mxu0
        %v835 = vadd.f32 %v623, %v834
        %v836 = vpop.f32.mrb[0].mxu0
        %837 = vmatprep.mubr.bf16.mxu0 0
        %838 = vmatmul.mubr.bf16.gmra.mrb[0].mxu0 %v509
        %v839 = vpop.f32.mrb[0].mxu0
        %v840 = vadd.f32 %v628, %v839
        %v841 = vpop.f32.mrb[0].mxu0
        %v842 = vpop.f32.mrb[0].mxu0
        %v843 = vadd.f32 %v631, %v842
        %v844 = vpop.f32.mrb[0].mxu0
        %845 = vmatprep.mubr.bf16.mxu0 0
        %846 = vmatmul.mubr.bf16.gmra.mrb[0].mxu0 %v512
        %v847 = vpop.f32.mrb[0].mxu0
        %v848 = vadd.f32 %v636, %v847
        %v849 = vpop.f32.mrb[0].mxu0
        %v850 = vpop.f32.mrb[0].mxu0
        %v851 = vadd.f32 %v639, %v850
        %v852 = vpop.f32.mrb[0].mxu0
        %853 = vmatprep.mubr.bf16.mxu0 0
        %854 = vmatmul.mubr.bf16.gmra.mrb[0].mxu0 %v515
        %v855 = vpop.f32.mrb[0].mxu0
        %v856 = vadd.f32 %v644, %v855
        %v857 = vpop.f32.mrb[0].mxu0
        %v858 = vpop.f32.mrb[0].mxu0
        %v859 = vadd.f32 %v647, %v858
        %v860 = vpop.f32.mrb[0].mxu0
        %861 = vmatprep.mubr.bf16.mxu0 0
        %862 = vmatmul.mubr.bf16.gmra.mrb[0].mxu0 %v518
        %v863 = vpop.f32.mrb[0].mxu0
        %v864 = vadd.f32 %v652, %v863
        %v865 = vpop.f32.mrb[0].mxu0
        %v866 = vpop.f32.mrb[0].mxu0
        %v867 = vadd.f32 %v655, %v866
        %v868 = vpop.f32.mrb[0].mxu0
        %869 = vmatprep.mubr.bf16.mxu0 0
        %870 = vmatmul.mubr.bf16.gmra.mrb[0].mxu0 %v521
        %v871 = vpop.f32.mrb[0].mxu0
        %v872 = vadd.f32 %v660, %v871
        %v873 = vpop.f32.mrb[0].mxu0
        %v874 = vpop.f32.mrb[0].mxu0
        %v875 = vadd.f32 %v663, %v874
        %v876 = vpop.f32.mrb[0].mxu0
        %877 = vmatprep.mubr.bf16.mxu0 0
        %878 = vmatmul.mubr.bf16.gmra.mrb[0].mxu0 %v524
        %v879 = vpop.f32.mrb[0].mxu0
        %v880 = vadd.f32 %v668, %v879
        %v881 = vpop.f32.mrb[0].mxu0
        %v882 = vpop.f32.mrb[0].mxu0
        %v883 = vadd.f32 %v671, %v882
        %v884 = vpop.f32.mrb[0].mxu0
        %885 = vmatprep.mubr.bf16.mxu0 0
        %886 = vmatmul.mubr.bf16.gmra.mrb[0].mxu0 %v527
        %v887 = vpop.f32.mrb[0].mxu0
        %v888 = vadd.f32 %v676, %v887
        %v889 = vpop.f32.mrb[0].mxu0
        %v890 = vpop.f32.mrb[0].mxu0
        %v891 = vadd.f32 %v679, %v890
        %v892 = vpop.f32.mrb[0].mxu0
        %893 = vmatprep.mubr.bf16.mxu0 0
        %894 = vmatmul.mubr.bf16.gmra.mrb[0].mxu0 %v530
        %v895 = vpop.f32.mrb[0].mxu0
        %v896 = vadd.f32 %v684, %v895
        %v897 = vpop.f32.mrb[0].mxu0
        %v898 = vpop.f32.mrb[0].mxu0
        %v899 = vadd.f32 %v687, %v898
        %v900 = vpop.f32.mrb[0].mxu0
        %901 = vmatprep.mubr.bf16.mxu0 0
        %902 = vmatmul.mubr.bf16.gmra.mrb[0].mxu0 %v533
        %v903 = vpop.f32.mrb[0].mxu0
        %v904 = vadd.f32 %v692, %v903
        %v905 = vpop.f32.mrb[0].mxu0
        %v906 = vpop.f32.mrb[0].mxu0
        %v907 = vadd.f32 %v695, %v906
        %v908 = vpop.f32.mrb[0].mxu0
        %909 = vmatprep.mubr.bf16.mxu0 0
        %910 = vmatmul.mubr.bf16.gmra.mrb[0].mxu0 %v536
        %v911 = vpop.f32.mrb[0].mxu0
        %v912 = vadd.f32 %v700, %v911
        %v913 = vpop.f32.mrb[0].mxu0
        %v914 = vpop.f32.mrb[0].mxu0
        %v915 = vadd.f32 %v703, %v914
        %v916 = vpop.f32.mrb[0].mxu0
        %917 = vmatprep.mubr.bf16.mxu0 0
        %918 = vmatmul.mubr.bf16.gmra.mrb[0].mxu0 %v539
        %v919 = vpop.f32.mrb[0].mxu0
        %v920 = vadd.f32 %v708, %v919
        %v921 = vpop.f32.mrb[0].mxu0
        %v922 = vpop.f32.mrb[0].mxu0
        %v923 = vadd.f32 %v711, %v922
        %v924 = vpop.f32.mrb[0].mxu0
        %925 = vmatprep.mubr.bf16.mxu0 0
        %926 = vmatmul.mubr.bf16.gmra.mrb[0].mxu0 %v542
        %v927 = vpop.f32.mrb[0].mxu0
        %v928 = vadd.f32 %v716, %v927
        %v929 = vpop.f32.mrb[0].mxu0
        %v930 = vpop.f32.mrb[0].mxu0
        %v931 = vadd.f32 %v719, %v930
        %v932 = vpop.f32.mrb[0].mxu0
        %933 = vmatprep.mubr.bf16.mxu0 0
        %934 = vmatmul.mubr.bf16.gmra.mrb[0].mxu0 %v545
        %v935 = vpop.f32.mrb[0].mxu0
        %v936 = vadd.f32 %v724, %v935
        %v937 = vpop.f32.mrb[0].mxu0
        %v938 = vpop.f32.mrb[0].mxu0
        %v939 = vadd.f32 %v727, %v938
        %v940 = vpop.f32.mrb[0].mxu0
        %941 = vmatprep.mubr.bf16.mxu0 0
        %942 = vmatmul.mubr.bf16.gmra.mrb[0].mxu0 %v548
        %v943 = vpop.f32.mrb[0].mxu0
        %v944 = vadd.f32 %v732, %v943
        %v945 = vpop.f32.mrb[0].mxu0
        %v946 = vpop.f32.mrb[0].mxu0
        %v947 = vadd.f32 %v735, %v946
        %v948 = vpop.f32.mrb[0].mxu0
        %949 = vmatprep.mubr.bf16.mxu0 0
        %950 = vmatmul.mubr.bf16.gmra.mrb[0].mxu0 %v551
        %v951 = vpop.f32.mrb[0].mxu0
        %v952 = vadd.f32 %v740, %v951
        %v953 = vpop.f32.mrb[0].mxu0
        %v954 = vpop.f32.mrb[0].mxu0
        %v955 = vadd.f32 %v743, %v954
        %v956 = vpop.f32.mrb[0].mxu0
        %957 = vmatprep.mubr.bf16.mxu0 0
        %958 = vmatmul.mubr.bf16.gmra.mrb[0].mxu0 %v554
        %v959 = vpop.f32.mrb[0].mxu0
        %v960 = vadd.f32 %v748, %v959
        %v961 = vpop.f32.mrb[0].mxu0
        %v962 = vpop.f32.mrb[0].mxu0
        %v963 = vadd.f32 %v751, %v962
        %v964 = vpop.f32.mrb[0].mxu0
        %965 = vmatprep.mubr.bf16.mxu0 0
        %966 = vmatmul.mubr.bf16.gmra.mrb[0].mxu0 %v557
        %v967 = vpop.f32.mrb[0].mxu0
        %v968 = vadd.f32 %v756, %v967
        %v969 = vpop.f32.mrb[0].mxu0
        %v970 = vpop.f32.mrb[0].mxu0
        %v971 = vadd.f32 %v759, %v970
        %v972 = vpop.f32.mrb[0].mxu0
        %973 = vdwg.mxu0
        %s974 = scalar_lea.vmem %s1, 12
        %v975 = vld [vmem:[%s974] sm:$0x3]
        %v980 = vunpack.c.l.b16 %v396
        %v981 = vunpack.c.l.b16 %v397
        %v982 = vunpack.c.l.b16 %v398
        %v983 = vunpack.c.l.b16 %v399
        %v984 = vpack.c.b16 %v981, %v980
        %v985 = vpack.c.b16 %v983, %v982
        %v987 = vsel %vm504, %v984, 0
        %v990 = vsel %vm504, %v985, 0
        %v993 = vsel %vm565, %v975, 0
        %995 = vmatprep.subr.bf16.mxu0 0
        %996 = vmatpush1.bf16.msra.mxu0 %v993
        %997 = vmatprep.subr.bf16.mxu0 0
        %998 = vmatpush1.bf16.msra.mxu0 0
        %999 = vmatprep.subr.bf16.mxu0 0
        %1000 = vmatpush1.bf16.msra.mxu0 0
        %1001 = vmatprep.subr.bf16.mxu0 0
        %1002 = vmatpush1.bf16.msra.mxu0 0
        %1003 = vmatprep.subr.bf16.mxu0 0
        %1004 = vmatpush1.bf16.msra.mxu0 0
        %1005 = vmatprep.subr.bf16.mxu0 0
        %1006 = vmatpush1.bf16.msra.mxu0 0
        %1007 = vmatprep.subr.bf16.mxu0 0
        %1008 = vmatpush1.bf16.msra.mxu0 0
        %1009 = vmatprep.subr.bf16.mxu0 0
        %1010 = vmatpush1.bf16.msra.mxu0 0
        %1011 = vmatprep.subr.bf16.mxu0 0
        %1012 = vmatpush1.bf16.msra.mxu0 0
        %1013 = vmatprep.subr.bf16.mxu0 0
        %1014 = vmatpush1.bf16.msra.mxu0 0
        %1015 = vmatprep.subr.bf16.mxu0 0
        %1016 = vmatpush1.bf16.msra.mxu0 0
        %1017 = vmatprep.subr.bf16.mxu0 0
        %1018 = vmatpush1.bf16.msra.mxu0 0
        %1019 = vmatprep.subr.bf16.mxu0 0
        %1020 = vmatpush1.bf16.msra.mxu0 0
        %1021 = vmatprep.subr.bf16.mxu0 0
        %1022 = vmatpush1.bf16.msra.mxu0 0
        %1023 = vmatprep.subr.bf16.mxu0 0
        %1024 = vmatpush1.bf16.msra.mxu0 0
        %1025 = vmatprep.subr.bf16.mxu0 0
        %1026 = vmatpush1.bf16.msra.mxu0 0
        %1027 = vmatprep.mubr.bf16.mxu0 0
        %1028 = vmatmul.mubr.bf16.gmra.mrb[0].mxu0 %v512
        %v1029 = vpop.f32.mrb[0].mxu0
        %v1030 = vadd.f32 0.0, %v1029
        %v1031 = vpop.f32.mrb[0].mxu0
        %v1032 = vpop.f32.mrb[0].mxu0
        %v1033 = vadd.f32 0.0, %v1032
        %v1034 = vpop.f32.mrb[0].mxu0
        %1035 = vmatprep.mubr.bf16.mxu0 0
        %1036 = vmatmul.mubr.bf16.gmra.mrb[0].mxu0 %v515
        %v1037 = vpop.f32.mrb[0].mxu0
        %v1038 = vadd.f32 0.0, %v1037
        %v1039 = vpop.f32.mrb[0].mxu0
        %v1040 = vpop.f32.mrb[0].mxu0
        %v1041 = vadd.f32 0.0, %v1040
        %v1042 = vpop.f32.mrb[0].mxu0
        %1043 = vmatprep.mubr.bf16.mxu0 0
        %1044 = vmatmul.mubr.bf16.gmra.mrb[0].mxu0 %v518
        %v1045 = vpop.f32.mrb[0].mxu0
        %v1046 = vadd.f32 0.0, %v1045
        %v1047 = vpop.f32.mrb[0].mxu0
        %v1048 = vpop.f32.mrb[0].mxu0
        %v1049 = vadd.f32 0.0, %v1048
        %v1050 = vpop.f32.mrb[0].mxu0
        %1051 = vmatprep.mubr.bf16.mxu0 0
        %1052 = vmatmul.mubr.bf16.gmra.mrb[0].mxu0 %v521
        %v1053 = vpop.f32.mrb[0].mxu0
        %v1054 = vadd.f32 0.0, %v1053
        %v1055 = vpop.f32.mrb[0].mxu0
        %v1056 = vpop.f32.mrb[0].mxu0
        %v1057 = vadd.f32 0.0, %v1056
        %v1058 = vpop.f32.mrb[0].mxu0
        %1059 = vmatprep.mubr.bf16.mxu0 0
        %1060 = vmatmul.mubr.bf16.gmra.mrb[0].mxu0 %v524
        %v1061 = vpop.f32.mrb[0].mxu0
        %v1062 = vadd.f32 0.0, %v1061
        %v1063 = vpop.f32.mrb[0].mxu0
        %v1064 = vpop.f32.mrb[0].mxu0
        %v1065 = vadd.f32 0.0, %v1064
        %v1066 = vpop.f32.mrb[0].mxu0
        %1067 = vmatprep.mubr.bf16.mxu0 0
        %1068 = vmatmul.mubr.bf16.gmra.mrb[0].mxu0 %v527
        %v1069 = vpop.f32.mrb[0].mxu0
        %v1070 = vadd.f32 0.0, %v1069
        %v1071 = vpop.f32.mrb[0].mxu0
        %v1072 = vpop.f32.mrb[0].mxu0
        %v1073 = vadd.f32 0.0, %v1072
        %v1074 = vpop.f32.mrb[0].mxu0
        %1075 = vmatprep.mubr.bf16.mxu0 0
        %1076 = vmatmul.mubr.bf16.gmra.mrb[0].mxu0 %v530
        %v1077 = vpop.f32.mrb[0].mxu0
        %v1078 = vadd.f32 0.0, %v1077
        %v1079 = vpop.f32.mrb[0].mxu0
        %v1080 = vpop.f32.mrb[0].mxu0
        %v1081 = vadd.f32 0.0, %v1080
        %v1082 = vpop.f32.mrb[0].mxu0
        %1083 = vmatprep.mubr.bf16.mxu0 0
        %1084 = vmatmul.mubr.bf16.gmra.mrb[0].mxu0 %v533
        %v1085 = vpop.f32.mrb[0].mxu0
        %v1086 = vadd.f32 0.0, %v1085
        %v1087 = vpop.f32.mrb[0].mxu0
        %v1088 = vpop.f32.mrb[0].mxu0
        %v1089 = vadd.f32 0.0, %v1088
        %v1090 = vpop.f32.mrb[0].mxu0
        %1091 = vmatprep.mubr.bf16.mxu0 0
        %1092 = vmatmul.mubr.bf16.gmra.mrb[0].mxu0 %v536
        %v1093 = vpop.f32.mrb[0].mxu0
        %v1094 = vadd.f32 0.0, %v1093
        %v1095 = vpop.f32.mrb[0].mxu0
        %v1096 = vpop.f32.mrb[0].mxu0
        %v1097 = vadd.f32 0.0, %v1096
        %v1098 = vpop.f32.mrb[0].mxu0
        %1099 = vmatprep.mubr.bf16.mxu0 0
        %1100 = vmatmul.mubr.bf16.gmra.mrb[0].mxu0 %v539
        %v1101 = vpop.f32.mrb[0].mxu0
        %v1102 = vadd.f32 0.0, %v1101
        %v1103 = vpop.f32.mrb[0].mxu0
        %v1104 = vpop.f32.mrb[0].mxu0
        %v1105 = vadd.f32 0.0, %v1104
        %v1106 = vpop.f32.mrb[0].mxu0
        %1107 = vmatprep.mubr.bf16.mxu0 0
        %1108 = vmatmul.mubr.bf16.gmra.mrb[0].mxu0 %v542
        %v1109 = vpop.f32.mrb[0].mxu0
        %v1110 = vadd.f32 0.0, %v1109
        %v1111 = vpop.f32.mrb[0].mxu0
        %v1112 = vpop.f32.mrb[0].mxu0
        %v1113 = vadd.f32 0.0, %v1112
        %v1114 = vpop.f32.mrb[0].mxu0
        %1115 = vmatprep.mubr.bf16.mxu0 0
        %1116 = vmatmul.mubr.bf16.gmra.mrb[0].mxu0 %v545
        %v1117 = vpop.f32.mrb[0].mxu0
        %v1118 = vadd.f32 0.0, %v1117
        %v1119 = vpop.f32.mrb[0].mxu0
        %v1120 = vpop.f32.mrb[0].mxu0
        %v1121 = vadd.f32 0.0, %v1120
        %v1122 = vpop.f32.mrb[0].mxu0
        %1123 = vmatprep.mubr.bf16.mxu0 0
        %1124 = vmatmul.mubr.bf16.gmra.mrb[0].mxu0 %v548
        %v1125 = vpop.f32.mrb[0].mxu0
        %v1126 = vadd.f32 0.0, %v1125
        %v1127 = vpop.f32.mrb[0].mxu0
        %v1128 = vpop.f32.mrb[0].mxu0
        %v1129 = vadd.f32 0.0, %v1128
        %v1130 = vpop.f32.mrb[0].mxu0
        %1131 = vmatprep.mubr.bf16.mxu0 0
        %1132 = vmatmul.mubr.bf16.gmra.mrb[0].mxu0 %v551
        %v1133 = vpop.f32.mrb[0].mxu0
        %v1134 = vadd.f32 0.0, %v1133
        %v1135 = vpop.f32.mrb[0].mxu0
        %v1136 = vpop.f32.mrb[0].mxu0
        %v1137 = vadd.f32 0.0, %v1136
        %v1138 = vpop.f32.mrb[0].mxu0
        %1139 = vmatprep.mubr.bf16.mxu0 0
        %1140 = vmatmul.mubr.bf16.gmra.mrb[0].mxu0 %v554
        %v1141 = vpop.f32.mrb[0].mxu0
        %v1142 = vadd.f32 0.0, %v1141
        %v1143 = vpop.f32.mrb[0].mxu0
        %v1144 = vpop.f32.mrb[0].mxu0
        %v1145 = vadd.f32 0.0, %v1144
        %v1146 = vpop.f32.mrb[0].mxu0
        %1147 = vmatprep.mubr.bf16.mxu0 0
        %1148 = vmatmul.mubr.bf16.gmra.mrb[0].mxu0 %v557
        %v1149 = vpop.f32.mrb[0].mxu0
        %v1150 = vadd.f32 0.0, %v1149
        %v1151 = vpop.f32.mrb[0].mxu0
        %v1152 = vpop.f32.mrb[0].mxu0
        %v1153 = vadd.f32 0.0, %v1152
        %v1154 = vpop.f32.mrb[0].mxu0
        %1155 = vmatprep.mubr.bf16.mxu0 0
        %1156 = vmatmul.mubr.bf16.gmra.mrb[0].mxu0 %v560
        %v1157 = vpop.f32.mrb[0].mxu0
        %v1158 = vadd.f32 0.0, %v1157
        %v1159 = vpop.f32.mrb[0].mxu0
        %v1160 = vpop.f32.mrb[0].mxu0
        %v1161 = vadd.f32 0.0, %v1160
        %v1162 = vpop.f32.mrb[0].mxu0
        %1163 = vmatprep.mubr.bf16.mxu0 0
        %1164 = vmatmul.mubr.bf16.gmra.mrb[0].mxu0 %v563
        %v1165 = vpop.f32.mrb[0].mxu0
        %v1166 = vadd.f32 0.0, %v1165
        %v1167 = vpop.f32.mrb[0].mxu0
        %v1168 = vpop.f32.mrb[0].mxu0
        %v1169 = vadd.f32 0.0, %v1168
        %v1170 = vpop.f32.mrb[0].mxu0
        %1171 = vmatprep.mubr.bf16.mxu0 0
        %1172 = vmatmul.mubr.bf16.gmra.mrb[0].mxu0 %v987
        %v1173 = vpop.f32.mrb[0].mxu0
        %v1174 = vadd.f32 0.0, %v1173
        %v1175 = vpop.f32.mrb[0].mxu0
        %v1176 = vpop.f32.mrb[0].mxu0
        %v1177 = vadd.f32 0.0, %v1176
        %v1178 = vpop.f32.mrb[0].mxu0
        %1179 = vmatprep.mubr.bf16.mxu0 0
        %1180 = vmatmul.mubr.bf16.gmra.mrb[0].mxu0 %v990
        %v1181 = vpop.f32.mrb[0].mxu0
        %v1182 = vadd.f32 0.0, %v1181
        %v1183 = vpop.f32.mrb[0].mxu0
        %v1184 = vpop.f32.mrb[0].mxu0
        %v1185 = vadd.f32 0.0, %v1184
        %v1186 = vpop.f32.mrb[0].mxu0
        %1187 = vdwg.mxu0
        %v1188 = vadd.f32 %v816, %v1030
        %v1189 = vadd.f32 %v819, %v1033
        %v1190 = vadd.f32 %v824, %v1038
        %v1191 = vadd.f32 %v827, %v1041
        %v1192 = vadd.f32 %v832, %v1046
        %v1193 = vadd.f32 %v835, %v1049
        %v1194 = vadd.f32 %v840, %v1054
        %v1195 = vadd.f32 %v843, %v1057
        %v1196 = vadd.f32 %v848, %v1062
        %v1197 = vadd.f32 %v851, %v1065
        %v1198 = vadd.f32 %v856, %v1070
        %v1199 = vadd.f32 %v859, %v1073
        %v1200 = vadd.f32 %v864, %v1078
        %v1201 = vadd.f32 %v867, %v1081
        %v1202 = vadd.f32 %v872, %v1086
        %v1203 = vadd.f32 %v875, %v1089
        %v1204 = vadd.f32 %v880, %v1094
        %v1205 = vadd.f32 %v883, %v1097
        %v1206 = vadd.f32 %v888, %v1102
        %v1207 = vadd.f32 %v891, %v1105
        %v1208 = vadd.f32 %v896, %v1110
        %v1209 = vadd.f32 %v899, %v1113
        %v1210 = vadd.f32 %v904, %v1118
        %v1211 = vadd.f32 %v907, %v1121
        %v1212 = vadd.f32 %v912, %v1126
        %v1213 = vadd.f32 %v915, %v1129
        %v1214 = vadd.f32 %v920, %v1134
        %v1215 = vadd.f32 %v923, %v1137
        %v1216 = vadd.f32 %v928, %v1142
        %v1217 = vadd.f32 %v931, %v1145
        %v1218 = vadd.f32 %v936, %v1150
        %v1219 = vadd.f32 %v939, %v1153
        %v1220 = vadd.f32 %v944, %v1158
        %v1221 = vadd.f32 %v947, %v1161
        %v1222 = vadd.f32 %v952, %v1166
        %v1223 = vadd.f32 %v955, %v1169
        %v1224 = vadd.f32 %v960, %v1174
        %v1225 = vadd.f32 %v963, %v1177
        %v1226 = vadd.f32 %v968, %v1182
        %v1227 = vadd.f32 %v971, %v1185
        %vm1228 = vsmask.f32 3328
        %vm1229 = vsmask.f32 7440
        %vm1230 = vmor %vm1228, %vm1229
        %v1232 = vshrl.u32 %v341, 16
        %v1234 = vrot.slane %v1232, 4
        %v1235 = vshll.u32 %v341, 16
        %v1237 = vrot.slane %v1235, 5
        %v1238 = vor.u32 %v1234, %v1237
        %v1239 = vrot.slane %v1238, 4
        %v1241 = vshll.u32 %v342, 16
        %v1243 = vrot.slane %v1241, 5
        %v1244 = vsel %vm1230, %v1239, %v1243
        %v1245 = vshrl.u32 %v342, 16
        %v1247 = vrot.slane %v1245, 4
        %v1248 = vor.u32 %v1247, %v1243
        %v1249 = vrot.slane %v1248, 4
        %v1251 = vshll.u32 %v343, 16
        %v1253 = vrot.slane %v1251, 5
        %v1254 = vsel %vm1230, %v1249, %v1253
        %v1255 = vshrl.u32 %v343, 16
        %v1257 = vrot.slane %v1255, 4
        %v1258 = vor.u32 %v1257, %v1253
        %v1259 = vrot.slane %v1258, 4
        %v1261 = vshll.u32 %v344, 16
        %v1263 = vrot.slane %v1261, 5
        %v1264 = vsel %vm1230, %v1259, %v1263
        %v1265 = vshrl.u32 %v344, 16
        %v1267 = vrot.slane %v1265, 4
        %v1268 = vor.u32 %v1267, %v1263
        %v1269 = vrot.slane %v1268, 4
        %v1271 = vshll.u32 %v345, 16
        %v1273 = vrot.slane %v1271, 5
        %v1274 = vsel %vm1230, %v1269, %v1273
        %v1276 = vshrl.u32 %v346, 16
        %v1278 = vrot.slane %v1276, 4
        %v1279 = vshll.u32 %v346, 16
        %v1281 = vrot.slane %v1279, 5
        %v1282 = vor.u32 %v1278, %v1281
        %v1283 = vrot.slane %v1282, 4
        %v1285 = vshll.u32 %v347, 16
        %v1287 = vrot.slane %v1285, 5
        %v1288 = vsel %vm1230, %v1283, %v1287
        %v1289 = vshrl.u32 %v347, 16
        %v1291 = vrot.slane %v1289, 4
        %v1292 = vor.u32 %v1291, %v1287
        %v1293 = vrot.slane %v1292, 4
        %v1295 = vshll.u32 %v348, 16
        %v1297 = vrot.slane %v1295, 5
        %v1298 = vsel %vm1230, %v1293, %v1297
        %v1299 = vshrl.u32 %v348, 16
        %v1301 = vrot.slane %v1299, 4
        %v1302 = vor.u32 %v1301, %v1297
        %v1303 = vrot.slane %v1302, 4
        %v1305 = vshll.u32 %v349, 16
        %v1307 = vrot.slane %v1305, 5
        %v1308 = vsel %vm1230, %v1303, %v1307
        %v1309 = vshrl.u32 %v349, 16
        %v1311 = vrot.slane %v1309, 4
        %v1312 = vor.u32 %v1311, %v1307
        %v1313 = vrot.slane %v1312, 4
        %v1315 = vshll.u32 %v350, 16
        %v1317 = vrot.slane %v1315, 5
        %v1318 = vsel %vm1230, %v1313, %v1317
        %v1320 = vshrl.u32 %v351, 16
        %v1322 = vrot.slane %v1320, 4
        %v1323 = vshll.u32 %v351, 16
        %v1325 = vrot.slane %v1323, 5
        %v1326 = vor.u32 %v1322, %v1325
        %v1327 = vrot.slane %v1326, 4
        %v1329 = vshll.u32 %v352, 16
        %v1331 = vrot.slane %v1329, 5
        %v1332 = vsel %vm1230, %v1327, %v1331
        %v1333 = vshrl.u32 %v352, 16
        %v1335 = vrot.slane %v1333, 4
        %v1336 = vor.u32 %v1335, %v1331
        %v1337 = vrot.slane %v1336, 4
        %v1339 = vshll.u32 %v353, 16
        %v1341 = vrot.slane %v1339, 5
        %v1342 = vsel %vm1230, %v1337, %v1341
        %v1343 = vshrl.u32 %v353, 16
        %v1345 = vrot.slane %v1343, 4
        %v1346 = vor.u32 %v1345, %v1341
        %v1347 = vrot.slane %v1346, 4
        %v1349 = vshll.u32 %v354, 16
        %v1351 = vrot.slane %v1349, 5
        %v1352 = vsel %vm1230, %v1347, %v1351
        %v1353 = vshrl.u32 %v354, 16
        %v1355 = vrot.slane %v1353, 4
        %v1356 = vor.u32 %v1355, %v1351
        %v1357 = vrot.slane %v1356, 4
        %v1359 = vshll.u32 %v355, 16
        %v1361 = vrot.slane %v1359, 5
        %v1362 = vsel %vm1230, %v1357, %v1361
        %v1364 = vshrl.u32 %v356, 16
        %v1366 = vrot.slane %v1364, 4
        %v1367 = vshll.u32 %v356, 16
        %v1369 = vrot.slane %v1367, 5
        %v1370 = vor.u32 %v1366, %v1369
        %v1371 = vrot.slane %v1370, 4
        %v1373 = vshll.u32 %v357, 16
        %v1375 = vrot.slane %v1373, 5
        %v1376 = vsel %vm1230, %v1371, %v1375
        %v1377 = vshrl.u32 %v357, 16
        %v1379 = vrot.slane %v1377, 4
        %v1380 = vor.u32 %v1379, %v1375
        %v1381 = vrot.slane %v1380, 4
        %v1383 = vshll.u32 %v358, 16
        %v1385 = vrot.slane %v1383, 5
        %v1386 = vsel %vm1230, %v1381, %v1385
        %v1387 = vshrl.u32 %v358, 16
        %v1389 = vrot.slane %v1387, 4
        %v1390 = vor.u32 %v1389, %v1385
        %v1391 = vrot.slane %v1390, 4
        %v1393 = vshll.u32 %v359, 16
        %v1395 = vrot.slane %v1393, 5
        %v1396 = vsel %vm1230, %v1391, %v1395
        %v1397 = vshrl.u32 %v359, 16
        %v1399 = vrot.slane %v1397, 4
        %v1400 = vor.u32 %v1399, %v1395
        %v1401 = vrot.slane %v1400, 4
        %v1403 = vshll.u32 %v360, 16
        %v1405 = vrot.slane %v1403, 5
        %v1406 = vsel %vm1230, %v1401, %v1405
        %v1408 = vshrl.u32 %v361, 16
        %v1410 = vrot.slane %v1408, 4
        %v1411 = vshll.u32 %v361, 16
        %v1413 = vrot.slane %v1411, 5
        %v1414 = vor.u32 %v1410, %v1413
        %v1415 = vrot.slane %v1414, 4
        %v1417 = vshll.u32 %v362, 16
        %v1419 = vrot.slane %v1417, 5
        %v1420 = vsel %vm1230, %v1415, %v1419
        %v1421 = vshrl.u32 %v362, 16
        %v1423 = vrot.slane %v1421, 4
        %v1424 = vor.u32 %v1423, %v1419
        %v1425 = vrot.slane %v1424, 4
        %v1427 = vshll.u32 %v363, 16
        %v1429 = vrot.slane %v1427, 5
        %v1430 = vsel %vm1230, %v1425, %v1429
        %v1431 = vshrl.u32 %v363, 16
        %v1433 = vrot.slane %v1431, 4
        %v1434 = vor.u32 %v1433, %v1429
        %v1435 = vrot.slane %v1434, 4
        %v1437 = vshll.u32 %v364, 16
        %v1439 = vrot.slane %v1437, 5
        %v1440 = vsel %vm1230, %v1435, %v1439
        %v1441 = vshrl.u32 %v364, 16
        %v1443 = vrot.slane %v1441, 4
        %v1444 = vor.u32 %v1443, %v1439
        %v1445 = vrot.slane %v1444, 4
        %v1447 = vshll.u32 %v365, 16
        %v1449 = vrot.slane %v1447, 5
        %v1450 = vsel %vm1230, %v1445, %v1449
        %v1452 = vshrl.u32 %v366, 16
        %v1454 = vrot.slane %v1452, 4
        %v1455 = vshll.u32 %v366, 16
        %v1457 = vrot.slane %v1455, 5
        %v1458 = vor.u32 %v1454, %v1457
        %v1459 = vrot.slane %v1458, 4
        %v1461 = vshll.u32 %v367, 16
        %v1463 = vrot.slane %v1461, 5
        %v1464 = vsel %vm1230, %v1459, %v1463
        %v1465 = vshrl.u32 %v367, 16
        %v1467 = vrot.slane %v1465, 4
        %v1468 = vor.u32 %v1467, %v1463
        %v1469 = vrot.slane %v1468, 4
        %v1471 = vshll.u32 %v368, 16
        %v1473 = vrot.slane %v1471, 5
        %v1474 = vsel %vm1230, %v1469, %v1473
        %v1475 = vshrl.u32 %v368, 16
        %v1477 = vrot.slane %v1475, 4
        %v1478 = vor.u32 %v1477, %v1473
        %v1479 = vrot.slane %v1478, 4
        %v1481 = vshll.u32 %v369, 16
        %v1483 = vrot.slane %v1481, 5
        %v1484 = vsel %vm1230, %v1479, %v1483
        %v1485 = vshrl.u32 %v369, 16
        %v1487 = vrot.slane %v1485, 4
        %v1488 = vor.u32 %v1487, %v1483
        %v1489 = vrot.slane %v1488, 4
        %v1491 = vshll.u32 %v370, 16
        %v1493 = vrot.slane %v1491, 5
        %v1494 = vsel %vm1230, %v1489, %v1493
        %v1496 = vshrl.u32 %v371, 16
        %v1498 = vrot.slane %v1496, 4
        %v1499 = vshll.u32 %v371, 16
        %v1501 = vrot.slane %v1499, 5
        %v1502 = vor.u32 %v1498, %v1501
        %v1503 = vrot.slane %v1502, 4
        %v1505 = vshll.u32 %v372, 16
        %v1507 = vrot.slane %v1505, 5
        %v1508 = vsel %vm1230, %v1503, %v1507
        %v1509 = vshrl.u32 %v372, 16
        %v1511 = vrot.slane %v1509, 4
        %v1512 = vor.u32 %v1511, %v1507
        %v1513 = vrot.slane %v1512, 4
        %v1515 = vshll.u32 %v373, 16
        %v1517 = vrot.slane %v1515, 5
        %v1518 = vsel %vm1230, %v1513, %v1517
        %v1519 = vshrl.u32 %v373, 16
        %v1521 = vrot.slane %v1519, 4
        %v1522 = vor.u32 %v1521, %v1517
        %v1523 = vrot.slane %v1522, 4
        %v1525 = vshll.u32 %v374, 16
        %v1527 = vrot.slane %v1525, 5
        %v1528 = vsel %vm1230, %v1523, %v1527
        %v1529 = vshrl.u32 %v374, 16
        %v1531 = vrot.slane %v1529, 4
        %v1532 = vor.u32 %v1531, %v1527
        %v1533 = vrot.slane %v1532, 4
        %v1535 = vshll.u32 %v375, 16
        %v1537 = vrot.slane %v1535, 5
        %v1538 = vsel %vm1230, %v1533, %v1537
        %v1540 = vshrl.u32 %v376, 16
        %v1542 = vrot.slane %v1540, 4
        %v1543 = vshll.u32 %v376, 16
        %v1545 = vrot.slane %v1543, 5
        %v1546 = vor.u32 %v1542, %v1545
        %v1547 = vrot.slane %v1546, 4
        %v1549 = vshll.u32 %v377, 16
        %v1551 = vrot.slane %v1549, 5
        %v1552 = vsel %vm1230, %v1547, %v1551
        %v1553 = vshrl.u32 %v377, 16
        %v1555 = vrot.slane %v1553, 4
        %v1556 = vor.u32 %v1555, %v1551
        %v1557 = vrot.slane %v1556, 4
        %v1559 = vshll.u32 %v378, 16
        %v1561 = vrot.slane %v1559, 5
        %v1562 = vsel %vm1230, %v1557, %v1561
        %v1563 = vshrl.u32 %v378, 16
        %v1565 = vrot.slane %v1563, 4
        %v1566 = vor.u32 %v1565, %v1561
        %v1567 = vrot.slane %v1566, 4
        %v1569 = vshll.u32 %v379, 16
        %v1571 = vrot.slane %v1569, 5
        %v1572 = vsel %vm1230, %v1567, %v1571
        %v1573 = vshrl.u32 %v379, 16
        %v1575 = vrot.slane %v1573, 4
        %v1576 = vor.u32 %v1575, %v1571
        %v1577 = vrot.slane %v1576, 4
        %v1579 = vshll.u32 %v380, 16
        %v1581 = vrot.slane %v1579, 5
        %v1582 = vsel %vm1230, %v1577, %v1581
        %v1584 = vshrl.u32 %v381, 16
        %v1586 = vrot.slane %v1584, 4
        %v1587 = vshll.u32 %v381, 16
        %v1589 = vrot.slane %v1587, 5
        %v1590 = vor.u32 %v1586, %v1589
        %v1591 = vrot.slane %v1590, 4
        %v1593 = vshll.u32 %v382, 16
        %v1595 = vrot.slane %v1593, 5
        %v1596 = vsel %vm1230, %v1591, %v1595
        %v1597 = vshrl.u32 %v382, 16
        %v1599 = vrot.slane %v1597, 4
        %v1600 = vor.u32 %v1599, %v1595
        %v1601 = vrot.slane %v1600, 4
        %v1603 = vshll.u32 %v383, 16
        %v1605 = vrot.slane %v1603, 5
        %v1606 = vsel %vm1230, %v1601, %v1605
        %v1607 = vshrl.u32 %v383, 16
        %v1609 = vrot.slane %v1607, 4
        %v1610 = vor.u32 %v1609, %v1605
        %v1611 = vrot.slane %v1610, 4
        %v1613 = vshll.u32 %v384, 16
        %v1615 = vrot.slane %v1613, 5
        %v1616 = vsel %vm1230, %v1611, %v1615
        %v1617 = vshrl.u32 %v384, 16
        %v1619 = vrot.slane %v1617, 4
        %v1620 = vor.u32 %v1619, %v1615
        %v1621 = vrot.slane %v1620, 4
        %v1623 = vshll.u32 %v385, 16
        %v1625 = vrot.slane %v1623, 5
        %v1626 = vsel %vm1230, %v1621, %v1625
        %v1628 = vshrl.u32 %v386, 16
        %v1630 = vrot.slane %v1628, 4
        %v1631 = vshll.u32 %v386, 16
        %v1633 = vrot.slane %v1631, 5
        %v1634 = vor.u32 %v1630, %v1633
        %v1635 = vrot.slane %v1634, 4
        %v1637 = vshll.u32 %v387, 16
        %v1639 = vrot.slane %v1637, 5
        %v1640 = vsel %vm1230, %v1635, %v1639
        %v1641 = vshrl.u32 %v387, 16
        %v1643 = vrot.slane %v1641, 4
        %v1644 = vor.u32 %v1643, %v1639
        %v1645 = vrot.slane %v1644, 4
        %v1647 = vshll.u32 %v388, 16
        %v1649 = vrot.slane %v1647, 5
        %v1650 = vsel %vm1230, %v1645, %v1649
        %v1651 = vshrl.u32 %v388, 16
        %v1653 = vrot.slane %v1651, 4
        %v1654 = vor.u32 %v1653, %v1649
        %v1655 = vrot.slane %v1654, 4
        %v1657 = vshll.u32 %v389, 16
        %v1659 = vrot.slane %v1657, 5
        %v1660 = vsel %vm1230, %v1655, %v1659
        %v1661 = vshrl.u32 %v389, 16
        %v1663 = vrot.slane %v1661, 4
        %v1664 = vor.u32 %v1663, %v1659
        %v1665 = vrot.slane %v1664, 4
        %v1667 = vshll.u32 %v390, 16
        %v1669 = vrot.slane %v1667, 5
        %v1670 = vsel %vm1230, %v1665, %v1669
        %s1671 = scalar_lea.vmem %s1, 2
        %v1672 = vld [vmem:[%s1671] sm:$0x3]
        %v1673 = vunpack.c.l.b16 %v1244
        %v1674 = vunpack.c.l.b16 %v1254
        %v1675 = vunpack.c.l.b16 %v1264
        %v1676 = vunpack.c.l.b16 %v1274
        %v1677 = vunpack.c.l.b16 %v1288
        %v1678 = vunpack.c.l.b16 %v1298
        %v1679 = vunpack.c.l.b16 %v1308
        %v1680 = vunpack.c.l.b16 %v1318
        %v1681 = vunpack.c.l.b16 %v1332
        %v1682 = vunpack.c.l.b16 %v1342
        %v1683 = vunpack.c.l.b16 %v1352
        %v1684 = vunpack.c.l.b16 %v1362
        %v1685 = vunpack.c.l.b16 %v1376
        %v1686 = vunpack.c.l.b16 %v1386
        %v1687 = vunpack.c.l.b16 %v1396
        %v1688 = vunpack.c.l.b16 %v1406
        %v1689 = vunpack.c.l.b16 %v1420
        %v1690 = vunpack.c.l.b16 %v1430
        %v1691 = vunpack.c.l.b16 %v1440
        %v1692 = vunpack.c.l.b16 %v1450
        %v1693 = vunpack.c.l.b16 %v1464
        %v1694 = vunpack.c.l.b16 %v1474
        %v1695 = vunpack.c.l.b16 %v1484
        %v1696 = vunpack.c.l.b16 %v1494
        %v1697 = vunpack.c.l.b16 %v1508
        %v1698 = vunpack.c.l.b16 %v1518
        %v1699 = vunpack.c.l.b16 %v1528
        %v1700 = vunpack.c.l.b16 %v1538
        %v1701 = vunpack.c.l.b16 %v1552
        %v1702 = vunpack.c.l.b16 %v1562
        %v1703 = vunpack.c.l.b16 %v1572
        %v1704 = vunpack.c.l.b16 %v1582
        %v1705 = vunpack.c.l.b16 %v1596
        %v1706 = vunpack.c.l.b16 %v1606
        %v1707 = vunpack.c.l.b16 %v1616
        %v1708 = vunpack.c.l.b16 %v1626
        %v1709 = vunpack.c.l.b16 %v1640
        %v1710 = vunpack.c.l.b16 %v1650
        %v1711 = vunpack.c.l.b16 %v1660
        %v1712 = vunpack.c.l.b16 %v1670
        %v1713 = vpack.c.b16 %v1674, %v1673
        %v1714 = vpack.c.b16 %v1676, %v1675
        %v1715 = vpack.c.b16 %v1678, %v1677
        %v1716 = vpack.c.b16 %v1680, %v1679
        %v1717 = vpack.c.b16 %v1682, %v1681
        %v1718 = vpack.c.b16 %v1684, %v1683
        %v1719 = vpack.c.b16 %v1686, %v1685
        %v1720 = vpack.c.b16 %v1688, %v1687
        %v1721 = vpack.c.b16 %v1690, %v1689
        %v1722 = vpack.c.b16 %v1692, %v1691
        %v1723 = vpack.c.b16 %v1694, %v1693
        %v1724 = vpack.c.b16 %v1696, %v1695
        %v1725 = vpack.c.b16 %v1698, %v1697
        %v1726 = vpack.c.b16 %v1700, %v1699
        %v1727 = vpack.c.b16 %v1702, %v1701
        %v1728 = vpack.c.b16 %v1704, %v1703
        %v1729 = vpack.c.b16 %v1706, %v1705
        %v1730 = vpack.c.b16 %v1708, %v1707
        %v1731 = vpack.c.b16 %v1710, %v1709
        %v1732 = vpack.c.b16 %v1712, %v1711
        %v1734 = vsel %vm504, %v1713, 0
        %v1737 = vsel %vm504, %v1714, 0
        %v1740 = vsel %vm504, %v1715, 0
        %v1743 = vsel %vm504, %v1716, 0
        %v1746 = vsel %vm504, %v1717, 0
        %v1749 = vsel %vm504, %v1718, 0
        %v1752 = vsel %vm504, %v1719, 0
        %v1755 = vsel %vm504, %v1720, 0
        %v1758 = vsel %vm504, %v1721, 0
        %v1761 = vsel %vm504, %v1722, 0
        %v1764 = vsel %vm504, %v1723, 0
        %v1767 = vsel %vm504, %v1724, 0
        %v1770 = vsel %vm504, %v1725, 0
        %v1773 = vsel %vm504, %v1726, 0
        %v1776 = vsel %vm504, %v1727, 0
        %v1779 = vsel %vm504, %v1728, 0
        %v1782 = vsel %vm504, %v1729, 0
        %v1785 = vsel %vm504, %v1730, 0
        %v1788 = vsel %vm504, %v1731, 0
        %v1791 = vsel %vm504, %v1732, 0
        %v1794 = vsel %vm565, %v1672, 0
        %1796 = vmatprep.subr.bf16.mxu0 0
        %1797 = vmatpush1.bf16.msra.mxu0 %v1794
        %1798 = vmatprep.subr.bf16.mxu0 0
        %1799 = vmatpush1.bf16.msra.mxu0 0
        %1800 = vmatprep.subr.bf16.mxu0 0
        %1801 = vmatpush1.bf16.msra.mxu0 0
        %1802 = vmatprep.subr.bf16.mxu0 0
        %1803 = vmatpush1.bf16.msra.mxu0 0
        %1804 = vmatprep.subr.bf16.mxu0 0
        %1805 = vmatpush1.bf16.msra.mxu0 0
        %1806 = vmatprep.subr.bf16.mxu0 0
        %1807 = vmatpush1.bf16.msra.mxu0 0
        %1808 = vmatprep.subr.bf16.mxu0 0
        %1809 = vmatpush1.bf16.msra.mxu0 0
        %1810 = vmatprep.subr.bf16.mxu0 0
        %1811 = vmatpush1.bf16.msra.mxu0 0
        %1812 = vmatprep.subr.bf16.mxu0 0
        %1813 = vmatpush1.bf16.msra.mxu0 0
        %1814 = vmatprep.subr.bf16.mxu0 0
        %1815 = vmatpush1.bf16.msra.mxu0 0
        %1816 = vmatprep.subr.bf16.mxu0 0
        %1817 = vmatpush1.bf16.msra.mxu0 0
        %1818 = vmatprep.subr.bf16.mxu0 0
        %1819 = vmatpush1.bf16.msra.mxu0 0
        %1820 = vmatprep.subr.bf16.mxu0 0
        %1821 = vmatpush1.bf16.msra.mxu0 0
        %1822 = vmatprep.subr.bf16.mxu0 0
        %1823 = vmatpush1.bf16.msra.mxu0 0
        %1824 = vmatprep.subr.bf16.mxu0 0
        %1825 = vmatpush1.bf16.msra.mxu0 0
        %1826 = vmatprep.subr.bf16.mxu0 0
        %1827 = vmatpush1.bf16.msra.mxu0 0
        %1828 = vmatprep.mubr.bf16.mxu0 0
        %1829 = vmatmul.mubr.bf16.gmra.mrb[0].mxu0 %v1734
        %v1830 = vpop.f32.mrb[0].mxu0
        %v1831 = vadd.f32 0.0, %v1830
        %v1832 = vpop.f32.mrb[0].mxu0
        %v1833 = vpop.f32.mrb[0].mxu0
        %v1834 = vadd.f32 0.0, %v1833
        %v1835 = vpop.f32.mrb[0].mxu0
        %1836 = vmatprep.mubr.bf16.mxu0 0
        %1837 = vmatmul.mubr.bf16.gmra.mrb[0].mxu0 %v1737
        %v1838 = vpop.f32.mrb[0].mxu0
        %v1839 = vadd.f32 0.0, %v1838
        %v1840 = vpop.f32.mrb[0].mxu0
        %v1841 = vpop.f32.mrb[0].mxu0
        %v1842 = vadd.f32 0.0, %v1841
        %v1843 = vpop.f32.mrb[0].mxu0
        %1844 = vmatprep.mubr.bf16.mxu0 0
        %1845 = vmatmul.mubr.bf16.gmra.mrb[0].mxu0 %v1740
        %v1846 = vpop.f32.mrb[0].mxu0
        %v1847 = vadd.f32 0.0, %v1846
        %v1848 = vpop.f32.mrb[0].mxu0
        %v1849 = vpop.f32.mrb[0].mxu0
        %v1850 = vadd.f32 0.0, %v1849
        %v1851 = vpop.f32.mrb[0].mxu0
        %1852 = vmatprep.mubr.bf16.mxu0 0
        %1853 = vmatmul.mubr.bf16.gmra.mrb[0].mxu0 %v1743
        %v1854 = vpop.f32.mrb[0].mxu0
        %v1855 = vadd.f32 0.0, %v1854
        %v1856 = vpop.f32.mrb[0].mxu0
        %v1857 = vpop.f32.mrb[0].mxu0
        %v1858 = vadd.f32 0.0, %v1857
        %v1859 = vpop.f32.mrb[0].mxu0
        %1860 = vmatprep.mubr.bf16.mxu0 0
        %1861 = vmatmul.mubr.bf16.gmra.mrb[0].mxu0 %v1746
        %v1862 = vpop.f32.mrb[0].mxu0
        %v1863 = vadd.f32 0.0, %v1862
        %v1864 = vpop.f32.mrb[0].mxu0
        %v1865 = vpop.f32.mrb[0].mxu0
        %v1866 = vadd.f32 0.0, %v1865
        %v1867 = vpop.f32.mrb[0].mxu0
        %1868 = vmatprep.mubr.bf16.mxu0 0
        %1869 = vmatmul.mubr.bf16.gmra.mrb[0].mxu0 %v1749
        %v1870 = vpop.f32.mrb[0].mxu0
        %v1871 = vadd.f32 0.0, %v1870
        %v1872 = vpop.f32.mrb[0].mxu0
        %v1873 = vpop.f32.mrb[0].mxu0
        %v1874 = vadd.f32 0.0, %v1873
        %v1875 = vpop.f32.mrb[0].mxu0
        %1876 = vmatprep.mubr.bf16.mxu0 0
        %1877 = vmatmul.mubr.bf16.gmra.mrb[0].mxu0 %v1752
        %v1878 = vpop.f32.mrb[0].mxu0
        %v1879 = vadd.f32 0.0, %v1878
        %v1880 = vpop.f32.mrb[0].mxu0
        %v1881 = vpop.f32.mrb[0].mxu0
        %v1882 = vadd.f32 0.0, %v1881
        %v1883 = vpop.f32.mrb[0].mxu0
        %1884 = vmatprep.mubr.bf16.mxu0 0
        %1885 = vmatmul.mubr.bf16.gmra.mrb[0].mxu0 %v1755
        %v1886 = vpop.f32.mrb[0].mxu0
        %v1887 = vadd.f32 0.0, %v1886
        %v1888 = vpop.f32.mrb[0].mxu0
        %v1889 = vpop.f32.mrb[0].mxu0
        %v1890 = vadd.f32 0.0, %v1889
        %v1891 = vpop.f32.mrb[0].mxu0
        %1892 = vmatprep.mubr.bf16.mxu0 0
        %1893 = vmatmul.mubr.bf16.gmra.mrb[0].mxu0 %v1758
        %v1894 = vpop.f32.mrb[0].mxu0
        %v1895 = vadd.f32 0.0, %v1894
        %v1896 = vpop.f32.mrb[0].mxu0
        %v1897 = vpop.f32.mrb[0].mxu0
        %v1898 = vadd.f32 0.0, %v1897
        %v1899 = vpop.f32.mrb[0].mxu0
        %1900 = vmatprep.mubr.bf16.mxu0 0
        %1901 = vmatmul.mubr.bf16.gmra.mrb[0].mxu0 %v1761
        %v1902 = vpop.f32.mrb[0].mxu0
        %v1903 = vadd.f32 0.0, %v1902
        %v1904 = vpop.f32.mrb[0].mxu0
        %v1905 = vpop.f32.mrb[0].mxu0
        %v1906 = vadd.f32 0.0, %v1905
        %v1907 = vpop.f32.mrb[0].mxu0
        %1908 = vmatprep.mubr.bf16.mxu0 0
        %1909 = vmatmul.mubr.bf16.gmra.mrb[0].mxu0 %v1764
        %v1910 = vpop.f32.mrb[0].mxu0
        %v1911 = vadd.f32 0.0, %v1910
        %v1912 = vpop.f32.mrb[0].mxu0
        %v1913 = vpop.f32.mrb[0].mxu0
        %v1914 = vadd.f32 0.0, %v1913
        %v1915 = vpop.f32.mrb[0].mxu0
        %1916 = vmatprep.mubr.bf16.mxu0 0
        %1917 = vmatmul.mubr.bf16.gmra.mrb[0].mxu0 %v1767
        %v1918 = vpop.f32.mrb[0].mxu0
        %v1919 = vadd.f32 0.0, %v1918
        %v1920 = vpop.f32.mrb[0].mxu0
        %v1921 = vpop.f32.mrb[0].mxu0
        %v1922 = vadd.f32 0.0, %v1921
        %v1923 = vpop.f32.mrb[0].mxu0
        %1924 = vmatprep.mubr.bf16.mxu0 0
        %1925 = vmatmul.mubr.bf16.gmra.mrb[0].mxu0 %v1770
        %v1926 = vpop.f32.mrb[0].mxu0
        %v1927 = vadd.f32 0.0, %v1926
        %v1928 = vpop.f32.mrb[0].mxu0
        %v1929 = vpop.f32.mrb[0].mxu0
        %v1930 = vadd.f32 0.0, %v1929
        %v1931 = vpop.f32.mrb[0].mxu0
        %1932 = vmatprep.mubr.bf16.mxu0 0
        %1933 = vmatmul.mubr.bf16.gmra.mrb[0].mxu0 %v1773
        %v1934 = vpop.f32.mrb[0].mxu0
        %v1935 = vadd.f32 0.0, %v1934
        %v1936 = vpop.f32.mrb[0].mxu0
        %v1937 = vpop.f32.mrb[0].mxu0
        %v1938 = vadd.f32 0.0, %v1937
        %v1939 = vpop.f32.mrb[0].mxu0
        %1940 = vmatprep.mubr.bf16.mxu0 0
        %1941 = vmatmul.mubr.bf16.gmra.mrb[0].mxu0 %v1776
        %v1942 = vpop.f32.mrb[0].mxu0
        %v1943 = vadd.f32 0.0, %v1942
        %v1944 = vpop.f32.mrb[0].mxu0
        %v1945 = vpop.f32.mrb[0].mxu0
        %v1946 = vadd.f32 0.0, %v1945
        %v1947 = vpop.f32.mrb[0].mxu0
        %1948 = vmatprep.mubr.bf16.mxu0 0
        %1949 = vmatmul.mubr.bf16.gmra.mrb[0].mxu0 %v1779
        %v1950 = vpop.f32.mrb[0].mxu0
        %v1951 = vadd.f32 0.0, %v1950
        %v1952 = vpop.f32.mrb[0].mxu0
        %v1953 = vpop.f32.mrb[0].mxu0
        %v1954 = vadd.f32 0.0, %v1953
        %v1955 = vpop.f32.mrb[0].mxu0
        %1956 = vmatprep.mubr.bf16.mxu0 0
        %1957 = vmatmul.mubr.bf16.gmra.mrb[0].mxu0 %v1782
        %v1958 = vpop.f32.mrb[0].mxu0
        %v1959 = vadd.f32 0.0, %v1958
        %v1960 = vpop.f32.mrb[0].mxu0
        %v1961 = vpop.f32.mrb[0].mxu0
        %v1962 = vadd.f32 0.0, %v1961
        %v1963 = vpop.f32.mrb[0].mxu0
        %1964 = vmatprep.mubr.bf16.mxu0 0
        %1965 = vmatmul.mubr.bf16.gmra.mrb[0].mxu0 %v1785
        %v1966 = vpop.f32.mrb[0].mxu0
        %v1967 = vadd.f32 0.0, %v1966
        %v1968 = vpop.f32.mrb[0].mxu0
        %v1969 = vpop.f32.mrb[0].mxu0
        %v1970 = vadd.f32 0.0, %v1969
        %v1971 = vpop.f32.mrb[0].mxu0
        %1972 = vmatprep.mubr.bf16.mxu0 0
        %1973 = vmatmul.mubr.bf16.gmra.mrb[0].mxu0 %v1788
        %v1974 = vpop.f32.mrb[0].mxu0
        %v1975 = vadd.f32 0.0, %v1974
        %v1976 = vpop.f32.mrb[0].mxu0
        %v1977 = vpop.f32.mrb[0].mxu0
        %v1978 = vadd.f32 0.0, %v1977
        %v1979 = vpop.f32.mrb[0].mxu0
        %1980 = vmatprep.mubr.bf16.mxu0 0
        %1981 = vmatmul.mubr.bf16.gmra.mrb[0].mxu0 %v1791
        %v1982 = vpop.f32.mrb[0].mxu0
        %v1983 = vadd.f32 0.0, %v1982
        %v1984 = vpop.f32.mrb[0].mxu0
        %v1985 = vpop.f32.mrb[0].mxu0
        %v1986 = vadd.f32 0.0, %v1985
        %v1987 = vpop.f32.mrb[0].mxu0
        %1988 = vdwg.mxu0
        %v1989 = vadd.f32 %v1188, %v1831
        %v1990 = vadd.f32 %v1189, %v1834
        %v1991 = vadd.f32 %v1190, %v1839
        %v1992 = vadd.f32 %v1191, %v1842
        %v1993 = vadd.f32 %v1192, %v1847
        %v1994 = vadd.f32 %v1193, %v1850
        %v1995 = vadd.f32 %v1194, %v1855
        %v1996 = vadd.f32 %v1195, %v1858
        %v1997 = vadd.f32 %v1196, %v1863
        %v1998 = vadd.f32 %v1197, %v1866
        %v1999 = vadd.f32 %v1198, %v1871
        %v2000 = vadd.f32 %v1199, %v1874
        %v2001 = vadd.f32 %v1200, %v1879
        %v2002 = vadd.f32 %v1201, %v1882
        %v2003 = vadd.f32 %v1202, %v1887
        %v2004 = vadd.f32 %v1203, %v1890
        %v2005 = vadd.f32 %v1204, %v1895
        %v2006 = vadd.f32 %v1205, %v1898
        %v2007 = vadd.f32 %v1206, %v1903
        %v2008 = vadd.f32 %v1207, %v1906
        %v2009 = vadd.f32 %v1208, %v1911
        %v2010 = vadd.f32 %v1209, %v1914
        %v2011 = vadd.f32 %v1210, %v1919
        %v2012 = vadd.f32 %v1211, %v1922
        %v2013 = vadd.f32 %v1212, %v1927
        %v2014 = vadd.f32 %v1213, %v1930
        %v2015 = vadd.f32 %v1214, %v1935
        %v2016 = vadd.f32 %v1215, %v1938
        %v2017 = vadd.f32 %v1216, %v1943
        %v2018 = vadd.f32 %v1217, %v1946
        %v2019 = vadd.f32 %v1218, %v1951
        %v2020 = vadd.f32 %v1219, %v1954
        %v2021 = vadd.f32 %v1220, %v1959
        %v2022 = vadd.f32 %v1221, %v1962
        %v2023 = vadd.f32 %v1222, %v1967
        %v2024 = vadd.f32 %v1223, %v1970
        %v2025 = vadd.f32 %v1224, %v1975
        %v2026 = vadd.f32 %v1225, %v1978
        %v2027 = vadd.f32 %v1226, %v1983
        %v2028 = vadd.f32 %v1227, %v1986
        %v2030 = vshrl.u32 %v391, 16
        %v2032 = vrot.slane %v2030, 4
        %v2033 = vshll.u32 %v391, 16
        %v2035 = vrot.slane %v2033, 5
        %v2036 = vor.u32 %v2032, %v2035
        %v2037 = vrot.slane %v2036, 4
        %v2039 = vshll.u32 %v392, 16
        %v2041 = vrot.slane %v2039, 5
        %v2042 = vsel %vm1230, %v2037, %v2041
        %v2043 = vshrl.u32 %v392, 16
        %v2045 = vrot.slane %v2043, 4
        %v2046 = vor.u32 %v2045, %v2041
        %v2047 = vrot.slane %v2046, 4
        %v2049 = vshll.u32 %v393, 16
        %v2051 = vrot.slane %v2049, 5
        %v2052 = vsel %vm1230, %v2047, %v2051
        %v2053 = vshrl.u32 %v393, 16
        %v2055 = vrot.slane %v2053, 4
        %v2056 = vor.u32 %v2055, %v2051
        %v2057 = vrot.slane %v2056, 4
        %v2059 = vshll.u32 %v394, 16
        %v2061 = vrot.slane %v2059, 5
        %v2062 = vsel %vm1230, %v2057, %v2061
        %v2063 = vshrl.u32 %v394, 16
        %v2065 = vrot.slane %v2063, 4
        %v2066 = vor.u32 %v2065, %v2061
        %v2067 = vrot.slane %v2066, 4
        %v2069 = vshll.u32 %v395, 16
        %v2071 = vrot.slane %v2069, 5
        %v2072 = vsel %vm1230, %v2067, %v2071
        %s2073 = scalar_lea.vmem %s1, 8
        %v2074 = vld [vmem:[%s2073] sm:$0x3]
        %v2075 = vunpack.c.l.b16 %v2042
        %v2076 = vunpack.c.l.b16 %v2052
        %v2077 = vunpack.c.l.b16 %v2062
        %v2078 = vunpack.c.l.b16 %v2072
        %v2079 = vpack.c.b16 %v2076, %v2075
        %v2080 = vpack.c.b16 %v2078, %v2077
        %v2082 = vsel %vm504, %v2079, 0
        %v2085 = vsel %vm504, %v2080, 0
        %v2088 = vsel %vm565, %v2074, 0
        %2090 = vmatprep.subr.bf16.mxu0 0
        %2091 = vmatpush1.bf16.msra.mxu0 %v2088
        %2092 = vmatprep.subr.bf16.mxu0 0
        %2093 = vmatpush1.bf16.msra.mxu0 0
        %2094 = vmatprep.subr.bf16.mxu0 0
        %2095 = vmatpush1.bf16.msra.mxu0 0
        %2096 = vmatprep.subr.bf16.mxu0 0
        %2097 = vmatpush1.bf16.msra.mxu0 0
        %2098 = vmatprep.subr.bf16.mxu0 0
        %2099 = vmatpush1.bf16.msra.mxu0 0
        %2100 = vmatprep.subr.bf16.mxu0 0
        %2101 = vmatpush1.bf16.msra.mxu0 0
        %2102 = vmatprep.subr.bf16.mxu0 0
        %2103 = vmatpush1.bf16.msra.mxu0 0
        %2104 = vmatprep.subr.bf16.mxu0 0
        %2105 = vmatpush1.bf16.msra.mxu0 0
        %2106 = vmatprep.subr.bf16.mxu0 0
        %2107 = vmatpush1.bf16.msra.mxu0 0
        %2108 = vmatprep.subr.bf16.mxu0 0
        %2109 = vmatpush1.bf16.msra.mxu0 0
        %2110 = vmatprep.subr.bf16.mxu0 0
        %2111 = vmatpush1.bf16.msra.mxu0 0
        %2112 = vmatprep.subr.bf16.mxu0 0
        %2113 = vmatpush1.bf16.msra.mxu0 0
        %2114 = vmatprep.subr.bf16.mxu0 0
        %2115 = vmatpush1.bf16.msra.mxu0 0
        %2116 = vmatprep.subr.bf16.mxu0 0
        %2117 = vmatpush1.bf16.msra.mxu0 0
        %2118 = vmatprep.subr.bf16.mxu0 0
        %2119 = vmatpush1.bf16.msra.mxu0 0
        %2120 = vmatprep.subr.bf16.mxu0 0
        %2121 = vmatpush1.bf16.msra.mxu0 0
        %2122 = vmatprep.mubr.bf16.mxu0 0
        %2123 = vmatmul.mubr.bf16.gmra.mrb[0].mxu0 %v1740
        %v2124 = vpop.f32.mrb[0].mxu0
        %v2125 = vadd.f32 0.0, %v2124
        %v2126 = vpop.f32.mrb[0].mxu0
        %v2127 = vpop.f32.mrb[0].mxu0
        %v2128 = vadd.f32 0.0, %v2127
        %v2129 = vpop.f32.mrb[0].mxu0
        %2130 = vmatprep.mubr.bf16.mxu0 0
        %2131 = vmatmul.mubr.bf16.gmra.mrb[0].mxu0 %v1743
        %v2132 = vpop.f32.mrb[0].mxu0
        %v2133 = vadd.f32 0.0, %v2132
        %v2134 = vpop.f32.mrb[0].mxu0
        %v2135 = vpop.f32.mrb[0].mxu0
        %v2136 = vadd.f32 0.0, %v2135
        %v2137 = vpop.f32.mrb[0].mxu0
        %2138 = vmatprep.mubr.bf16.mxu0 0
        %2139 = vmatmul.mubr.bf16.gmra.mrb[0].mxu0 %v1746
        %v2140 = vpop.f32.mrb[0].mxu0
        %v2141 = vadd.f32 0.0, %v2140
        %v2142 = vpop.f32.mrb[0].mxu0
        %v2143 = vpop.f32.mrb[0].mxu0
        %v2144 = vadd.f32 0.0, %v2143
        %v2145 = vpop.f32.mrb[0].mxu0
        %2146 = vmatprep.mubr.bf16.mxu0 0
        %2147 = vmatmul.mubr.bf16.gmra.mrb[0].mxu0 %v1749
        %v2148 = vpop.f32.mrb[0].mxu0
        %v2149 = vadd.f32 0.0, %v2148
        %v2150 = vpop.f32.mrb[0].mxu0
        %v2151 = vpop.f32.mrb[0].mxu0
        %v2152 = vadd.f32 0.0, %v2151
        %v2153 = vpop.f32.mrb[0].mxu0
        %2154 = vmatprep.mubr.bf16.mxu0 0
        %2155 = vmatmul.mubr.bf16.gmra.mrb[0].mxu0 %v1752
        %v2156 = vpop.f32.mrb[0].mxu0
        %v2157 = vadd.f32 0.0, %v2156
        %v2158 = vpop.f32.mrb[0].mxu0
        %v2159 = vpop.f32.mrb[0].mxu0
        %v2160 = vadd.f32 0.0, %v2159
        %v2161 = vpop.f32.mrb[0].mxu0
        %2162 = vmatprep.mubr.bf16.mxu0 0
        %2163 = vmatmul.mubr.bf16.gmra.mrb[0].mxu0 %v1755
        %v2164 = vpop.f32.mrb[0].mxu0
        %v2165 = vadd.f32 0.0, %v2164
        %v2166 = vpop.f32.mrb[0].mxu0
        %v2167 = vpop.f32.mrb[0].mxu0
        %v2168 = vadd.f32 0.0, %v2167
        %v2169 = vpop.f32.mrb[0].mxu0
        %2170 = vmatprep.mubr.bf16.mxu0 0
        %2171 = vmatmul.mubr.bf16.gmra.mrb[0].mxu0 %v1758
        %v2172 = vpop.f32.mrb[0].mxu0
        %v2173 = vadd.f32 0.0, %v2172
        %v2174 = vpop.f32.mrb[0].mxu0
        %v2175 = vpop.f32.mrb[0].mxu0
        %v2176 = vadd.f32 0.0, %v2175
        %v2177 = vpop.f32.mrb[0].mxu0
        %2178 = vmatprep.mubr.bf16.mxu0 0
        %2179 = vmatmul.mubr.bf16.gmra.mrb[0].mxu0 %v1761
        %v2180 = vpop.f32.mrb[0].mxu0
        %v2181 = vadd.f32 0.0, %v2180
        %v2182 = vpop.f32.mrb[0].mxu0
        %v2183 = vpop.f32.mrb[0].mxu0
        %v2184 = vadd.f32 0.0, %v2183
        %v2185 = vpop.f32.mrb[0].mxu0
        %2186 = vmatprep.mubr.bf16.mxu0 0
        %2187 = vmatmul.mubr.bf16.gmra.mrb[0].mxu0 %v1764
        %v2188 = vpop.f32.mrb[0].mxu0
        %v2189 = vadd.f32 0.0, %v2188
        %v2190 = vpop.f32.mrb[0].mxu0
        %v2191 = vpop.f32.mrb[0].mxu0
        %v2192 = vadd.f32 0.0, %v2191
        %v2193 = vpop.f32.mrb[0].mxu0
        %2194 = vmatprep.mubr.bf16.mxu0 0
        %2195 = vmatmul.mubr.bf16.gmra.mrb[0].mxu0 %v1767
        %v2196 = vpop.f32.mrb[0].mxu0
        %v2197 = vadd.f32 0.0, %v2196
        %v2198 = vpop.f32.mrb[0].mxu0
        %v2199 = vpop.f32.mrb[0].mxu0
        %v2200 = vadd.f32 0.0, %v2199
        %v2201 = vpop.f32.mrb[0].mxu0
        %2202 = vmatprep.mubr.bf16.mxu0 0
        %2203 = vmatmul.mubr.bf16.gmra.mrb[0].mxu0 %v1770
        %v2204 = vpop.f32.mrb[0].mxu0
        %v2205 = vadd.f32 0.0, %v2204
        %v2206 = vpop.f32.mrb[0].mxu0
        %v2207 = vpop.f32.mrb[0].mxu0
        %v2208 = vadd.f32 0.0, %v2207
        %v2209 = vpop.f32.mrb[0].mxu0
        %2210 = vmatprep.mubr.bf16.mxu0 0
        %2211 = vmatmul.mubr.bf16.gmra.mrb[0].mxu0 %v1773
        %v2212 = vpop.f32.mrb[0].mxu0
        %v2213 = vadd.f32 0.0, %v2212
        %v2214 = vpop.f32.mrb[0].mxu0
        %v2215 = vpop.f32.mrb[0].mxu0
        %v2216 = vadd.f32 0.0, %v2215
        %v2217 = vpop.f32.mrb[0].mxu0
        %2218 = vmatprep.mubr.bf16.mxu0 0
        %2219 = vmatmul.mubr.bf16.gmra.mrb[0].mxu0 %v1776
        %v2220 = vpop.f32.mrb[0].mxu0
        %v2221 = vadd.f32 0.0, %v2220
        %v2222 = vpop.f32.mrb[0].mxu0
        %v2223 = vpop.f32.mrb[0].mxu0
        %v2224 = vadd.f32 0.0, %v2223
        %v2225 = vpop.f32.mrb[0].mxu0
        %2226 = vmatprep.mubr.bf16.mxu0 0
        %2227 = vmatmul.mubr.bf16.gmra.mrb[0].mxu0 %v1779
        %v2228 = vpop.f32.mrb[0].mxu0
        %v2229 = vadd.f32 0.0, %v2228
        %v2230 = vpop.f32.mrb[0].mxu0
        %v2231 = vpop.f32.mrb[0].mxu0
        %v2232 = vadd.f32 0.0, %v2231
        %v2233 = vpop.f32.mrb[0].mxu0
        %2234 = vmatprep.mubr.bf16.mxu0 0
        %2235 = vmatmul.mubr.bf16.gmra.mrb[0].mxu0 %v1782
        %v2236 = vpop.f32.mrb[0].mxu0
        %v2237 = vadd.f32 0.0, %v2236
        %v2238 = vpop.f32.mrb[0].mxu0
        %v2239 = vpop.f32.mrb[0].mxu0
        %v2240 = vadd.f32 0.0, %v2239
        %v2241 = vpop.f32.mrb[0].mxu0
        %2242 = vmatprep.mubr.bf16.mxu0 0
        %2243 = vmatmul.mubr.bf16.gmra.mrb[0].mxu0 %v1785
        %v2244 = vpop.f32.mrb[0].mxu0
        %v2245 = vadd.f32 0.0, %v2244
        %v2246 = vpop.f32.mrb[0].mxu0
        %v2247 = vpop.f32.mrb[0].mxu0
        %v2248 = vadd.f32 0.0, %v2247
        %v2249 = vpop.f32.mrb[0].mxu0
        %2250 = vmatprep.mubr.bf16.mxu0 0
        %2251 = vmatmul.mubr.bf16.gmra.mrb[0].mxu0 %v1788
        %v2252 = vpop.f32.mrb[0].mxu0
        %v2253 = vadd.f32 0.0, %v2252
        %v2254 = vpop.f32.mrb[0].mxu0
        %v2255 = vpop.f32.mrb[0].mxu0
        %v2256 = vadd.f32 0.0, %v2255
        %v2257 = vpop.f32.mrb[0].mxu0
        %2258 = vmatprep.mubr.bf16.mxu0 0
        %2259 = vmatmul.mubr.bf16.gmra.mrb[0].mxu0 %v1791
        %v2260 = vpop.f32.mrb[0].mxu0
        %v2261 = vadd.f32 0.0, %v2260
        %v2262 = vpop.f32.mrb[0].mxu0
        %v2263 = vpop.f32.mrb[0].mxu0
        %v2264 = vadd.f32 0.0, %v2263
        %v2265 = vpop.f32.mrb[0].mxu0
        %2266 = vmatprep.mubr.bf16.mxu0 0
        %2267 = vmatmul.mubr.bf16.gmra.mrb[0].mxu0 %v2082
        %v2268 = vpop.f32.mrb[0].mxu0
        %v2269 = vadd.f32 0.0, %v2268
        %v2270 = vpop.f32.mrb[0].mxu0
        %v2271 = vpop.f32.mrb[0].mxu0
        %v2272 = vadd.f32 0.0, %v2271
        %v2273 = vpop.f32.mrb[0].mxu0
        %2274 = vmatprep.mubr.bf16.mxu0 0
        %2275 = vmatmul.mubr.bf16.gmra.mrb[0].mxu0 %v2085
        %v2276 = vpop.f32.mrb[0].mxu0
        %v2277 = vadd.f32 0.0, %v2276
        %v2278 = vpop.f32.mrb[0].mxu0
        %v2279 = vpop.f32.mrb[0].mxu0
        %v2280 = vadd.f32 0.0, %v2279
        %v2281 = vpop.f32.mrb[0].mxu0
        %2282 = vdwg.mxu0
        %v2283 = vadd.f32 %v1989, %v2125
        %v2284 = vadd.f32 %v1990, %v2128
        %v2285 = vadd.f32 %v1991, %v2133
        %v2286 = vadd.f32 %v1992, %v2136
        %v2287 = vadd.f32 %v1993, %v2141
        %v2288 = vadd.f32 %v1994, %v2144
        %v2289 = vadd.f32 %v1995, %v2149
        %v2290 = vadd.f32 %v1996, %v2152
        %v2291 = vadd.f32 %v1997, %v2157
        %v2292 = vadd.f32 %v1998, %v2160
        %v2293 = vadd.f32 %v1999, %v2165
        %v2294 = vadd.f32 %v2000, %v2168
        %v2295 = vadd.f32 %v2001, %v2173
        %v2296 = vadd.f32 %v2002, %v2176
        %v2297 = vadd.f32 %v2003, %v2181
        %v2298 = vadd.f32 %v2004, %v2184
        %v2299 = vadd.f32 %v2005, %v2189
        %v2300 = vadd.f32 %v2006, %v2192
        %v2301 = vadd.f32 %v2007, %v2197
        %v2302 = vadd.f32 %v2008, %v2200
        %v2303 = vadd.f32 %v2009, %v2205
        %v2304 = vadd.f32 %v2010, %v2208
        %v2305 = vadd.f32 %v2011, %v2213
        %v2306 = vadd.f32 %v2012, %v2216
        %v2307 = vadd.f32 %v2013, %v2221
        %v2308 = vadd.f32 %v2014, %v2224
        %v2309 = vadd.f32 %v2015, %v2229
        %v2310 = vadd.f32 %v2016, %v2232
        %v2311 = vadd.f32 %v2017, %v2237
        %v2312 = vadd.f32 %v2018, %v2240
        %v2313 = vadd.f32 %v2019, %v2245
        %v2314 = vadd.f32 %v2020, %v2248
        %v2315 = vadd.f32 %v2021, %v2253
        %v2316 = vadd.f32 %v2022, %v2256
        %v2317 = vadd.f32 %v2023, %v2261
        %v2318 = vadd.f32 %v2024, %v2264
        %v2319 = vadd.f32 %v2025, %v2269
        %v2320 = vadd.f32 %v2026, %v2272
        %v2321 = vadd.f32 %v2027, %v2277
        %v2322 = vadd.f32 %v2028, %v2280
        %v2324 = vshrl.u32 %v396, 16
        %v2326 = vrot.slane %v2324, 4
        %v2327 = vshll.u32 %v396, 16
        %v2329 = vrot.slane %v2327, 5
        %v2330 = vor.u32 %v2326, %v2329
        %v2331 = vrot.slane %v2330, 4
        %v2333 = vshll.u32 %v397, 16
        %v2335 = vrot.slane %v2333, 5
        %v2336 = vsel %vm1230, %v2331, %v2335
        %v2337 = vshrl.u32 %v397, 16
        %v2339 = vrot.slane %v2337, 4
        %v2340 = vor.u32 %v2339, %v2335
        %v2341 = vrot.slane %v2340, 4
        %v2343 = vshll.u32 %v398, 16
        %v2345 = vrot.slane %v2343, 5
        %v2346 = vsel %vm1230, %v2341, %v2345
        %v2347 = vshrl.u32 %v398, 16
        %v2349 = vrot.slane %v2347, 4
        %v2350 = vor.u32 %v2349, %v2345
        %v2351 = vrot.slane %v2350, 4
        %v2353 = vshll.u32 %v399, 16
        %v2355 = vrot.slane %v2353, 5
        %v2356 = vsel %vm1230, %v2351, %v2355
        %v2357 = vshrl.u32 %v399, 16
        %v2359 = vrot.slane %v2357, 4
        %v2360 = vor.u32 %v2359, %v2355
        %v2361 = vrot.slane %v2360, 4
        %v2363 = vshll.u32 %v400, 16
        %v2365 = vrot.slane %v2363, 5
        %v2366 = vsel %vm1230, %v2361, %v2365
        %s2367 = scalar_lea.vmem %s1, 14
        %v2368 = vld [vmem:[%s2367] sm:$0x3]
        %v2369 = vunpack.c.l.b16 %v2336
        %v2370 = vunpack.c.l.b16 %v2346
        %v2371 = vunpack.c.l.b16 %v2356
        %v2372 = vunpack.c.l.b16 %v2366
        %v2373 = vpack.c.b16 %v2370, %v2369
        %v2374 = vpack.c.b16 %v2372, %v2371
        %v2376 = vsel %vm504, %v2373, 0
        %v2379 = vsel %vm504, %v2374, 0
        %v2382 = vsel %vm565, %v2368, 0
        %2384 = vmatprep.subr.bf16.mxu0 0
        %2385 = vmatpush1.bf16.msra.mxu0 %v2382
        %2386 = vmatprep.subr.bf16.mxu0 0
        %2387 = vmatpush1.bf16.msra.mxu0 0
        %2388 = vmatprep.subr.bf16.mxu0 0
        %2389 = vmatpush1.bf16.msra.mxu0 0
        %2390 = vmatprep.subr.bf16.mxu0 0
        %2391 = vmatpush1.bf16.msra.mxu0 0
        %2392 = vmatprep.subr.bf16.mxu0 0
        %2393 = vmatpush1.bf16.msra.mxu0 0
        %2394 = vmatprep.subr.bf16.mxu0 0
        %2395 = vmatpush1.bf16.msra.mxu0 0
        %2396 = vmatprep.subr.bf16.mxu0 0
        %2397 = vmatpush1.bf16.msra.mxu0 0
        %2398 = vmatprep.subr.bf16.mxu0 0
        %2399 = vmatpush1.bf16.msra.mxu0 0
        %2400 = vmatprep.subr.bf16.mxu0 0
        %2401 = vmatpush1.bf16.msra.mxu0 0
        %2402 = vmatprep.subr.bf16.mxu0 0
        %2403 = vmatpush1.bf16.msra.mxu0 0
        %2404 = vmatprep.subr.bf16.mxu0 0
        %2405 = vmatpush1.bf16.msra.mxu0 0
        %2406 = vmatprep.subr.bf16.mxu0 0
        %2407 = vmatpush1.bf16.msra.mxu0 0
        %2408 = vmatprep.subr.bf16.mxu0 0
        %2409 = vmatpush1.bf16.msra.mxu0 0
        %2410 = vmatprep.subr.bf16.mxu0 0
        %2411 = vmatpush1.bf16.msra.mxu0 0
        %2412 = vmatprep.subr.bf16.mxu0 0
        %2413 = vmatpush1.bf16.msra.mxu0 0
        %2414 = vmatprep.subr.bf16.mxu0 0
        %2415 = vmatpush1.bf16.msra.mxu0 0
        %2416 = vmatprep.mubr.bf16.mxu0 0
        %2417 = vmatmul.mubr.bf16.gmra.mrb[0].mxu0 %v1746
        %v2418 = vpop.f32.mrb[0].mxu0
        %v2419 = vadd.f32 0.0, %v2418
        %v2420 = vpop.f32.mrb[0].mxu0
        %v2421 = vpop.f32.mrb[0].mxu0
        %v2422 = vadd.f32 0.0, %v2421
        %v2423 = vpop.f32.mrb[0].mxu0
        %2424 = vmatprep.mubr.bf16.mxu0 0
        %2425 = vmatmul.mubr.bf16.gmra.mrb[0].mxu0 %v1749
        %v2426 = vpop.f32.mrb[0].mxu0
        %v2427 = vadd.f32 0.0, %v2426
        %v2428 = vpop.f32.mrb[0].mxu0
        %v2429 = vpop.f32.mrb[0].mxu0
        %v2430 = vadd.f32 0.0, %v2429
        %v2431 = vpop.f32.mrb[0].mxu0
        %2432 = vmatprep.mubr.bf16.mxu0 0
        %2433 = vmatmul.mubr.bf16.gmra.mrb[0].mxu0 %v1752
        %v2434 = vpop.f32.mrb[0].mxu0
        %v2435 = vadd.f32 0.0, %v2434
        %v2436 = vpop.f32.mrb[0].mxu0
        %v2437 = vpop.f32.mrb[0].mxu0
        %v2438 = vadd.f32 0.0, %v2437
        %v2439 = vpop.f32.mrb[0].mxu0
        %2440 = vmatprep.mubr.bf16.mxu0 0
        %2441 = vmatmul.mubr.bf16.gmra.mrb[0].mxu0 %v1755
        %v2442 = vpop.f32.mrb[0].mxu0
        %v2443 = vadd.f32 0.0, %v2442
        %v2444 = vpop.f32.mrb[0].mxu0
        %v2445 = vpop.f32.mrb[0].mxu0
        %v2446 = vadd.f32 0.0, %v2445
        %v2447 = vpop.f32.mrb[0].mxu0
        %2448 = vmatprep.mubr.bf16.mxu0 0
        %2449 = vmatmul.mubr.bf16.gmra.mrb[0].mxu0 %v1758
        %v2450 = vpop.f32.mrb[0].mxu0
        %v2451 = vadd.f32 0.0, %v2450
        %v2452 = vpop.f32.mrb[0].mxu0
        %v2453 = vpop.f32.mrb[0].mxu0
        %v2454 = vadd.f32 0.0, %v2453
        %v2455 = vpop.f32.mrb[0].mxu0
        %2456 = vmatprep.mubr.bf16.mxu0 0
        %2457 = vmatmul.mubr.bf16.gmra.mrb[0].mxu0 %v1761
        %v2458 = vpop.f32.mrb[0].mxu0
        %v2459 = vadd.f32 0.0, %v2458
        %v2460 = vpop.f32.mrb[0].mxu0
        %v2461 = vpop.f32.mrb[0].mxu0
        %v2462 = vadd.f32 0.0, %v2461
        %v2463 = vpop.f32.mrb[0].mxu0
        %2464 = vmatprep.mubr.bf16.mxu0 0
        %2465 = vmatmul.mubr.bf16.gmra.mrb[0].mxu0 %v1764
        %v2466 = vpop.f32.mrb[0].mxu0
        %v2467 = vadd.f32 0.0, %v2466
        %v2468 = vpop.f32.mrb[0].mxu0
        %v2469 = vpop.f32.mrb[0].mxu0
        %v2470 = vadd.f32 0.0, %v2469
        %v2471 = vpop.f32.mrb[0].mxu0
        %2472 = vmatprep.mubr.bf16.mxu0 0
        %2473 = vmatmul.mubr.bf16.gmra.mrb[0].mxu0 %v1767
        %v2474 = vpop.f32.mrb[0].mxu0
        %v2475 = vadd.f32 0.0, %v2474
        %v2476 = vpop.f32.mrb[0].mxu0
        %v2477 = vpop.f32.mrb[0].mxu0
        %v2478 = vadd.f32 0.0, %v2477
        %v2479 = vpop.f32.mrb[0].mxu0
        %2480 = vmatprep.mubr.bf16.mxu0 0
        %2481 = vmatmul.mubr.bf16.gmra.mrb[0].mxu0 %v1770
        %v2482 = vpop.f32.mrb[0].mxu0
        %v2483 = vadd.f32 0.0, %v2482
        %v2484 = vpop.f32.mrb[0].mxu0
        %v2485 = vpop.f32.mrb[0].mxu0
        %v2486 = vadd.f32 0.0, %v2485
        %v2487 = vpop.f32.mrb[0].mxu0
        %2488 = vmatprep.mubr.bf16.mxu0 0
        %2489 = vmatmul.mubr.bf16.gmra.mrb[0].mxu0 %v1773
        %v2490 = vpop.f32.mrb[0].mxu0
        %v2491 = vadd.f32 0.0, %v2490
        %v2492 = vpop.f32.mrb[0].mxu0
        %v2493 = vpop.f32.mrb[0].mxu0
        %v2494 = vadd.f32 0.0, %v2493
        %v2495 = vpop.f32.mrb[0].mxu0
        %2496 = vmatprep.mubr.bf16.mxu0 0
        %2497 = vmatmul.mubr.bf16.gmra.mrb[0].mxu0 %v1776
        %v2498 = vpop.f32.mrb[0].mxu0
        %v2499 = vadd.f32 0.0, %v2498
        %v2500 = vpop.f32.mrb[0].mxu0
        %v2501 = vpop.f32.mrb[0].mxu0
        %v2502 = vadd.f32 0.0, %v2501
        %v2503 = vpop.f32.mrb[0].mxu0
        %2504 = vmatprep.mubr.bf16.mxu0 0
        %2505 = vmatmul.mubr.bf16.gmra.mrb[0].mxu0 %v1779
        %v2506 = vpop.f32.mrb[0].mxu0
        %v2507 = vadd.f32 0.0, %v2506
        %v2508 = vpop.f32.mrb[0].mxu0
        %v2509 = vpop.f32.mrb[0].mxu0
        %v2510 = vadd.f32 0.0, %v2509
        %v2511 = vpop.f32.mrb[0].mxu0
        %2512 = vmatprep.mubr.bf16.mxu0 0
        %2513 = vmatmul.mubr.bf16.gmra.mrb[0].mxu0 %v1782
        %v2514 = vpop.f32.mrb[0].mxu0
        %v2515 = vadd.f32 0.0, %v2514
        %v2516 = vpop.f32.mrb[0].mxu0
        %v2517 = vpop.f32.mrb[0].mxu0
        %v2518 = vadd.f32 0.0, %v2517
        %v2519 = vpop.f32.mrb[0].mxu0
        %2520 = vmatprep.mubr.bf16.mxu0 0
        %2521 = vmatmul.mubr.bf16.gmra.mrb[0].mxu0 %v1785
        %v2522 = vpop.f32.mrb[0].mxu0
        %v2523 = vadd.f32 0.0, %v2522
        %v2524 = vpop.f32.mrb[0].mxu0
        %v2525 = vpop.f32.mrb[0].mxu0
        %v2526 = vadd.f32 0.0, %v2525
        %v2527 = vpop.f32.mrb[0].mxu0
        %2528 = vmatprep.mubr.bf16.mxu0 0
        %2529 = vmatmul.mubr.bf16.gmra.mrb[0].mxu0 %v1788
        %v2530 = vpop.f32.mrb[0].mxu0
        %v2531 = vadd.f32 0.0, %v2530
        %v2532 = vpop.f32.mrb[0].mxu0
        %v2533 = vpop.f32.mrb[0].mxu0
        %v2534 = vadd.f32 0.0, %v2533
        %v2535 = vpop.f32.mrb[0].mxu0
        %2536 = vmatprep.mubr.bf16.mxu0 0
        %2537 = vmatmul.mubr.bf16.gmra.mrb[0].mxu0 %v1791
        %v2538 = vpop.f32.mrb[0].mxu0
        %v2539 = vadd.f32 0.0, %v2538
        %v2540 = vpop.f32.mrb[0].mxu0
        %v2541 = vpop.f32.mrb[0].mxu0
        %v2542 = vadd.f32 0.0, %v2541
        %v2543 = vpop.f32.mrb[0].mxu0
        %2544 = vmatprep.mubr.bf16.mxu0 0
        %2545 = vmatmul.mubr.bf16.gmra.mrb[0].mxu0 %v2082
        %v2546 = vpop.f32.mrb[0].mxu0
        %v2547 = vadd.f32 0.0, %v2546
        %v2548 = vpop.f32.mrb[0].mxu0
        %v2549 = vpop.f32.mrb[0].mxu0
        %v2550 = vadd.f32 0.0, %v2549
        %v2551 = vpop.f32.mrb[0].mxu0
        %2552 = vmatprep.mubr.bf16.mxu0 0
        %2553 = vmatmul.mubr.bf16.gmra.mrb[0].mxu0 %v2085
        %v2554 = vpop.f32.mrb[0].mxu0
        %v2555 = vadd.f32 0.0, %v2554
        %v2556 = vpop.f32.mrb[0].mxu0
        %v2557 = vpop.f32.mrb[0].mxu0
        %v2558 = vadd.f32 0.0, %v2557
        %v2559 = vpop.f32.mrb[0].mxu0
        %2560 = vmatprep.mubr.bf16.mxu0 0
        %2561 = vmatmul.mubr.bf16.gmra.mrb[0].mxu0 %v2376
        %v2562 = vpop.f32.mrb[0].mxu0
        %v2563 = vadd.f32 0.0, %v2562
        %v2564 = vpop.f32.mrb[0].mxu0
        %v2565 = vpop.f32.mrb[0].mxu0
        %v2566 = vadd.f32 0.0, %v2565
        %v2567 = vpop.f32.mrb[0].mxu0
        %2568 = vmatprep.mubr.bf16.mxu0 0
        %2569 = vmatmul.mubr.bf16.gmra.mrb[0].mxu0 %v2379
        %v2570 = vpop.f32.mrb[0].mxu0
        %v2571 = vadd.f32 0.0, %v2570
        %v2572 = vpop.f32.mrb[0].mxu0
        %v2573 = vpop.f32.mrb[0].mxu0
        %v2574 = vadd.f32 0.0, %v2573
        %v2575 = vpop.f32.mrb[0].mxu0
        %2576 = vdwg.mxu0
        %v2577 = vadd.f32 %v2283, %v2419
        %v2578 = vadd.f32 %v2284, %v2422
        %v2579 = vadd.f32 %v2285, %v2427
        %v2580 = vadd.f32 %v2286, %v2430
        %v2581 = vadd.f32 %v2287, %v2435
        %v2582 = vadd.f32 %v2288, %v2438
        %v2583 = vadd.f32 %v2289, %v2443
        %v2584 = vadd.f32 %v2290, %v2446
        %v2585 = vadd.f32 %v2291, %v2451
        %v2586 = vadd.f32 %v2292, %v2454
        %v2587 = vadd.f32 %v2293, %v2459
        %v2588 = vadd.f32 %v2294, %v2462
        %v2589 = vadd.f32 %v2295, %v2467
        %v2590 = vadd.f32 %v2296, %v2470
        %v2591 = vadd.f32 %v2297, %v2475
        %v2592 = vadd.f32 %v2298, %v2478
        %v2593 = vadd.f32 %v2299, %v2483
        %v2594 = vadd.f32 %v2300, %v2486
        %v2595 = vadd.f32 %v2301, %v2491
        %v2596 = vadd.f32 %v2302, %v2494
        %v2597 = vadd.f32 %v2303, %v2499
        %v2598 = vadd.f32 %v2304, %v2502
        %v2599 = vadd.f32 %v2305, %v2507
        %v2600 = vadd.f32 %v2306, %v2510
        %v2601 = vadd.f32 %v2307, %v2515
        %v2602 = vadd.f32 %v2308, %v2518
        %v2603 = vadd.f32 %v2309, %v2523
        %v2604 = vadd.f32 %v2310, %v2526
        %v2605 = vadd.f32 %v2311, %v2531
        %v2606 = vadd.f32 %v2312, %v2534
        %v2607 = vadd.f32 %v2313, %v2539
        %v2608 = vadd.f32 %v2314, %v2542
        %v2609 = vadd.f32 %v2315, %v2547
        %v2610 = vadd.f32 %v2316, %v2550
        %v2611 = vadd.f32 %v2317, %v2555
        %v2612 = vadd.f32 %v2318, %v2558
        %v2613 = vadd.f32 %v2319, %v2563
        %v2614 = vadd.f32 %v2320, %v2566
        %v2615 = vadd.f32 %v2321, %v2571
        %v2616 = vadd.f32 %v2322, %v2574
        %vm2627 = vcmask 1042432
        %vm2628 = vcmask 1046532
        %vm2629 = vmor %vm2627, %vm2628
        %v2630 = vrot.slane %v341, 5
        %v2631 = vrot.slane %v2630, 4
        %v2632 = vrot.slane %v342, 5
        %v2633 = vsel %vm2629, %v2631, %v2632
        %v2634 = vrot.slane %v2632, 4
        %v2635 = vrot.slane %v343, 5
        %v2636 = vsel %vm2629, %v2634, %v2635
        %v2637 = vrot.slane %v2635, 4
        %v2638 = vrot.slane %v344, 5
        %v2639 = vsel %vm2629, %v2637, %v2638
        %v2640 = vrot.slane %v2638, 4
        %v2641 = vrot.slane %v345, 5
        %v2642 = vsel %vm2629, %v2640, %v2641
        %v2643 = vrot.slane %v346, 5
        %v2644 = vrot.slane %v2643, 4
        %v2645 = vrot.slane %v347, 5
        %v2646 = vsel %vm2629, %v2644, %v2645
        %v2647 = vrot.slane %v2645, 4
        %v2648 = vrot.slane %v348, 5
        %v2649 = vsel %vm2629, %v2647, %v2648
        %v2650 = vrot.slane %v2648, 4
        %v2651 = vrot.slane %v349, 5
        %v2652 = vsel %vm2629, %v2650, %v2651
        %v2653 = vrot.slane %v2651, 4
        %v2654 = vrot.slane %v350, 5
        %v2655 = vsel %vm2629, %v2653, %v2654
        %v2656 = vrot.slane %v351, 5
        %v2657 = vrot.slane %v2656, 4
        %v2658 = vrot.slane %v352, 5
        %v2659 = vsel %vm2629, %v2657, %v2658
        %v2660 = vrot.slane %v2658, 4
        %v2661 = vrot.slane %v353, 5
        %v2662 = vsel %vm2629, %v2660, %v2661
        %v2663 = vrot.slane %v2661, 4
        %v2664 = vrot.slane %v354, 5
        %v2665 = vsel %vm2629, %v2663, %v2664
        %v2666 = vrot.slane %v2664, 4
        %v2667 = vrot.slane %v355, 5
        %v2668 = vsel %vm2629, %v2666, %v2667
        %v2669 = vrot.slane %v356, 5
        %v2670 = vrot.slane %v2669, 4
        %v2671 = vrot.slane %v357, 5
        %v2672 = vsel %vm2629, %v2670, %v2671
        %v2673 = vrot.slane %v2671, 4
        %v2674 = vrot.slane %v358, 5
        %v2675 = vsel %vm2629, %v2673, %v2674
        %v2676 = vrot.slane %v2674, 4
        %v2677 = vrot.slane %v359, 5
        %v2678 = vsel %vm2629, %v2676, %v2677
        %v2679 = vrot.slane %v2677, 4
        %v2680 = vrot.slane %v360, 5
        %v2681 = vsel %vm2629, %v2679, %v2680
        %v2682 = vrot.slane %v361, 5
        %v2683 = vrot.slane %v2682, 4
        %v2684 = vrot.slane %v362, 5
        %v2685 = vsel %vm2629, %v2683, %v2684
        %v2686 = vrot.slane %v2684, 4
        %v2687 = vrot.slane %v363, 5
        %v2688 = vsel %vm2629, %v2686, %v2687
        %v2689 = vrot.slane %v2687, 4
        %v2690 = vrot.slane %v364, 5
        %v2691 = vsel %vm2629, %v2689, %v2690
        %v2692 = vrot.slane %v2690, 4
        %v2693 = vrot.slane %v365, 5
        %v2694 = vsel %vm2629, %v2692, %v2693
        %v2695 = vrot.slane %v366, 5
        %v2696 = vrot.slane %v2695, 4
        %v2697 = vrot.slane %v367, 5
        %v2698 = vsel %vm2629, %v2696, %v2697
        %v2699 = vrot.slane %v2697, 4
        %v2700 = vrot.slane %v368, 5
        %v2701 = vsel %vm2629, %v2699, %v2700
        %v2702 = vrot.slane %v2700, 4
        %v2703 = vrot.slane %v369, 5
        %v2704 = vsel %vm2629, %v2702, %v2703
        %v2705 = vrot.slane %v2703, 4
        %v2706 = vrot.slane %v370, 5
        %v2707 = vsel %vm2629, %v2705, %v2706
        %v2708 = vrot.slane %v371, 5
        %v2709 = vrot.slane %v2708, 4
        %v2710 = vrot.slane %v372, 5
        %v2711 = vsel %vm2629, %v2709, %v2710
        %v2712 = vrot.slane %v2710, 4
        %v2713 = vrot.slane %v373, 5
        %v2714 = vsel %vm2629, %v2712, %v2713
        %v2715 = vrot.slane %v2713, 4
        %v2716 = vrot.slane %v374, 5
        %v2717 = vsel %vm2629, %v2715, %v2716
        %v2718 = vrot.slane %v2716, 4
        %v2719 = vrot.slane %v375, 5
        %v2720 = vsel %vm2629, %v2718, %v2719
        %v2721 = vrot.slane %v376, 5
        %v2722 = vrot.slane %v2721, 4
        %v2723 = vrot.slane %v377, 5
        %v2724 = vsel %vm2629, %v2722, %v2723
        %v2725 = vrot.slane %v2723, 4
        %v2726 = vrot.slane %v378, 5
        %v2727 = vsel %vm2629, %v2725, %v2726
        %v2728 = vrot.slane %v2726, 4
        %v2729 = vrot.slane %v379, 5
        %v2730 = vsel %vm2629, %v2728, %v2729
        %v2731 = vrot.slane %v2729, 4
        %v2732 = vrot.slane %v380, 5
        %v2733 = vsel %vm2629, %v2731, %v2732
        %v2734 = vrot.slane %v381, 5
        %v2735 = vrot.slane %v2734, 4
        %v2736 = vrot.slane %v382, 5
        %v2737 = vsel %vm2629, %v2735, %v2736
        %v2738 = vrot.slane %v2736, 4
        %v2739 = vrot.slane %v383, 5
        %v2740 = vsel %vm2629, %v2738, %v2739
        %v2741 = vrot.slane %v2739, 4
        %v2742 = vrot.slane %v384, 5
        %v2743 = vsel %vm2629, %v2741, %v2742
        %v2744 = vrot.slane %v2742, 4
        %v2745 = vrot.slane %v385, 5
        %v2746 = vsel %vm2629, %v2744, %v2745
        %v2747 = vrot.slane %v386, 5
        %v2748 = vrot.slane %v2747, 4
        %v2749 = vrot.slane %v387, 5
        %v2750 = vsel %vm2629, %v2748, %v2749
        %v2751 = vrot.slane %v2749, 4
        %v2752 = vrot.slane %v388, 5
        %v2753 = vsel %vm2629, %v2751, %v2752
        %v2754 = vrot.slane %v2752, 4
        %v2755 = vrot.slane %v389, 5
        %v2756 = vsel %vm2629, %v2754, %v2755
        %v2757 = vrot.slane %v2755, 4
        %v2758 = vrot.slane %v390, 5
        %v2759 = vsel %vm2629, %v2757, %v2758
        %s2760 = scalar_lea.vmem %s1, 4
        %v2761 = vld [vmem:[%s2760] sm:$0x3]
        %v2762 = vunpack.c.l.b16 %v2633
        %v2763 = vunpack.c.l.b16 %v2636
        %v2764 = vunpack.c.l.b16 %v2639
        %v2765 = vunpack.c.l.b16 %v2642
        %v2766 = vunpack.c.l.b16 %v2646
        %v2767 = vunpack.c.l.b16 %v2649
        %v2768 = vunpack.c.l.b16 %v2652
        %v2769 = vunpack.c.l.b16 %v2655
        %v2770 = vunpack.c.l.b16 %v2659
        %v2771 = vunpack.c.l.b16 %v2662
        %v2772 = vunpack.c.l.b16 %v2665
        %v2773 = vunpack.c.l.b16 %v2668
        %v2774 = vunpack.c.l.b16 %v2672
        %v2775 = vunpack.c.l.b16 %v2675
        %v2776 = vunpack.c.l.b16 %v2678
        %v2777 = vunpack.c.l.b16 %v2681
        %v2778 = vunpack.c.l.b16 %v2685
        %v2779 = vunpack.c.l.b16 %v2688
        %v2780 = vunpack.c.l.b16 %v2691
        %v2781 = vunpack.c.l.b16 %v2694
        %v2782 = vunpack.c.l.b16 %v2698
        %v2783 = vunpack.c.l.b16 %v2701
        %v2784 = vunpack.c.l.b16 %v2704
        %v2785 = vunpack.c.l.b16 %v2707
        %v2786 = vunpack.c.l.b16 %v2711
        %v2787 = vunpack.c.l.b16 %v2714
        %v2788 = vunpack.c.l.b16 %v2717
        %v2789 = vunpack.c.l.b16 %v2720
        %v2790 = vunpack.c.l.b16 %v2724
        %v2791 = vunpack.c.l.b16 %v2727
        %v2792 = vunpack.c.l.b16 %v2730
        %v2793 = vunpack.c.l.b16 %v2733
        %v2794 = vunpack.c.l.b16 %v2737
        %v2795 = vunpack.c.l.b16 %v2740
        %v2796 = vunpack.c.l.b16 %v2743
        %v2797 = vunpack.c.l.b16 %v2746
        %v2798 = vunpack.c.l.b16 %v2750
        %v2799 = vunpack.c.l.b16 %v2753
        %v2800 = vunpack.c.l.b16 %v2756
        %v2801 = vunpack.c.l.b16 %v2759
        %v2802 = vpack.c.b16 %v2763, %v2762
        %v2803 = vpack.c.b16 %v2765, %v2764
        %v2804 = vpack.c.b16 %v2767, %v2766
        %v2805 = vpack.c.b16 %v2769, %v2768
        %v2806 = vpack.c.b16 %v2771, %v2770
        %v2807 = vpack.c.b16 %v2773, %v2772
        %v2808 = vpack.c.b16 %v2775, %v2774
        %v2809 = vpack.c.b16 %v2777, %v2776
        %v2810 = vpack.c.b16 %v2779, %v2778
        %v2811 = vpack.c.b16 %v2781, %v2780
        %v2812 = vpack.c.b16 %v2783, %v2782
        %v2813 = vpack.c.b16 %v2785, %v2784
        %v2814 = vpack.c.b16 %v2787, %v2786
        %v2815 = vpack.c.b16 %v2789, %v2788
        %v2816 = vpack.c.b16 %v2791, %v2790
        %v2817 = vpack.c.b16 %v2793, %v2792
        %v2818 = vpack.c.b16 %v2795, %v2794
        %v2819 = vpack.c.b16 %v2797, %v2796
        %v2820 = vpack.c.b16 %v2799, %v2798
        %v2821 = vpack.c.b16 %v2801, %v2800
        %v2823 = vsel %vm504, %v2802, 0
        %v2826 = vsel %vm504, %v2803, 0
        %v2829 = vsel %vm504, %v2804, 0
        %v2832 = vsel %vm504, %v2805, 0
        %v2835 = vsel %vm504, %v2806, 0
        %v2838 = vsel %vm504, %v2807, 0
        %v2841 = vsel %vm504, %v2808, 0
        %v2844 = vsel %vm504, %v2809, 0
        %v2847 = vsel %vm504, %v2810, 0
        %v2850 = vsel %vm504, %v2811, 0
        %v2853 = vsel %vm504, %v2812, 0
        %v2856 = vsel %vm504, %v2813, 0
        %v2859 = vsel %vm504, %v2814, 0
        %v2862 = vsel %vm504, %v2815, 0
        %v2865 = vsel %vm504, %v2816, 0
        %v2868 = vsel %vm504, %v2817, 0
        %v2871 = vsel %vm504, %v2818, 0
        %v2874 = vsel %vm504, %v2819, 0
        %v2877 = vsel %vm504, %v2820, 0
        %v2880 = vsel %vm504, %v2821, 0
        %v2883 = vsel %vm565, %v2761, 0
        %2885 = vmatprep.subr.bf16.mxu0 0
        %2886 = vmatpush1.bf16.msra.mxu0 %v2883
        %2887 = vmatprep.subr.bf16.mxu0 0
        %2888 = vmatpush1.bf16.msra.mxu0 0
        %2889 = vmatprep.subr.bf16.mxu0 0
        %2890 = vmatpush1.bf16.msra.mxu0 0
        %2891 = vmatprep.subr.bf16.mxu0 0
        %2892 = vmatpush1.bf16.msra.mxu0 0
        %2893 = vmatprep.subr.bf16.mxu0 0
        %2894 = vmatpush1.bf16.msra.mxu0 0
        %2895 = vmatprep.subr.bf16.mxu0 0
        %2896 = vmatpush1.bf16.msra.mxu0 0
        %2897 = vmatprep.subr.bf16.mxu0 0
        %2898 = vmatpush1.bf16.msra.mxu0 0
        %2899 = vmatprep.subr.bf16.mxu0 0
        %2900 = vmatpush1.bf16.msra.mxu0 0
        %2901 = vmatprep.subr.bf16.mxu0 0
        %2902 = vmatpush1.bf16.msra.mxu0 0
        %2903 = vmatprep.subr.bf16.mxu0 0
        %2904 = vmatpush1.bf16.msra.mxu0 0
        %2905 = vmatprep.subr.bf16.mxu0 0
        %2906 = vmatpush1.bf16.msra.mxu0 0
        %2907 = vmatprep.subr.bf16.mxu0 0
        %2908 = vmatpush1.bf16.msra.mxu0 0
        %2909 = vmatprep.subr.bf16.mxu0 0
        %2910 = vmatpush1.bf16.msra.mxu0 0
        %2911 = vmatprep.subr.bf16.mxu0 0
        %2912 = vmatpush1.bf16.msra.mxu0 0
        %2913 = vmatprep.subr.bf16.mxu0 0
        %2914 = vmatpush1.bf16.msra.mxu0 0
        %2915 = vmatprep.subr.bf16.mxu0 0
        %2916 = vmatpush1.bf16.msra.mxu0 0
        %2917 = vmatprep.mubr.bf16.mxu0 0
        %2918 = vmatmul.mubr.bf16.gmra.mrb[0].mxu0 %v2823
        %v2919 = vpop.f32.mrb[0].mxu0
        %v2920 = vadd.f32 0.0, %v2919
        %v2921 = vpop.f32.mrb[0].mxu0
        %v2922 = vpop.f32.mrb[0].mxu0
        %v2923 = vadd.f32 0.0, %v2922
        %v2924 = vpop.f32.mrb[0].mxu0
        %2925 = vmatprep.mubr.bf16.mxu0 0
        %2926 = vmatmul.mubr.bf16.gmra.mrb[0].mxu0 %v2826
        %v2927 = vpop.f32.mrb[0].mxu0
        %v2928 = vadd.f32 0.0, %v2927
        %v2929 = vpop.f32.mrb[0].mxu0
        %v2930 = vpop.f32.mrb[0].mxu0
        %v2931 = vadd.f32 0.0, %v2930
        %v2932 = vpop.f32.mrb[0].mxu0
        %2933 = vmatprep.mubr.bf16.mxu0 0
        %2934 = vmatmul.mubr.bf16.gmra.mrb[0].mxu0 %v2829
        %v2935 = vpop.f32.mrb[0].mxu0
        %v2936 = vadd.f32 0.0, %v2935
        %v2937 = vpop.f32.mrb[0].mxu0
        %v2938 = vpop.f32.mrb[0].mxu0
        %v2939 = vadd.f32 0.0, %v2938
        %v2940 = vpop.f32.mrb[0].mxu0
        %2941 = vmatprep.mubr.bf16.mxu0 0
        %2942 = vmatmul.mubr.bf16.gmra.mrb[0].mxu0 %v2832
        %v2943 = vpop.f32.mrb[0].mxu0
        %v2944 = vadd.f32 0.0, %v2943
        %v2945 = vpop.f32.mrb[0].mxu0
        %v2946 = vpop.f32.mrb[0].mxu0
        %v2947 = vadd.f32 0.0, %v2946
        %v2948 = vpop.f32.mrb[0].mxu0
        %2949 = vmatprep.mubr.bf16.mxu0 0
        %2950 = vmatmul.mubr.bf16.gmra.mrb[0].mxu0 %v2835
        %v2951 = vpop.f32.mrb[0].mxu0
        %v2952 = vadd.f32 0.0, %v2951
        %v2953 = vpop.f32.mrb[0].mxu0
        %v2954 = vpop.f32.mrb[0].mxu0
        %v2955 = vadd.f32 0.0, %v2954
        %v2956 = vpop.f32.mrb[0].mxu0
        %2957 = vmatprep.mubr.bf16.mxu0 0
        %2958 = vmatmul.mubr.bf16.gmra.mrb[0].mxu0 %v2838
        %v2959 = vpop.f32.mrb[0].mxu0
        %v2960 = vadd.f32 0.0, %v2959
        %v2961 = vpop.f32.mrb[0].mxu0
        %v2962 = vpop.f32.mrb[0].mxu0
        %v2963 = vadd.f32 0.0, %v2962
        %v2964 = vpop.f32.mrb[0].mxu0
        %2965 = vmatprep.mubr.bf16.mxu0 0
        %2966 = vmatmul.mubr.bf16.gmra.mrb[0].mxu0 %v2841
        %v2967 = vpop.f32.mrb[0].mxu0
        %v2968 = vadd.f32 0.0, %v2967
        %v2969 = vpop.f32.mrb[0].mxu0
        %v2970 = vpop.f32.mrb[0].mxu0
        %v2971 = vadd.f32 0.0, %v2970
        %v2972 = vpop.f32.mrb[0].mxu0
        %2973 = vmatprep.mubr.bf16.mxu0 0
        %2974 = vmatmul.mubr.bf16.gmra.mrb[0].mxu0 %v2844
        %v2975 = vpop.f32.mrb[0].mxu0
        %v2976 = vadd.f32 0.0, %v2975
        %v2977 = vpop.f32.mrb[0].mxu0
        %v2978 = vpop.f32.mrb[0].mxu0
        %v2979 = vadd.f32 0.0, %v2978
        %v2980 = vpop.f32.mrb[0].mxu0
        %2981 = vmatprep.mubr.bf16.mxu0 0
        %2982 = vmatmul.mubr.bf16.gmra.mrb[0].mxu0 %v2847
        %v2983 = vpop.f32.mrb[0].mxu0
        %v2984 = vadd.f32 0.0, %v2983
        %v2985 = vpop.f32.mrb[0].mxu0
        %v2986 = vpop.f32.mrb[0].mxu0
        %v2987 = vadd.f32 0.0, %v2986
        %v2988 = vpop.f32.mrb[0].mxu0
        %2989 = vmatprep.mubr.bf16.mxu0 0
        %2990 = vmatmul.mubr.bf16.gmra.mrb[0].mxu0 %v2850
        %v2991 = vpop.f32.mrb[0].mxu0
        %v2992 = vadd.f32 0.0, %v2991
        %v2993 = vpop.f32.mrb[0].mxu0
        %v2994 = vpop.f32.mrb[0].mxu0
        %v2995 = vadd.f32 0.0, %v2994
        %v2996 = vpop.f32.mrb[0].mxu0
        %2997 = vmatprep.mubr.bf16.mxu0 0
        %2998 = vmatmul.mubr.bf16.gmra.mrb[0].mxu0 %v2853
        %v2999 = vpop.f32.mrb[0].mxu0
        %v3000 = vadd.f32 0.0, %v2999
        %v3001 = vpop.f32.mrb[0].mxu0
        %v3002 = vpop.f32.mrb[0].mxu0
        %v3003 = vadd.f32 0.0, %v3002
        %v3004 = vpop.f32.mrb[0].mxu0
        %3005 = vmatprep.mubr.bf16.mxu0 0
        %3006 = vmatmul.mubr.bf16.gmra.mrb[0].mxu0 %v2856
        %v3007 = vpop.f32.mrb[0].mxu0
        %v3008 = vadd.f32 0.0, %v3007
        %v3009 = vpop.f32.mrb[0].mxu0
        %v3010 = vpop.f32.mrb[0].mxu0
        %v3011 = vadd.f32 0.0, %v3010
        %v3012 = vpop.f32.mrb[0].mxu0
        %3013 = vmatprep.mubr.bf16.mxu0 0
        %3014 = vmatmul.mubr.bf16.gmra.mrb[0].mxu0 %v2859
        %v3015 = vpop.f32.mrb[0].mxu0
        %v3016 = vadd.f32 0.0, %v3015
        %v3017 = vpop.f32.mrb[0].mxu0
        %v3018 = vpop.f32.mrb[0].mxu0
        %v3019 = vadd.f32 0.0, %v3018
        %v3020 = vpop.f32.mrb[0].mxu0
        %3021 = vmatprep.mubr.bf16.mxu0 0
        %3022 = vmatmul.mubr.bf16.gmra.mrb[0].mxu0 %v2862
        %v3023 = vpop.f32.mrb[0].mxu0
        %v3024 = vadd.f32 0.0, %v3023
        %v3025 = vpop.f32.mrb[0].mxu0
        %v3026 = vpop.f32.mrb[0].mxu0
        %v3027 = vadd.f32 0.0, %v3026
        %v3028 = vpop.f32.mrb[0].mxu0
        %3029 = vmatprep.mubr.bf16.mxu0 0
        %3030 = vmatmul.mubr.bf16.gmra.mrb[0].mxu0 %v2865
        %v3031 = vpop.f32.mrb[0].mxu0
        %v3032 = vadd.f32 0.0, %v3031
        %v3033 = vpop.f32.mrb[0].mxu0
        %v3034 = vpop.f32.mrb[0].mxu0
        %v3035 = vadd.f32 0.0, %v3034
        %v3036 = vpop.f32.mrb[0].mxu0
        %3037 = vmatprep.mubr.bf16.mxu0 0
        %3038 = vmatmul.mubr.bf16.gmra.mrb[0].mxu0 %v2868
        %v3039 = vpop.f32.mrb[0].mxu0
        %v3040 = vadd.f32 0.0, %v3039
        %v3041 = vpop.f32.mrb[0].mxu0
        %v3042 = vpop.f32.mrb[0].mxu0
        %v3043 = vadd.f32 0.0, %v3042
        %v3044 = vpop.f32.mrb[0].mxu0
        %3045 = vmatprep.mubr.bf16.mxu0 0
        %3046 = vmatmul.mubr.bf16.gmra.mrb[0].mxu0 %v2871
        %v3047 = vpop.f32.mrb[0].mxu0
        %v3048 = vadd.f32 0.0, %v3047
        %v3049 = vpop.f32.mrb[0].mxu0
        %v3050 = vpop.f32.mrb[0].mxu0
        %v3051 = vadd.f32 0.0, %v3050
        %v3052 = vpop.f32.mrb[0].mxu0
        %3053 = vmatprep.mubr.bf16.mxu0 0
        %3054 = vmatmul.mubr.bf16.gmra.mrb[0].mxu0 %v2874
        %v3055 = vpop.f32.mrb[0].mxu0
        %v3056 = vadd.f32 0.0, %v3055
        %v3057 = vpop.f32.mrb[0].mxu0
        %v3058 = vpop.f32.mrb[0].mxu0
        %v3059 = vadd.f32 0.0, %v3058
        %v3060 = vpop.f32.mrb[0].mxu0
        %3061 = vmatprep.mubr.bf16.mxu0 0
        %3062 = vmatmul.mubr.bf16.gmra.mrb[0].mxu0 %v2877
        %v3063 = vpop.f32.mrb[0].mxu0
        %v3064 = vadd.f32 0.0, %v3063
        %v3065 = vpop.f32.mrb[0].mxu0
        %v3066 = vpop.f32.mrb[0].mxu0
        %v3067 = vadd.f32 0.0, %v3066
        %v3068 = vpop.f32.mrb[0].mxu0
        %3069 = vmatprep.mubr.bf16.mxu0 0
        %3070 = vmatmul.mubr.bf16.gmra.mrb[0].mxu0 %v2880
        %v3071 = vpop.f32.mrb[0].mxu0
        %v3072 = vadd.f32 0.0, %v3071
        %v3073 = vpop.f32.mrb[0].mxu0
        %v3074 = vpop.f32.mrb[0].mxu0
        %v3075 = vadd.f32 0.0, %v3074
        %v3076 = vpop.f32.mrb[0].mxu0
        %3077 = vdwg.mxu0
        %v3078 = vadd.f32 %v2577, %v2920
        %v3079 = vadd.f32 %v2578, %v2923
        %v3080 = vadd.f32 %v2579, %v2928
        %v3081 = vadd.f32 %v2580, %v2931
        %v3082 = vadd.f32 %v2581, %v2936
        %v3083 = vadd.f32 %v2582, %v2939
        %v3084 = vadd.f32 %v2583, %v2944
        %v3085 = vadd.f32 %v2584, %v2947
        %v3086 = vadd.f32 %v2585, %v2952
        %v3087 = vadd.f32 %v2586, %v2955
        %v3088 = vadd.f32 %v2587, %v2960
        %v3089 = vadd.f32 %v2588, %v2963
        %v3090 = vadd.f32 %v2589, %v2968
        %v3091 = vadd.f32 %v2590, %v2971
        %v3092 = vadd.f32 %v2591, %v2976
        %v3093 = vadd.f32 %v2592, %v2979
        %v3094 = vadd.f32 %v2593, %v2984
        %v3095 = vadd.f32 %v2594, %v2987
        %v3096 = vadd.f32 %v2595, %v2992
        %v3097 = vadd.f32 %v2596, %v2995
        %v3098 = vadd.f32 %v2597, %v3000
        %v3099 = vadd.f32 %v2598, %v3003
        %v3100 = vadd.f32 %v2599, %v3008
        %v3101 = vadd.f32 %v2600, %v3011
        %v3102 = vadd.f32 %v2601, %v3016
        %v3103 = vadd.f32 %v2602, %v3019
        %v3104 = vadd.f32 %v2603, %v3024
        %v3105 = vadd.f32 %v2604, %v3027
        %v3106 = vadd.f32 %v2605, %v3032
        %v3107 = vadd.f32 %v2606, %v3035
        %v3108 = vadd.f32 %v2607, %v3040
        %v3109 = vadd.f32 %v2608, %v3043
        %v3110 = vadd.f32 %v2609, %v3048
        %v3111 = vadd.f32 %v2610, %v3051
        %v3112 = vadd.f32 %v2611, %v3056
        %v3113 = vadd.f32 %v2612, %v3059
        %v3114 = vadd.f32 %v2613, %v3064
        %v3115 = vadd.f32 %v2614, %v3067
        %v3116 = vadd.f32 %v2615, %v3072
        %v3117 = vadd.f32 %v2616, %v3075
        %v3119 = vrot.slane %v391, 5
        %v3120 = vrot.slane %v3119, 4
        %v3121 = vrot.slane %v392, 5
        %v3122 = vsel %vm2629, %v3120, %v3121
        %v3123 = vrot.slane %v3121, 4
        %v3124 = vrot.slane %v393, 5
        %v3125 = vsel %vm2629, %v3123, %v3124
        %v3126 = vrot.slane %v3124, 4
        %v3127 = vrot.slane %v394, 5
        %v3128 = vsel %vm2629, %v3126, %v3127
        %v3129 = vrot.slane %v3127, 4
        %v3130 = vrot.slane %v395, 5
        %v3131 = vsel %vm2629, %v3129, %v3130
        %s3132 = scalar_lea.vmem %s1, 10
        %v3133 = vld [vmem:[%s3132] sm:$0x3]
        %v3134 = vunpack.c.l.b16 %v3122
        %v3135 = vunpack.c.l.b16 %v3125
        %v3136 = vunpack.c.l.b16 %v3128
        %v3137 = vunpack.c.l.b16 %v3131
        %v3138 = vpack.c.b16 %v3135, %v3134
        %v3139 = vpack.c.b16 %v3137, %v3136
        %v3141 = vsel %vm504, %v3138, 0
        %v3144 = vsel %vm504, %v3139, 0
        %v3147 = vsel %vm565, %v3133, 0
        %3149 = vmatprep.subr.bf16.mxu0 0
        %3150 = vmatpush1.bf16.msra.mxu0 %v3147
        %3151 = vmatprep.subr.bf16.mxu0 0
        %3152 = vmatpush1.bf16.msra.mxu0 0
        %3153 = vmatprep.subr.bf16.mxu0 0
        %3154 = vmatpush1.bf16.msra.mxu0 0
        %3155 = vmatprep.subr.bf16.mxu0 0
        %3156 = vmatpush1.bf16.msra.mxu0 0
        %3157 = vmatprep.subr.bf16.mxu0 0
        %3158 = vmatpush1.bf16.msra.mxu0 0
        %3159 = vmatprep.subr.bf16.mxu0 0
        %3160 = vmatpush1.bf16.msra.mxu0 0
        %3161 = vmatprep.subr.bf16.mxu0 0
        %3162 = vmatpush1.bf16.msra.mxu0 0
        %3163 = vmatprep.subr.bf16.mxu0 0
        %3164 = vmatpush1.bf16.msra.mxu0 0
        %3165 = vmatprep.subr.bf16.mxu0 0
        %3166 = vmatpush1.bf16.msra.mxu0 0
        %3167 = vmatprep.subr.bf16.mxu0 0
        %3168 = vmatpush1.bf16.msra.mxu0 0
        %3169 = vmatprep.subr.bf16.mxu0 0
        %3170 = vmatpush1.bf16.msra.mxu0 0
        %3171 = vmatprep.subr.bf16.mxu0 0
        %3172 = vmatpush1.bf16.msra.mxu0 0
        %3173 = vmatprep.subr.bf16.mxu0 0
        %3174 = vmatpush1.bf16.msra.mxu0 0
        %3175 = vmatprep.subr.bf16.mxu0 0
        %3176 = vmatpush1.bf16.msra.mxu0 0
        %3177 = vmatprep.subr.bf16.mxu0 0
        %3178 = vmatpush1.bf16.msra.mxu0 0
        %3179 = vmatprep.subr.bf16.mxu0 0
        %3180 = vmatpush1.bf16.msra.mxu0 0
        %3181 = vmatprep.mubr.bf16.mxu0 0
        %3182 = vmatmul.mubr.bf16.gmra.mrb[0].mxu0 %v2829
        %v3183 = vpop.f32.mrb[0].mxu0
        %v3184 = vadd.f32 0.0, %v3183
        %v3185 = vpop.f32.mrb[0].mxu0
        %v3186 = vpop.f32.mrb[0].mxu0
        %v3187 = vadd.f32 0.0, %v3186
        %v3188 = vpop.f32.mrb[0].mxu0
        %3189 = vmatprep.mubr.bf16.mxu0 0
        %3190 = vmatmul.mubr.bf16.gmra.mrb[0].mxu0 %v2832
        %v3191 = vpop.f32.mrb[0].mxu0
        %v3192 = vadd.f32 0.0, %v3191
        %v3193 = vpop.f32.mrb[0].mxu0
        %v3194 = vpop.f32.mrb[0].mxu0
        %v3195 = vadd.f32 0.0, %v3194
        %v3196 = vpop.f32.mrb[0].mxu0
        %3197 = vmatprep.mubr.bf16.mxu0 0
        %3198 = vmatmul.mubr.bf16.gmra.mrb[0].mxu0 %v2835
        %v3199 = vpop.f32.mrb[0].mxu0
        %v3200 = vadd.f32 0.0, %v3199
        %v3201 = vpop.f32.mrb[0].mxu0
        %v3202 = vpop.f32.mrb[0].mxu0
        %v3203 = vadd.f32 0.0, %v3202
        %v3204 = vpop.f32.mrb[0].mxu0
        %3205 = vmatprep.mubr.bf16.mxu0 0
        %3206 = vmatmul.mubr.bf16.gmra.mrb[0].mxu0 %v2838
        %v3207 = vpop.f32.mrb[0].mxu0
        %v3208 = vadd.f32 0.0, %v3207
        %v3209 = vpop.f32.mrb[0].mxu0
        %v3210 = vpop.f32.mrb[0].mxu0
        %v3211 = vadd.f32 0.0, %v3210
        %v3212 = vpop.f32.mrb[0].mxu0
        %3213 = vmatprep.mubr.bf16.mxu0 0
        %3214 = vmatmul.mubr.bf16.gmra.mrb[0].mxu0 %v2841
        %v3215 = vpop.f32.mrb[0].mxu0
        %v3216 = vadd.f32 0.0, %v3215
        %v3217 = vpop.f32.mrb[0].mxu0
        %v3218 = vpop.f32.mrb[0].mxu0
        %v3219 = vadd.f32 0.0, %v3218
        %v3220 = vpop.f32.mrb[0].mxu0
        %3221 = vmatprep.mubr.bf16.mxu0 0
        %3222 = vmatmul.mubr.bf16.gmra.mrb[0].mxu0 %v2844
        %v3223 = vpop.f32.mrb[0].mxu0
        %v3224 = vadd.f32 0.0, %v3223
        %v3225 = vpop.f32.mrb[0].mxu0
        %v3226 = vpop.f32.mrb[0].mxu0
        %v3227 = vadd.f32 0.0, %v3226
        %v3228 = vpop.f32.mrb[0].mxu0
        %3229 = vmatprep.mubr.bf16.mxu0 0
        %3230 = vmatmul.mubr.bf16.gmra.mrb[0].mxu0 %v2847
        %v3231 = vpop.f32.mrb[0].mxu0
        %v3232 = vadd.f32 0.0, %v3231
        %v3233 = vpop.f32.mrb[0].mxu0
        %v3234 = vpop.f32.mrb[0].mxu0
        %v3235 = vadd.f32 0.0, %v3234
        %v3236 = vpop.f32.mrb[0].mxu0
        %3237 = vmatprep.mubr.bf16.mxu0 0
        %3238 = vmatmul.mubr.bf16.gmra.mrb[0].mxu0 %v2850
        %v3239 = vpop.f32.mrb[0].mxu0
        %v3240 = vadd.f32 0.0, %v3239
        %v3241 = vpop.f32.mrb[0].mxu0
        %v3242 = vpop.f32.mrb[0].mxu0
        %v3243 = vadd.f32 0.0, %v3242
        %v3244 = vpop.f32.mrb[0].mxu0
        %3245 = vmatprep.mubr.bf16.mxu0 0
        %3246 = vmatmul.mubr.bf16.gmra.mrb[0].mxu0 %v2853
        %v3247 = vpop.f32.mrb[0].mxu0
        %v3248 = vadd.f32 0.0, %v3247
        %v3249 = vpop.f32.mrb[0].mxu0
        %v3250 = vpop.f32.mrb[0].mxu0
        %v3251 = vadd.f32 0.0, %v3250
        %v3252 = vpop.f32.mrb[0].mxu0
        %3253 = vmatprep.mubr.bf16.mxu0 0
        %3254 = vmatmul.mubr.bf16.gmra.mrb[0].mxu0 %v2856
        %v3255 = vpop.f32.mrb[0].mxu0
        %v3256 = vadd.f32 0.0, %v3255
        %v3257 = vpop.f32.mrb[0].mxu0
        %v3258 = vpop.f32.mrb[0].mxu0
        %v3259 = vadd.f32 0.0, %v3258
        %v3260 = vpop.f32.mrb[0].mxu0
        %3261 = vmatprep.mubr.bf16.mxu0 0
        %3262 = vmatmul.mubr.bf16.gmra.mrb[0].mxu0 %v2859
        %v3263 = vpop.f32.mrb[0].mxu0
        %v3264 = vadd.f32 0.0, %v3263
        %v3265 = vpop.f32.mrb[0].mxu0
        %v3266 = vpop.f32.mrb[0].mxu0
        %v3267 = vadd.f32 0.0, %v3266
        %v3268 = vpop.f32.mrb[0].mxu0
        %3269 = vmatprep.mubr.bf16.mxu0 0
        %3270 = vmatmul.mubr.bf16.gmra.mrb[0].mxu0 %v2862
        %v3271 = vpop.f32.mrb[0].mxu0
        %v3272 = vadd.f32 0.0, %v3271
        %v3273 = vpop.f32.mrb[0].mxu0
        %v3274 = vpop.f32.mrb[0].mxu0
        %v3275 = vadd.f32 0.0, %v3274
        %v3276 = vpop.f32.mrb[0].mxu0
        %3277 = vmatprep.mubr.bf16.mxu0 0
        %3278 = vmatmul.mubr.bf16.gmra.mrb[0].mxu0 %v2865
        %v3279 = vpop.f32.mrb[0].mxu0
        %v3280 = vadd.f32 0.0, %v3279
        %v3281 = vpop.f32.mrb[0].mxu0
        %v3282 = vpop.f32.mrb[0].mxu0
        %v3283 = vadd.f32 0.0, %v3282
        %v3284 = vpop.f32.mrb[0].mxu0
        %3285 = vmatprep.mubr.bf16.mxu0 0
        %3286 = vmatmul.mubr.bf16.gmra.mrb[0].mxu0 %v2868
        %v3287 = vpop.f32.mrb[0].mxu0
        %v3288 = vadd.f32 0.0, %v3287
        %v3289 = vpop.f32.mrb[0].mxu0
        %v3290 = vpop.f32.mrb[0].mxu0
        %v3291 = vadd.f32 0.0, %v3290
        %v3292 = vpop.f32.mrb[0].mxu0
        %3293 = vmatprep.mubr.bf16.mxu0 0
        %3294 = vmatmul.mubr.bf16.gmra.mrb[0].mxu0 %v2871
        %v3295 = vpop.f32.mrb[0].mxu0
        %v3296 = vadd.f32 0.0, %v3295
        %v3297 = vpop.f32.mrb[0].mxu0
        %v3298 = vpop.f32.mrb[0].mxu0
        %v3299 = vadd.f32 0.0, %v3298
        %v3300 = vpop.f32.mrb[0].mxu0
        %3301 = vmatprep.mubr.bf16.mxu0 0
        %3302 = vmatmul.mubr.bf16.gmra.mrb[0].mxu0 %v2874
        %v3303 = vpop.f32.mrb[0].mxu0
        %v3304 = vadd.f32 0.0, %v3303
        %v3305 = vpop.f32.mrb[0].mxu0
        %v3306 = vpop.f32.mrb[0].mxu0
        %v3307 = vadd.f32 0.0, %v3306
        %v3308 = vpop.f32.mrb[0].mxu0
        %3309 = vmatprep.mubr.bf16.mxu0 0
        %3310 = vmatmul.mubr.bf16.gmra.mrb[0].mxu0 %v2877
        %v3311 = vpop.f32.mrb[0].mxu0
        %v3312 = vadd.f32 0.0, %v3311
        %v3313 = vpop.f32.mrb[0].mxu0
        %v3314 = vpop.f32.mrb[0].mxu0
        %v3315 = vadd.f32 0.0, %v3314
        %v3316 = vpop.f32.mrb[0].mxu0
        %3317 = vmatprep.mubr.bf16.mxu0 0
        %3318 = vmatmul.mubr.bf16.gmra.mrb[0].mxu0 %v2880
        %v3319 = vpop.f32.mrb[0].mxu0
        %v3320 = vadd.f32 0.0, %v3319
        %v3321 = vpop.f32.mrb[0].mxu0
        %v3322 = vpop.f32.mrb[0].mxu0
        %v3323 = vadd.f32 0.0, %v3322
        %v3324 = vpop.f32.mrb[0].mxu0
        %3325 = vmatprep.mubr.bf16.mxu0 0
        %3326 = vmatmul.mubr.bf16.gmra.mrb[0].mxu0 %v3141
        %v3327 = vpop.f32.mrb[0].mxu0
        %v3328 = vadd.f32 0.0, %v3327
        %v3329 = vpop.f32.mrb[0].mxu0
        %v3330 = vpop.f32.mrb[0].mxu0
        %v3331 = vadd.f32 0.0, %v3330
        %v3332 = vpop.f32.mrb[0].mxu0
        %3333 = vmatprep.mubr.bf16.mxu0 0
        %3334 = vmatmul.mubr.bf16.gmra.mrb[0].mxu0 %v3144
        %v3335 = vpop.f32.mrb[0].mxu0
        %v3336 = vadd.f32 0.0, %v3335
        %v3337 = vpop.f32.mrb[0].mxu0
        %v3338 = vpop.f32.mrb[0].mxu0
        %v3339 = vadd.f32 0.0, %v3338
        %v3340 = vpop.f32.mrb[0].mxu0
        %3341 = vdwg.mxu0
        %v3342 = vadd.f32 %v3078, %v3184
        %v3343 = vadd.f32 %v3079, %v3187
        %v3344 = vadd.f32 %v3080, %v3192
        %v3345 = vadd.f32 %v3081, %v3195
        %v3346 = vadd.f32 %v3082, %v3200
        %v3347 = vadd.f32 %v3083, %v3203
        %v3348 = vadd.f32 %v3084, %v3208
        %v3349 = vadd.f32 %v3085, %v3211
        %v3350 = vadd.f32 %v3086, %v3216
        %v3351 = vadd.f32 %v3087, %v3219
        %v3352 = vadd.f32 %v3088, %v3224
        %v3353 = vadd.f32 %v3089, %v3227
        %v3354 = vadd.f32 %v3090, %v3232
        %v3355 = vadd.f32 %v3091, %v3235
        %v3356 = vadd.f32 %v3092, %v3240
        %v3357 = vadd.f32 %v3093, %v3243
        %v3358 = vadd.f32 %v3094, %v3248
        %v3359 = vadd.f32 %v3095, %v3251
        %v3360 = vadd.f32 %v3096, %v3256
        %v3361 = vadd.f32 %v3097, %v3259
        %v3362 = vadd.f32 %v3098, %v3264
        %v3363 = vadd.f32 %v3099, %v3267
        %v3364 = vadd.f32 %v3100, %v3272
        %v3365 = vadd.f32 %v3101, %v3275
        %v3366 = vadd.f32 %v3102, %v3280
        %v3367 = vadd.f32 %v3103, %v3283
        %v3368 = vadd.f32 %v3104, %v3288
        %v3369 = vadd.f32 %v3105, %v3291
        %v3370 = vadd.f32 %v3106, %v3296
        %v3371 = vadd.f32 %v3107, %v3299
        %v3372 = vadd.f32 %v3108, %v3304
        %v3373 = vadd.f32 %v3109, %v3307
        %v3374 = vadd.f32 %v3110, %v3312
        %v3375 = vadd.f32 %v3111, %v3315
        %v3376 = vadd.f32 %v3112, %v3320
        %v3377 = vadd.f32 %v3113, %v3323
        %v3378 = vadd.f32 %v3114, %v3328
        %v3379 = vadd.f32 %v3115, %v3331
        %v3380 = vadd.f32 %v3116, %v3336
        %v3381 = vadd.f32 %v3117, %v3339
        %v3383 = vrot.slane %v396, 5
        %v3384 = vrot.slane %v3383, 4
        %v3385 = vrot.slane %v397, 5
        %v3386 = vsel %vm2629, %v3384, %v3385
        %v3387 = vrot.slane %v3385, 4
        %v3388 = vrot.slane %v398, 5
        %v3389 = vsel %vm2629, %v3387, %v3388
        %v3390 = vrot.slane %v3388, 4
        %v3391 = vrot.slane %v399, 5
        %v3392 = vsel %vm2629, %v3390, %v3391
        %v3393 = vrot.slane %v3391, 4
        %v3394 = vrot.slane %v400, 5
        %v3395 = vsel %vm2629, %v3393, %v3394
        %s3396 = scalar_lea.vmem %s1, 16
        %v3397 = vld [vmem:[%s3396] sm:$0x3]
        %v3398 = vunpack.c.l.b16 %v3386
        %v3399 = vunpack.c.l.b16 %v3389
        %v3400 = vunpack.c.l.b16 %v3392
        %v3401 = vunpack.c.l.b16 %v3395
        %v3402 = vpack.c.b16 %v3399, %v3398
        %v3403 = vpack.c.b16 %v3401, %v3400
        %v3405 = vsel %vm504, %v3402, 0
        %v3408 = vsel %vm504, %v3403, 0
        %v3411 = vsel %vm565, %v3397, 0
        %3413 = vmatprep.subr.bf16.mxu0 0
        %3414 = vmatpush1.bf16.msra.mxu0 %v3411
        %3415 = vmatprep.subr.bf16.mxu0 0
        %3416 = vmatpush1.bf16.msra.mxu0 0
        %3417 = vmatprep.subr.bf16.mxu0 0
        %3418 = vmatpush1.bf16.msra.mxu0 0
        %3419 = vmatprep.subr.bf16.mxu0 0
        %3420 = vmatpush1.bf16.msra.mxu0 0
        %3421 = vmatprep.subr.bf16.mxu0 0
        %3422 = vmatpush1.bf16.msra.mxu0 0
        %3423 = vmatprep.subr.bf16.mxu0 0
        %3424 = vmatpush1.bf16.msra.mxu0 0
        %3425 = vmatprep.subr.bf16.mxu0 0
        %3426 = vmatpush1.bf16.msra.mxu0 0
        %3427 = vmatprep.subr.bf16.mxu0 0
        %3428 = vmatpush1.bf16.msra.mxu0 0
        %3429 = vmatprep.subr.bf16.mxu0 0
        %3430 = vmatpush1.bf16.msra.mxu0 0
        %3431 = vmatprep.subr.bf16.mxu0 0
        %3432 = vmatpush1.bf16.msra.mxu0 0
        %3433 = vmatprep.subr.bf16.mxu0 0
        %3434 = vmatpush1.bf16.msra.mxu0 0
        %3435 = vmatprep.subr.bf16.mxu0 0
        %3436 = vmatpush1.bf16.msra.mxu0 0
        %3437 = vmatprep.subr.bf16.mxu0 0
        %3438 = vmatpush1.bf16.msra.mxu0 0
        %3439 = vmatprep.subr.bf16.mxu0 0
        %3440 = vmatpush1.bf16.msra.mxu0 0
        %3441 = vmatprep.subr.bf16.mxu0 0
        %3442 = vmatpush1.bf16.msra.mxu0 0
        %3443 = vmatprep.subr.bf16.mxu0 0
        %3444 = vmatpush1.bf16.msra.mxu0 0
        %3445 = vmatprep.mubr.bf16.mxu0 0
        %3446 = vmatmul.mubr.bf16.gmra.mrb[0].mxu0 %v2835
        %v3447 = vpop.f32.mrb[0].mxu0
        %v3448 = vadd.f32 0.0, %v3447
        %v3449 = vpop.f32.mrb[0].mxu0
        %v3450 = vpop.f32.mrb[0].mxu0
        %v3451 = vadd.f32 0.0, %v3450
        %v3452 = vpop.f32.mrb[0].mxu0
        %3453 = vmatprep.mubr.bf16.mxu0 0
        %3454 = vmatmul.mubr.bf16.gmra.mrb[0].mxu0 %v2838
        %v3455 = vpop.f32.mrb[0].mxu0
        %v3456 = vadd.f32 0.0, %v3455
        %v3457 = vpop.f32.mrb[0].mxu0
        %v3458 = vpop.f32.mrb[0].mxu0
        %v3459 = vadd.f32 0.0, %v3458
        %v3460 = vpop.f32.mrb[0].mxu0
        %3461 = vmatprep.mubr.bf16.mxu0 0
        %3462 = vmatmul.mubr.bf16.gmra.mrb[0].mxu0 %v2841
        %v3463 = vpop.f32.mrb[0].mxu0
        %v3464 = vadd.f32 0.0, %v3463
        %v3465 = vpop.f32.mrb[0].mxu0
        %v3466 = vpop.f32.mrb[0].mxu0
        %v3467 = vadd.f32 0.0, %v3466
        %v3468 = vpop.f32.mrb[0].mxu0
        %3469 = vmatprep.mubr.bf16.mxu0 0
        %3470 = vmatmul.mubr.bf16.gmra.mrb[0].mxu0 %v2844
        %v3471 = vpop.f32.mrb[0].mxu0
        %v3472 = vadd.f32 0.0, %v3471
        %v3473 = vpop.f32.mrb[0].mxu0
        %v3474 = vpop.f32.mrb[0].mxu0
        %v3475 = vadd.f32 0.0, %v3474
        %v3476 = vpop.f32.mrb[0].mxu0
        %3477 = vmatprep.mubr.bf16.mxu0 0
        %3478 = vmatmul.mubr.bf16.gmra.mrb[0].mxu0 %v2847
        %v3479 = vpop.f32.mrb[0].mxu0
        %v3480 = vadd.f32 0.0, %v3479
        %v3481 = vpop.f32.mrb[0].mxu0
        %v3482 = vpop.f32.mrb[0].mxu0
        %v3483 = vadd.f32 0.0, %v3482
        %v3484 = vpop.f32.mrb[0].mxu0
        %3485 = vmatprep.mubr.bf16.mxu0 0
        %3486 = vmatmul.mubr.bf16.gmra.mrb[0].mxu0 %v2850
        %v3487 = vpop.f32.mrb[0].mxu0
        %v3488 = vadd.f32 0.0, %v3487
        %v3489 = vpop.f32.mrb[0].mxu0
        %v3490 = vpop.f32.mrb[0].mxu0
        %v3491 = vadd.f32 0.0, %v3490
        %v3492 = vpop.f32.mrb[0].mxu0
        %3493 = vmatprep.mubr.bf16.mxu0 0
        %3494 = vmatmul.mubr.bf16.gmra.mrb[0].mxu0 %v2853
        %v3495 = vpop.f32.mrb[0].mxu0
        %v3496 = vadd.f32 0.0, %v3495
        %v3497 = vpop.f32.mrb[0].mxu0
        %v3498 = vpop.f32.mrb[0].mxu0
        %v3499 = vadd.f32 0.0, %v3498
        %v3500 = vpop.f32.mrb[0].mxu0
        %3501 = vmatprep.mubr.bf16.mxu0 0
        %3502 = vmatmul.mubr.bf16.gmra.mrb[0].mxu0 %v2856
        %v3503 = vpop.f32.mrb[0].mxu0
        %v3504 = vadd.f32 0.0, %v3503
        %v3505 = vpop.f32.mrb[0].mxu0
        %v3506 = vpop.f32.mrb[0].mxu0
        %v3507 = vadd.f32 0.0, %v3506
        %v3508 = vpop.f32.mrb[0].mxu0
        %3509 = vmatprep.mubr.bf16.mxu0 0
        %3510 = vmatmul.mubr.bf16.gmra.mrb[0].mxu0 %v2859
        %v3511 = vpop.f32.mrb[0].mxu0
        %v3512 = vadd.f32 0.0, %v3511
        %v3513 = vpop.f32.mrb[0].mxu0
        %v3514 = vpop.f32.mrb[0].mxu0
        %v3515 = vadd.f32 0.0, %v3514
        %v3516 = vpop.f32.mrb[0].mxu0
        %3517 = vmatprep.mubr.bf16.mxu0 0
        %3518 = vmatmul.mubr.bf16.gmra.mrb[0].mxu0 %v2862
        %v3519 = vpop.f32.mrb[0].mxu0
        %v3520 = vadd.f32 0.0, %v3519
        %v3521 = vpop.f32.mrb[0].mxu0
        %v3522 = vpop.f32.mrb[0].mxu0
        %v3523 = vadd.f32 0.0, %v3522
        %v3524 = vpop.f32.mrb[0].mxu0
        %3525 = vmatprep.mubr.bf16.mxu0 0
        %3526 = vmatmul.mubr.bf16.gmra.mrb[0].mxu0 %v2865
        %v3527 = vpop.f32.mrb[0].mxu0
        %v3528 = vadd.f32 0.0, %v3527
        %v3529 = vpop.f32.mrb[0].mxu0
        %v3530 = vpop.f32.mrb[0].mxu0
        %v3531 = vadd.f32 0.0, %v3530
        %v3532 = vpop.f32.mrb[0].mxu0
        %3533 = vmatprep.mubr.bf16.mxu0 0
        %3534 = vmatmul.mubr.bf16.gmra.mrb[0].mxu0 %v2868
        %v3535 = vpop.f32.mrb[0].mxu0
        %v3536 = vadd.f32 0.0, %v3535
        %v3537 = vpop.f32.mrb[0].mxu0
        %v3538 = vpop.f32.mrb[0].mxu0
        %v3539 = vadd.f32 0.0, %v3538
        %v3540 = vpop.f32.mrb[0].mxu0
        %3541 = vmatprep.mubr.bf16.mxu0 0
        %3542 = vmatmul.mubr.bf16.gmra.mrb[0].mxu0 %v2871
        %v3543 = vpop.f32.mrb[0].mxu0
        %v3544 = vadd.f32 0.0, %v3543
        %v3545 = vpop.f32.mrb[0].mxu0
        %v3546 = vpop.f32.mrb[0].mxu0
        %v3547 = vadd.f32 0.0, %v3546
        %v3548 = vpop.f32.mrb[0].mxu0
        %3549 = vmatprep.mubr.bf16.mxu0 0
        %3550 = vmatmul.mubr.bf16.gmra.mrb[0].mxu0 %v2874
        %v3551 = vpop.f32.mrb[0].mxu0
        %v3552 = vadd.f32 0.0, %v3551
        %v3553 = vpop.f32.mrb[0].mxu0
        %v3554 = vpop.f32.mrb[0].mxu0
        %v3555 = vadd.f32 0.0, %v3554
        %v3556 = vpop.f32.mrb[0].mxu0
        %3557 = vmatprep.mubr.bf16.mxu0 0
        %3558 = vmatmul.mubr.bf16.gmra.mrb[0].mxu0 %v2877
        %v3559 = vpop.f32.mrb[0].mxu0
        %v3560 = vadd.f32 0.0, %v3559
        %v3561 = vpop.f32.mrb[0].mxu0
        %v3562 = vpop.f32.mrb[0].mxu0
        %v3563 = vadd.f32 0.0, %v3562
        %v3564 = vpop.f32.mrb[0].mxu0
        %3565 = vmatprep.mubr.bf16.mxu0 0
        %3566 = vmatmul.mubr.bf16.gmra.mrb[0].mxu0 %v2880
        %v3567 = vpop.f32.mrb[0].mxu0
        %v3568 = vadd.f32 0.0, %v3567
        %v3569 = vpop.f32.mrb[0].mxu0
        %v3570 = vpop.f32.mrb[0].mxu0
        %v3571 = vadd.f32 0.0, %v3570
        %v3572 = vpop.f32.mrb[0].mxu0
        %3573 = vmatprep.mubr.bf16.mxu0 0
        %3574 = vmatmul.mubr.bf16.gmra.mrb[0].mxu0 %v3141
        %v3575 = vpop.f32.mrb[0].mxu0
        %v3576 = vadd.f32 0.0, %v3575
        %v3577 = vpop.f32.mrb[0].mxu0
        %v3578 = vpop.f32.mrb[0].mxu0
        %v3579 = vadd.f32 0.0, %v3578
        %v3580 = vpop.f32.mrb[0].mxu0
        %3581 = vmatprep.mubr.bf16.mxu0 0
        %3582 = vmatmul.mubr.bf16.gmra.mrb[0].mxu0 %v3144
        %v3583 = vpop.f32.mrb[0].mxu0
        %v3584 = vadd.f32 0.0, %v3583
        %v3585 = vpop.f32.mrb[0].mxu0
        %v3586 = vpop.f32.mrb[0].mxu0
        %v3587 = vadd.f32 0.0, %v3586
        %v3588 = vpop.f32.mrb[0].mxu0
        %3589 = vmatprep.mubr.bf16.mxu0 0
        %3590 = vmatmul.mubr.bf16.gmra.mrb[0].mxu0 %v3405
        %v3591 = vpop.f32.mrb[0].mxu0
        %v3592 = vadd.f32 0.0, %v3591
        %v3593 = vpop.f32.mrb[0].mxu0
        %v3594 = vpop.f32.mrb[0].mxu0
        %v3595 = vadd.f32 0.0, %v3594
        %v3596 = vpop.f32.mrb[0].mxu0
        %3597 = vmatprep.mubr.bf16.mxu0 0
        %3598 = vmatmul.mubr.bf16.gmra.mrb[0].mxu0 %v3408
        %v3599 = vpop.f32.mrb[0].mxu0
        %v3600 = vadd.f32 0.0, %v3599
        %v3601 = vpop.f32.mrb[0].mxu0
        %v3602 = vpop.f32.mrb[0].mxu0
        %v3603 = vadd.f32 0.0, %v3602
        %v3604 = vpop.f32.mrb[0].mxu0
        %3605 = vdwg.mxu0
        %v3606 = vadd.f32 %v3342, %v3448
        %v3607 = vadd.f32 %v3343, %v3451
        %v3608 = vadd.f32 %v3344, %v3456
        %v3609 = vadd.f32 %v3345, %v3459
        %v3610 = vadd.f32 %v3346, %v3464
        %v3611 = vadd.f32 %v3347, %v3467
        %v3612 = vadd.f32 %v3348, %v3472
        %v3613 = vadd.f32 %v3349, %v3475
        %v3614 = vadd.f32 %v3350, %v3480
        %v3615 = vadd.f32 %v3351, %v3483
        %v3616 = vadd.f32 %v3352, %v3488
        %v3617 = vadd.f32 %v3353, %v3491
        %v3618 = vadd.f32 %v3354, %v3496
        %v3619 = vadd.f32 %v3355, %v3499
        %v3620 = vadd.f32 %v3356, %v3504
        %v3621 = vadd.f32 %v3357, %v3507
        %v3622 = vadd.f32 %v3358, %v3512
        %v3623 = vadd.f32 %v3359, %v3515
        %v3624 = vadd.f32 %v3360, %v3520
        %v3625 = vadd.f32 %v3361, %v3523
        %v3626 = vadd.f32 %v3362, %v3528
        %v3627 = vadd.f32 %v3363, %v3531
        %v3628 = vadd.f32 %v3364, %v3536
        %v3629 = vadd.f32 %v3365, %v3539
        %v3630 = vadd.f32 %v3366, %v3544
        %v3631 = vadd.f32 %v3367, %v3547
        %v3632 = vadd.f32 %v3368, %v3552
        %v3633 = vadd.f32 %v3369, %v3555
        %v3634 = vadd.f32 %v3370, %v3560
        %v3635 = vadd.f32 %v3371, %v3563
        %v3636 = vadd.f32 %v3372, %v3568
        %v3637 = vadd.f32 %v3373, %v3571
        %v3638 = vadd.f32 %v3374, %v3576
        %v3639 = vadd.f32 %v3375, %v3579
        %v3640 = vadd.f32 %v3376, %v3584
        %v3641 = vadd.f32 %v3377, %v3587
        %v3642 = vadd.f32 %v3378, %v3592
        %v3643 = vadd.f32 %v3379, %v3595
        %v3644 = vadd.f32 %v3380, %v3600
        %v3645 = vadd.f32 %v3381, %v3603
        %v3646 = vld [vmem:[%s2] sm:$0x1]
        %v3648 = vlaneseq
        %v3649 = vshrl.u32 %v3648, 7
        %v3650 = vsub.s32 0, %v3649
        %v3651 = vrot.slane %v3646, %v3650
        %v3653 = vadd.f32 %v3606, %v3651
        %v3654 = vadd.f32 %v3607, %v3651
        %v3655 = vadd.f32 %v3608, %v3651
        %v3656 = vadd.f32 %v3609, %v3651
        %v3657 = vadd.f32 %v3610, %v3651
        %v3658 = vadd.f32 %v3611, %v3651
        %v3659 = vadd.f32 %v3612, %v3651
        %v3660 = vadd.f32 %v3613, %v3651
        %v3661 = vadd.f32 %v3614, %v3651
        %v3662 = vadd.f32 %v3615, %v3651
        %v3663 = vadd.f32 %v3616, %v3651
        %v3664 = vadd.f32 %v3617, %v3651
        %v3665 = vadd.f32 %v3618, %v3651
        %v3666 = vadd.f32 %v3619, %v3651
        %v3667 = vadd.f32 %v3620, %v3651
        %v3668 = vadd.f32 %v3621, %v3651
        %v3669 = vadd.f32 %v3622, %v3651
        %v3670 = vadd.f32 %v3623, %v3651
        %v3671 = vadd.f32 %v3624, %v3651
        %v3672 = vadd.f32 %v3625, %v3651
        %v3673 = vadd.f32 %v3626, %v3651
        %v3674 = vadd.f32 %v3627, %v3651
        %v3675 = vadd.f32 %v3628, %v3651
        %v3676 = vadd.f32 %v3629, %v3651
        %v3677 = vadd.f32 %v3630, %v3651
        %v3678 = vadd.f32 %v3631, %v3651
        %v3679 = vadd.f32 %v3632, %v3651
        %v3680 = vadd.f32 %v3633, %v3651
        %v3681 = vadd.f32 %v3634, %v3651
        %v3682 = vadd.f32 %v3635, %v3651
        %v3683 = vadd.f32 %v3636, %v3651
        %v3684 = vadd.f32 %v3637, %v3651
        %v3685 = vadd.f32 %v3638, %v3651
        %v3686 = vadd.f32 %v3639, %v3651
        %v3687 = vadd.f32 %v3640, %v3651
        %v3688 = vadd.f32 %v3641, %v3651
        %v3689 = vadd.f32 %v3642, %v3651
        %v3690 = vadd.f32 %v3643, %v3651
        %v3691 = vadd.f32 %v3644, %v3651
        %v3692 = vadd.f32 %v3645, %v3651
        %v3693 = vlaneseq
        %v3694 = vshrl.u32 %v3693, 7
        %v3695 = vadd.s32 %v3694, 8
        %v3696 = vadd.s32 %v3694, 16
        %v3697 = vadd.s32 %v3694, 24
        %s3698 = ssub.s32 1, %s280
        %v3699 = vstv %s3698
        %vm3700 = vcmp.le.s32.totalorder %v3699, 0
        %vm3701 = vcmp.le.s32.totalorder %v3699, 1
        %vm3702 = vcmp.le.s32.totalorder %v3699, 2
        %vm3703 = vcmp.le.s32.totalorder %v3699, 3
        %vm3704 = vcmp.le.s32.totalorder %v3699, 4
        %vm3705 = vcmp.le.s32.totalorder %v3699, 5
        %vm3706 = vcmp.le.s32.totalorder %v3699, 6
        %vm3707 = vcmp.le.s32.totalorder %v3699, 7
        %vm3708 = vcmp.le.s32.totalorder %v3699, 8
        %vm3709 = vcmp.le.s32.totalorder %v3699, 9
        %s3710 = ssub.s32 16, %s280
        %v3711 = vstv %s3710
        %vm3712 = vcmp.ge.s32.totalorder %v3711, 0
        %vm3713 = vcmp.ge.s32.totalorder %v3711, 1
        %vm3714 = vcmp.ge.s32.totalorder %v3711, 2
        %vm3715 = vcmp.ge.s32.totalorder %v3711, 3
        %vm3716 = vcmp.ge.s32.totalorder %v3711, 4
        %vm3717 = vcmp.ge.s32.totalorder %v3711, 5
        %vm3718 = vcmp.ge.s32.totalorder %v3711, 6
        %vm3719 = vcmp.ge.s32.totalorder %v3711, 7
        %vm3720 = vcmp.ge.s32.totalorder %v3711, 8
        %vm3721 = vcmp.ge.s32.totalorder %v3711, 9
        %vm3722 = vmand %vm3700, %vm3712
        %vm3723 = vmand %vm3701, %vm3713
        %vm3724 = vmand %vm3702, %vm3714
        %vm3725 = vmand %vm3703, %vm3715
        %vm3726 = vmand %vm3704, %vm3716
        %vm3727 = vmand %vm3705, %vm3717
        %vm3728 = vmand %vm3706, %vm3718
        %vm3729 = vmand %vm3707, %vm3719
        %vm3730 = vmand %vm3708, %vm3720
        %vm3731 = vmand %vm3709, %vm3721
        %vm3732 = vcmp.ge.s32.totalorder %v3694, 1
        %vm3733 = vcmp.ge.s32.totalorder %v3695, 1
        %vm3734 = vcmp.ge.s32.totalorder %v3696, 1
        %vm3735 = vcmp.ge.s32.totalorder %v3697, 1
        %vm3736 = vmand %vm3722, %vm3732
        %vm3737 = vmand %vm3722, %vm3733
        %vm3738 = vmand %vm3722, %vm3734
        %vm3739 = vmand %vm3722, %vm3735
        %vm3740 = vmand %vm3723, %vm3732
        %vm3741 = vmand %vm3723, %vm3733
        %vm3742 = vmand %vm3723, %vm3734
        %vm3743 = vmand %vm3723, %vm3735
        %vm3744 = vmand %vm3724, %vm3732
        %vm3745 = vmand %vm3724, %vm3733
        %vm3746 = vmand %vm3724, %vm3734
        %vm3747 = vmand %vm3724, %vm3735
        %vm3748 = vmand %vm3725, %vm3732
        %vm3749 = vmand %vm3725, %vm3733
        %vm3750 = vmand %vm3725, %vm3734
        %vm3751 = vmand %vm3725, %vm3735
        %vm3752 = vmand %vm3726, %vm3732
        %vm3753 = vmand %vm3726, %vm3733
        %vm3754 = vmand %vm3726, %vm3734
        %vm3755 = vmand %vm3726, %vm3735
        %vm3756 = vmand %vm3727, %vm3732
        %vm3757 = vmand %vm3727, %vm3733
        %vm3758 = vmand %vm3727, %vm3734
        %vm3759 = vmand %vm3727, %vm3735
        %vm3760 = vmand %vm3728, %vm3732
        %vm3761 = vmand %vm3728, %vm3733
        %vm3762 = vmand %vm3728, %vm3734
        %vm3763 = vmand %vm3728, %vm3735
        %vm3764 = vmand %vm3729, %vm3732
        %vm3765 = vmand %vm3729, %vm3733
        %vm3766 = vmand %vm3729, %vm3734
        %vm3767 = vmand %vm3729, %vm3735
        %vm3768 = vmand %vm3730, %vm3732
        %vm3769 = vmand %vm3730, %vm3733
        %vm3770 = vmand %vm3730, %vm3734
        %vm3771 = vmand %vm3730, %vm3735
        %vm3772 = vmand %vm3731, %vm3732
        %vm3773 = vmand %vm3731, %vm3733
        %vm3774 = vmand %vm3731, %vm3734
        %vm3775 = vmand %vm3731, %vm3735
        %vm3776 = vcmp.le.s32.totalorder %v3694, 16
        %vm3777 = vcmp.le.s32.totalorder %v3695, 16
        %vm3778 = vcmp.le.s32.totalorder %v3696, 16
        %vm3779 = vcmp.le.s32.totalorder %v3697, 16
        %vm3780 = vmand %vm3736, %vm3776
        %vm3781 = vmand %vm3737, %vm3777
        %vm3782 = vmand %vm3738, %vm3778
        %vm3783 = vmand %vm3739, %vm3779
        %vm3784 = vmand %vm3740, %vm3776
        %vm3785 = vmand %vm3741, %vm3777
        %vm3786 = vmand %vm3742, %vm3778
        %vm3787 = vmand %vm3743, %vm3779
        %vm3788 = vmand %vm3744, %vm3776
        %vm3789 = vmand %vm3745, %vm3777
        %vm3790 = vmand %vm3746, %vm3778
        %vm3791 = vmand %vm3747, %vm3779
        %vm3792 = vmand %vm3748, %vm3776
        %vm3793 = vmand %vm3749, %vm3777
        %vm3794 = vmand %vm3750, %vm3778
        %vm3795 = vmand %vm3751, %vm3779
        %vm3796 = vmand %vm3752, %vm3776
        %vm3797 = vmand %vm3753, %vm3777
        %vm3798 = vmand %vm3754, %vm3778
        %vm3799 = vmand %vm3755, %vm3779
        %vm3800 = vmand %vm3756, %vm3776
        %vm3801 = vmand %vm3757, %vm3777
        %vm3802 = vmand %vm3758, %vm3778
        %vm3803 = vmand %vm3759, %vm3779
        %vm3804 = vmand %vm3760, %vm3776
        %vm3805 = vmand %vm3761, %vm3777
        %vm3806 = vmand %vm3762, %vm3778
        %vm3807 = vmand %vm3763, %vm3779
        %vm3808 = vmand %vm3764, %vm3776
        %vm3809 = vmand %vm3765, %vm3777
        %vm3810 = vmand %vm3766, %vm3778
        %vm3811 = vmand %vm3767, %vm3779
        %vm3812 = vmand %vm3768, %vm3776
        %vm3813 = vmand %vm3769, %vm3777
        %vm3814 = vmand %vm3770, %vm3778
        %vm3815 = vmand %vm3771, %vm3779
        %vm3816 = vmand %vm3772, %vm3776
        %vm3817 = vmand %vm3773, %vm3777
        %vm3818 = vmand %vm3774, %vm3778
        %vm3819 = vmand %vm3775, %vm3779
        %v3820 = vmax.f32 %v3653, 0.0
        %v3821 = vmax.f32 %v3654, 0.0
        %v3822 = vmax.f32 %v3655, 0.0
        %v3823 = vmax.f32 %v3656, 0.0
        %v3824 = vmax.f32 %v3657, 0.0
        %v3825 = vmax.f32 %v3658, 0.0
        %v3826 = vmax.f32 %v3659, 0.0
        %v3827 = vmax.f32 %v3660, 0.0
        %v3828 = vmax.f32 %v3661, 0.0
        %v3829 = vmax.f32 %v3662, 0.0
        %v3830 = vmax.f32 %v3663, 0.0
        %v3831 = vmax.f32 %v3664, 0.0
        %v3832 = vmax.f32 %v3665, 0.0
        %v3833 = vmax.f32 %v3666, 0.0
        %v3834 = vmax.f32 %v3667, 0.0
        %v3835 = vmax.f32 %v3668, 0.0
        %v3836 = vmax.f32 %v3669, 0.0
        %v3837 = vmax.f32 %v3670, 0.0
        %v3838 = vmax.f32 %v3671, 0.0
        %v3839 = vmax.f32 %v3672, 0.0
        %v3840 = vmax.f32 %v3673, 0.0
        %v3841 = vmax.f32 %v3674, 0.0
        %v3842 = vmax.f32 %v3675, 0.0
        %v3843 = vmax.f32 %v3676, 0.0
        %v3844 = vmax.f32 %v3677, 0.0
        %v3845 = vmax.f32 %v3678, 0.0
        %v3846 = vmax.f32 %v3679, 0.0
        %v3847 = vmax.f32 %v3680, 0.0
        %v3848 = vmax.f32 %v3681, 0.0
        %v3849 = vmax.f32 %v3682, 0.0
        %v3850 = vmax.f32 %v3683, 0.0
        %v3851 = vmax.f32 %v3684, 0.0
        %v3852 = vmax.f32 %v3685, 0.0
        %v3853 = vmax.f32 %v3686, 0.0
        %v3854 = vmax.f32 %v3687, 0.0
        %v3855 = vmax.f32 %v3688, 0.0
        %v3856 = vmax.f32 %v3689, 0.0
        %v3857 = vmax.f32 %v3690, 0.0
        %v3858 = vmax.f32 %v3691, 0.0
        %v3859 = vmax.f32 %v3692, 0.0
        %v3860 = vsel %vm3780, 1, 0
        %v3861 = vsel %vm3781, 1, 0
        %v3862 = vsel %vm3782, 1, 0
        %v3863 = vsel %vm3783, 1, 0
        %v3864 = vsel %vm3784, 1, 0
        %v3865 = vsel %vm3785, 1, 0
        %v3866 = vsel %vm3786, 1, 0
        %v3867 = vsel %vm3787, 1, 0
        %v3868 = vsel %vm3788, 1, 0
        %v3869 = vsel %vm3789, 1, 0
        %v3870 = vsel %vm3790, 1, 0
        %v3871 = vsel %vm3791, 1, 0
        %v3872 = vsel %vm3792, 1, 0
        %v3873 = vsel %vm3793, 1, 0
        %v3874 = vsel %vm3794, 1, 0
        %v3875 = vsel %vm3795, 1, 0
        %v3876 = vsel %vm3796, 1, 0
        %v3877 = vsel %vm3797, 1, 0
        %v3878 = vsel %vm3798, 1, 0
        %v3879 = vsel %vm3799, 1, 0
        %v3880 = vsel %vm3800, 1, 0
        %v3881 = vsel %vm3801, 1, 0
        %v3882 = vsel %vm3802, 1, 0
        %v3883 = vsel %vm3803, 1, 0
        %v3884 = vsel %vm3804, 1, 0
        %v3885 = vsel %vm3805, 1, 0
        %v3886 = vsel %vm3806, 1, 0
        %v3887 = vsel %vm3807, 1, 0
        %v3888 = vsel %vm3808, 1, 0
        %v3889 = vsel %vm3809, 1, 0
        %v3890 = vsel %vm3810, 1, 0
        %v3891 = vsel %vm3811, 1, 0
        %v3892 = vsel %vm3812, 1, 0
        %v3893 = vsel %vm3813, 1, 0
        %v3894 = vsel %vm3814, 1, 0
        %v3895 = vsel %vm3815, 1, 0
        %v3896 = vsel %vm3816, 1, 0
        %v3897 = vsel %vm3817, 1, 0
        %v3898 = vsel %vm3818, 1, 0
        %v3899 = vsel %vm3819, 1, 0
        %vm3900 = vcmp.eq.s32.totalorder %v3860, 1
        %vm3901 = vcmp.eq.s32.totalorder %v3861, 1
        %vm3902 = vcmp.eq.s32.totalorder %v3862, 1
        %vm3903 = vcmp.eq.s32.totalorder %v3863, 1
        %vm3904 = vcmp.eq.s32.totalorder %v3864, 1
        %vm3905 = vcmp.eq.s32.totalorder %v3865, 1
        %vm3906 = vcmp.eq.s32.totalorder %v3866, 1
        %vm3907 = vcmp.eq.s32.totalorder %v3867, 1
        %vm3908 = vcmp.eq.s32.totalorder %v3868, 1
        %vm3909 = vcmp.eq.s32.totalorder %v3869, 1
        %vm3910 = vcmp.eq.s32.totalorder %v3870, 1
        %vm3911 = vcmp.eq.s32.totalorder %v3871, 1
        %vm3912 = vcmp.eq.s32.totalorder %v3872, 1
        %vm3913 = vcmp.eq.s32.totalorder %v3873, 1
        %vm3914 = vcmp.eq.s32.totalorder %v3874, 1
        %vm3915 = vcmp.eq.s32.totalorder %v3875, 1
        %vm3916 = vcmp.eq.s32.totalorder %v3876, 1
        %vm3917 = vcmp.eq.s32.totalorder %v3877, 1
        %vm3918 = vcmp.eq.s32.totalorder %v3878, 1
        %vm3919 = vcmp.eq.s32.totalorder %v3879, 1
        %vm3920 = vcmp.eq.s32.totalorder %v3880, 1
        %vm3921 = vcmp.eq.s32.totalorder %v3881, 1
        %vm3922 = vcmp.eq.s32.totalorder %v3882, 1
        %vm3923 = vcmp.eq.s32.totalorder %v3883, 1
        %vm3924 = vcmp.eq.s32.totalorder %v3884, 1
        %vm3925 = vcmp.eq.s32.totalorder %v3885, 1
        %vm3926 = vcmp.eq.s32.totalorder %v3886, 1
        %vm3927 = vcmp.eq.s32.totalorder %v3887, 1
        %vm3928 = vcmp.eq.s32.totalorder %v3888, 1
        %vm3929 = vcmp.eq.s32.totalorder %v3889, 1
        %vm3930 = vcmp.eq.s32.totalorder %v3890, 1
        %vm3931 = vcmp.eq.s32.totalorder %v3891, 1
        %vm3932 = vcmp.eq.s32.totalorder %v3892, 1
        %vm3933 = vcmp.eq.s32.totalorder %v3893, 1
        %vm3934 = vcmp.eq.s32.totalorder %v3894, 1
        %vm3935 = vcmp.eq.s32.totalorder %v3895, 1
        %vm3936 = vcmp.eq.s32.totalorder %v3896, 1
        %vm3937 = vcmp.eq.s32.totalorder %v3897, 1
        %vm3938 = vcmp.eq.s32.totalorder %v3898, 1
        %vm3939 = vcmp.eq.s32.totalorder %v3899, 1
        %v3940 = vsel %vm3900, %v3820, 0.0
        %v3941 = vsel %vm3901, %v3821, 0.0
        %v3942 = vsel %vm3902, %v3822, 0.0
        %v3943 = vsel %vm3903, %v3823, 0.0
        %v3944 = vsel %vm3904, %v3824, 0.0
        %v3945 = vsel %vm3905, %v3825, 0.0
        %v3946 = vsel %vm3906, %v3826, 0.0
        %v3947 = vsel %vm3907, %v3827, 0.0
        %v3948 = vsel %vm3908, %v3828, 0.0
        %v3949 = vsel %vm3909, %v3829, 0.0
        %v3950 = vsel %vm3910, %v3830, 0.0
        %v3951 = vsel %vm3911, %v3831, 0.0
        %v3952 = vsel %vm3912, %v3832, 0.0
        %v3953 = vsel %vm3913, %v3833, 0.0
        %v3954 = vsel %vm3914, %v3834, 0.0
        %v3955 = vsel %vm3915, %v3835, 0.0
        %v3956 = vsel %vm3916, %v3836, 0.0
        %v3957 = vsel %vm3917, %v3837, 0.0
        %v3958 = vsel %vm3918, %v3838, 0.0
        %v3959 = vsel %vm3919, %v3839, 0.0
        %v3960 = vsel %vm3920, %v3840, 0.0
        %v3961 = vsel %vm3921, %v3841, 0.0
        %v3962 = vsel %vm3922, %v3842, 0.0
        %v3963 = vsel %vm3923, %v3843, 0.0
        %v3964 = vsel %vm3924, %v3844, 0.0
        %v3965 = vsel %vm3925, %v3845, 0.0
        %v3966 = vsel %vm3926, %v3846, 0.0
        %v3967 = vsel %vm3927, %v3847, 0.0
        %v3968 = vsel %vm3928, %v3848, 0.0
        %v3969 = vsel %vm3929, %v3849, 0.0
        %v3970 = vsel %vm3930, %v3850, 0.0
        %v3971 = vsel %vm3931, %v3851, 0.0
        %v3972 = vsel %vm3932, %v3852, 0.0
        %v3973 = vsel %vm3933, %v3853, 0.0
        %v3974 = vsel %vm3934, %v3854, 0.0
        %v3975 = vsel %vm3935, %v3855, 0.0
        %v3976 = vsel %vm3936, %v3856, 0.0
        %v3977 = vsel %vm3937, %v3857, 0.0
        %v3978 = vsel %vm3938, %v3858, 0.0
        %v3979 = vsel %vm3939, %v3859, 0.0
        %v3980 = vpack.c.bf16 %v3941, %v3940
        %v3981 = vpack.c.bf16 %v3943, %v3942
        %v3982 = vpack.c.bf16 %v3945, %v3944
        %v3983 = vpack.c.bf16 %v3947, %v3946
        %v3984 = vpack.c.bf16 %v3949, %v3948
        %v3985 = vpack.c.bf16 %v3951, %v3950
        %v3986 = vpack.c.bf16 %v3953, %v3952
        %v3987 = vpack.c.bf16 %v3955, %v3954
        %v3988 = vpack.c.bf16 %v3957, %v3956
        %v3989 = vpack.c.bf16 %v3959, %v3958
        %v3990 = vpack.c.bf16 %v3961, %v3960
        %v3991 = vpack.c.bf16 %v3963, %v3962
        %v3992 = vpack.c.bf16 %v3965, %v3964
        %v3993 = vpack.c.bf16 %v3967, %v3966
        %v3994 = vpack.c.bf16 %v3969, %v3968
        %v3995 = vpack.c.bf16 %v3971, %v3970
        %v3996 = vpack.c.bf16 %v3973, %v3972
        %v3997 = vpack.c.bf16 %v3975, %v3974
        %v3998 = vpack.c.bf16 %v3977, %v3976
        %v3999 = vpack.c.bf16 %v3979, %v3978
        %v4000 = vld [vmem:[%s3] sm:$0x3]
        %s4001 = scalar_lea.vmem %s3, 6
        %v4002 = vld [vmem:[%s4001] sm:$0x3]
        %v4004 = vsel %vm504, %v3982, 0
        %v4007 = vsel %vm504, %v3984, 0
        %v4010 = vsel %vm504, %v3986, 0
        %v4013 = vsel %vm504, %v3988, 0
        %v4016 = vsel %vm504, %v3990, 0
        %v4019 = vsel %vm504, %v3992, 0
        %v4022 = vsel %vm504, %v3994, 0
        %v4025 = vsel %vm504, %v3996, 0
        %v4028 = vsel %vm565, %v4002, 0
        %4030 = vmatprep.subr.bf16.mxu0 0
        %4031 = vmatpush1.bf16.msra.mxu0 %v4028
        %4032 = vmatprep.subr.bf16.mxu0 0
        %4033 = vmatpush1.bf16.msra.mxu0 0
        %4034 = vmatprep.subr.bf16.mxu0 0
        %4035 = vmatpush1.bf16.msra.mxu0 0
        %4036 = vmatprep.subr.bf16.mxu0 0
        %4037 = vmatpush1.bf16.msra.mxu0 0
        %4038 = vmatprep.subr.bf16.mxu0 0
        %4039 = vmatpush1.bf16.msra.mxu0 0
        %4040 = vmatprep.subr.bf16.mxu0 0
        %4041 = vmatpush1.bf16.msra.mxu0 0
        %4042 = vmatprep.subr.bf16.mxu0 0
        %4043 = vmatpush1.bf16.msra.mxu0 0
        %4044 = vmatprep.subr.bf16.mxu0 0
        %4045 = vmatpush1.bf16.msra.mxu0 0
        %4046 = vmatprep.subr.bf16.mxu0 0
        %4047 = vmatpush1.bf16.msra.mxu0 0
        %4048 = vmatprep.subr.bf16.mxu0 0
        %4049 = vmatpush1.bf16.msra.mxu0 0
        %4050 = vmatprep.subr.bf16.mxu0 0
        %4051 = vmatpush1.bf16.msra.mxu0 0
        %4052 = vmatprep.subr.bf16.mxu0 0
        %4053 = vmatpush1.bf16.msra.mxu0 0
        %4054 = vmatprep.subr.bf16.mxu0 0
        %4055 = vmatpush1.bf16.msra.mxu0 0
        %4056 = vmatprep.subr.bf16.mxu0 0
        %4057 = vmatpush1.bf16.msra.mxu0 0
        %4058 = vmatprep.subr.bf16.mxu0 0
        %4059 = vmatpush1.bf16.msra.mxu0 0
        %4060 = vmatprep.subr.bf16.mxu0 0
        %4061 = vmatpush1.bf16.msra.mxu0 0
        %4062 = vmatprep.mubr.bf16.mxu0 0
        %4063 = vmatmul.mubr.bf16.gmra.mrb[0].mxu0 %v4004
        %v4064 = vpop.f32.mrb[0].mxu0
        %v4065 = vadd.f32 0.0, %v4064
        %v4066 = vpop.f32.mrb[0].mxu0
        %v4067 = vpop.f32.mrb[0].mxu0
        %v4068 = vadd.f32 0.0, %v4067
        %v4069 = vpop.f32.mrb[0].mxu0
        %4070 = vmatprep.mubr.bf16.mxu0 0
        %4071 = vmatmul.mubr.bf16.gmra.mrb[0].mxu0 %v4007
        %v4072 = vpop.f32.mrb[0].mxu0
        %v4073 = vadd.f32 0.0, %v4072
        %v4074 = vpop.f32.mrb[0].mxu0
        %v4075 = vpop.f32.mrb[0].mxu0
        %v4076 = vadd.f32 0.0, %v4075
        %v4077 = vpop.f32.mrb[0].mxu0
        %4078 = vmatprep.mubr.bf16.mxu0 0
        %4079 = vmatmul.mubr.bf16.gmra.mrb[0].mxu0 %v4010
        %v4080 = vpop.f32.mrb[0].mxu0
        %v4081 = vadd.f32 0.0, %v4080
        %v4082 = vpop.f32.mrb[0].mxu0
        %v4083 = vpop.f32.mrb[0].mxu0
        %v4084 = vadd.f32 0.0, %v4083
        %v4085 = vpop.f32.mrb[0].mxu0
        %4086 = vmatprep.mubr.bf16.mxu0 0
        %4087 = vmatmul.mubr.bf16.gmra.mrb[0].mxu0 %v4013
        %v4088 = vpop.f32.mrb[0].mxu0
        %v4089 = vadd.f32 0.0, %v4088
        %v4090 = vpop.f32.mrb[0].mxu0
        %v4091 = vpop.f32.mrb[0].mxu0
        %v4092 = vadd.f32 0.0, %v4091
        %v4093 = vpop.f32.mrb[0].mxu0
        %4094 = vmatprep.mubr.bf16.mxu0 0
        %4095 = vmatmul.mubr.bf16.gmra.mrb[0].mxu0 %v4016
        %v4096 = vpop.f32.mrb[0].mxu0
        %v4097 = vadd.f32 0.0, %v4096
        %v4098 = vpop.f32.mrb[0].mxu0
        %v4099 = vpop.f32.mrb[0].mxu0
        %v4100 = vadd.f32 0.0, %v4099
        %v4101 = vpop.f32.mrb[0].mxu0
        %4102 = vmatprep.mubr.bf16.mxu0 0
        %4103 = vmatmul.mubr.bf16.gmra.mrb[0].mxu0 %v4019
        %v4104 = vpop.f32.mrb[0].mxu0
        %v4105 = vadd.f32 0.0, %v4104
        %v4106 = vpop.f32.mrb[0].mxu0
        %v4107 = vpop.f32.mrb[0].mxu0
        %v4108 = vadd.f32 0.0, %v4107
        %v4109 = vpop.f32.mrb[0].mxu0
        %4110 = vmatprep.mubr.bf16.mxu0 0
        %4111 = vmatmul.mubr.bf16.gmra.mrb[0].mxu0 %v4022
        %v4112 = vpop.f32.mrb[0].mxu0
        %v4113 = vadd.f32 0.0, %v4112
        %v4114 = vpop.f32.mrb[0].mxu0
        %v4115 = vpop.f32.mrb[0].mxu0
        %v4116 = vadd.f32 0.0, %v4115
        %v4117 = vpop.f32.mrb[0].mxu0
        %4118 = vmatprep.mubr.bf16.mxu0 0
        %4119 = vmatmul.mubr.bf16.gmra.mrb[0].mxu0 %v4025
        %v4120 = vpop.f32.mrb[0].mxu0
        %v4121 = vadd.f32 0.0, %v4120
        %v4122 = vpop.f32.mrb[0].mxu0
        %v4123 = vpop.f32.mrb[0].mxu0
        %v4124 = vadd.f32 0.0, %v4123
        %v4125 = vpop.f32.mrb[0].mxu0
        %4126 = vdwg.mxu0
        %v4128 = vsel %vm504, %v3980, 0
        %v4131 = vsel %vm565, %v4000, 0
        %4133 = vmatprep.subr.bf16.mxu0 0
        %4134 = vmatpush1.bf16.msra.mxu0 %v4131
        %4135 = vmatprep.subr.bf16.mxu0 0
        %4136 = vmatpush1.bf16.msra.mxu0 0
        %4137 = vmatprep.subr.bf16.mxu0 0
        %4138 = vmatpush1.bf16.msra.mxu0 0
        %4139 = vmatprep.subr.bf16.mxu0 0
        %4140 = vmatpush1.bf16.msra.mxu0 0
        %4141 = vmatprep.subr.bf16.mxu0 0
        %4142 = vmatpush1.bf16.msra.mxu0 0
        %4143 = vmatprep.subr.bf16.mxu0 0
        %4144 = vmatpush1.bf16.msra.mxu0 0
        %4145 = vmatprep.subr.bf16.mxu0 0
        %4146 = vmatpush1.bf16.msra.mxu0 0
        %4147 = vmatprep.subr.bf16.mxu0 0
        %4148 = vmatpush1.bf16.msra.mxu0 0
        %4149 = vmatprep.subr.bf16.mxu0 0
        %4150 = vmatpush1.bf16.msra.mxu0 0
        %4151 = vmatprep.subr.bf16.mxu0 0
        %4152 = vmatpush1.bf16.msra.mxu0 0
        %4153 = vmatprep.subr.bf16.mxu0 0
        %4154 = vmatpush1.bf16.msra.mxu0 0
        %4155 = vmatprep.subr.bf16.mxu0 0
        %4156 = vmatpush1.bf16.msra.mxu0 0
        %4157 = vmatprep.subr.bf16.mxu0 0
        %4158 = vmatpush1.bf16.msra.mxu0 0
        %4159 = vmatprep.subr.bf16.mxu0 0
        %4160 = vmatpush1.bf16.msra.mxu0 0
        %4161 = vmatprep.subr.bf16.mxu0 0
        %4162 = vmatpush1.bf16.msra.mxu0 0
        %4163 = vmatprep.subr.bf16.mxu0 0
        %4164 = vmatpush1.bf16.msra.mxu0 0
        %4165 = vmatprep.mubr.bf16.mxu0 0
        %4166 = vmatmul.mubr.bf16.gmra.mrb[0].mxu0 %v4128
        %v4167 = vpop.f32.mrb[0].mxu0
        %v4168 = vadd.f32 %v4065, %v4167
        %v4169 = vpop.f32.mrb[0].mxu0
        %v4170 = vpop.f32.mrb[0].mxu0
        %v4171 = vadd.f32 %v4068, %v4170
        %v4172 = vpop.f32.mrb[0].mxu0
        %4173 = vmatprep.mubr.bf16.mxu0 0
        %4174 = vmatmul.mubr.bf16.gmra.mrb[0].mxu0 %v4004
        %v4175 = vpop.f32.mrb[0].mxu0
        %v4176 = vadd.f32 %v4073, %v4175
        %v4177 = vpop.f32.mrb[0].mxu0
        %v4178 = vpop.f32.mrb[0].mxu0
        %v4179 = vadd.f32 %v4076, %v4178
        %v4180 = vpop.f32.mrb[0].mxu0
        %4181 = vmatprep.mubr.bf16.mxu0 0
        %4182 = vmatmul.mubr.bf16.gmra.mrb[0].mxu0 %v4007
        %v4183 = vpop.f32.mrb[0].mxu0
        %v4184 = vadd.f32 %v4081, %v4183
        %v4185 = vpop.f32.mrb[0].mxu0
        %v4186 = vpop.f32.mrb[0].mxu0
        %v4187 = vadd.f32 %v4084, %v4186
        %v4188 = vpop.f32.mrb[0].mxu0
        %4189 = vmatprep.mubr.bf16.mxu0 0
        %4190 = vmatmul.mubr.bf16.gmra.mrb[0].mxu0 %v4010
        %v4191 = vpop.f32.mrb[0].mxu0
        %v4192 = vadd.f32 %v4089, %v4191
        %v4193 = vpop.f32.mrb[0].mxu0
        %v4194 = vpop.f32.mrb[0].mxu0
        %v4195 = vadd.f32 %v4092, %v4194
        %v4196 = vpop.f32.mrb[0].mxu0
        %4197 = vmatprep.mubr.bf16.mxu0 0
        %4198 = vmatmul.mubr.bf16.gmra.mrb[0].mxu0 %v4013
        %v4199 = vpop.f32.mrb[0].mxu0
        %v4200 = vadd.f32 %v4097, %v4199
        %v4201 = vpop.f32.mrb[0].mxu0
        %v4202 = vpop.f32.mrb[0].mxu0
        %v4203 = vadd.f32 %v4100, %v4202
        %v4204 = vpop.f32.mrb[0].mxu0
        %4205 = vmatprep.mubr.bf16.mxu0 0
        %4206 = vmatmul.mubr.bf16.gmra.mrb[0].mxu0 %v4016
        %v4207 = vpop.f32.mrb[0].mxu0
        %v4208 = vadd.f32 %v4105, %v4207
        %v4209 = vpop.f32.mrb[0].mxu0
        %v4210 = vpop.f32.mrb[0].mxu0
        %v4211 = vadd.f32 %v4108, %v4210
        %v4212 = vpop.f32.mrb[0].mxu0
        %4213 = vmatprep.mubr.bf16.mxu0 0
        %4214 = vmatmul.mubr.bf16.gmra.mrb[0].mxu0 %v4019
        %v4215 = vpop.f32.mrb[0].mxu0
        %v4216 = vadd.f32 %v4113, %v4215
        %v4217 = vpop.f32.mrb[0].mxu0
        %v4218 = vpop.f32.mrb[0].mxu0
        %v4219 = vadd.f32 %v4116, %v4218
        %v4220 = vpop.f32.mrb[0].mxu0
        %4221 = vmatprep.mubr.bf16.mxu0 0
        %4222 = vmatmul.mubr.bf16.gmra.mrb[0].mxu0 %v4022
        %v4223 = vpop.f32.mrb[0].mxu0
        %v4224 = vadd.f32 %v4121, %v4223
        %v4225 = vpop.f32.mrb[0].mxu0
        %v4226 = vpop.f32.mrb[0].mxu0
        %v4227 = vadd.f32 %v4124, %v4226
        %v4228 = vpop.f32.mrb[0].mxu0
        %4229 = vdwg.mxu0
        %s4230 = scalar_lea.vmem %s3, 12
        %v4231 = vld [vmem:[%s4230] sm:$0x3]
        %v4233 = vsel %vm504, %v3998, 0
        %v4236 = vsel %vm565, %v4231, 0
        %4238 = vmatprep.subr.bf16.mxu0 0
        %4239 = vmatpush1.bf16.msra.mxu0 %v4236
        %4240 = vmatprep.subr.bf16.mxu0 0
        %4241 = vmatpush1.bf16.msra.mxu0 0
        %4242 = vmatprep.subr.bf16.mxu0 0
        %4243 = vmatpush1.bf16.msra.mxu0 0
        %4244 = vmatprep.subr.bf16.mxu0 0
        %4245 = vmatpush1.bf16.msra.mxu0 0
        %4246 = vmatprep.subr.bf16.mxu0 0
        %4247 = vmatpush1.bf16.msra.mxu0 0
        %4248 = vmatprep.subr.bf16.mxu0 0
        %4249 = vmatpush1.bf16.msra.mxu0 0
        %4250 = vmatprep.subr.bf16.mxu0 0
        %4251 = vmatpush1.bf16.msra.mxu0 0
        %4252 = vmatprep.subr.bf16.mxu0 0
        %4253 = vmatpush1.bf16.msra.mxu0 0
        %4254 = vmatprep.subr.bf16.mxu0 0
        %4255 = vmatpush1.bf16.msra.mxu0 0
        %4256 = vmatprep.subr.bf16.mxu0 0
        %4257 = vmatpush1.bf16.msra.mxu0 0
        %4258 = vmatprep.subr.bf16.mxu0 0
        %4259 = vmatpush1.bf16.msra.mxu0 0
        %4260 = vmatprep.subr.bf16.mxu0 0
        %4261 = vmatpush1.bf16.msra.mxu0 0
        %4262 = vmatprep.subr.bf16.mxu0 0
        %4263 = vmatpush1.bf16.msra.mxu0 0
        %4264 = vmatprep.subr.bf16.mxu0 0
        %4265 = vmatpush1.bf16.msra.mxu0 0
        %4266 = vmatprep.subr.bf16.mxu0 0
        %4267 = vmatpush1.bf16.msra.mxu0 0
        %4268 = vmatprep.subr.bf16.mxu0 0
        %4269 = vmatpush1.bf16.msra.mxu0 0
        %4270 = vmatprep.mubr.bf16.mxu0 0
        %4271 = vmatmul.mubr.bf16.gmra.mrb[0].mxu0 %v4007
        %v4272 = vpop.f32.mrb[0].mxu0
        %v4273 = vadd.f32 0.0, %v4272
        %v4274 = vpop.f32.mrb[0].mxu0
        %v4275 = vpop.f32.mrb[0].mxu0
        %v4276 = vadd.f32 0.0, %v4275
        %v4277 = vpop.f32.mrb[0].mxu0
        %4278 = vmatprep.mubr.bf16.mxu0 0
        %4279 = vmatmul.mubr.bf16.gmra.mrb[0].mxu0 %v4010
        %v4280 = vpop.f32.mrb[0].mxu0
        %v4281 = vadd.f32 0.0, %v4280
        %v4282 = vpop.f32.mrb[0].mxu0
        %v4283 = vpop.f32.mrb[0].mxu0
        %v4284 = vadd.f32 0.0, %v4283
        %v4285 = vpop.f32.mrb[0].mxu0
        %4286 = vmatprep.mubr.bf16.mxu0 0
        %4287 = vmatmul.mubr.bf16.gmra.mrb[0].mxu0 %v4013
        %v4288 = vpop.f32.mrb[0].mxu0
        %v4289 = vadd.f32 0.0, %v4288
        %v4290 = vpop.f32.mrb[0].mxu0
        %v4291 = vpop.f32.mrb[0].mxu0
        %v4292 = vadd.f32 0.0, %v4291
        %v4293 = vpop.f32.mrb[0].mxu0
        %4294 = vmatprep.mubr.bf16.mxu0 0
        %4295 = vmatmul.mubr.bf16.gmra.mrb[0].mxu0 %v4016
        %v4296 = vpop.f32.mrb[0].mxu0
        %v4297 = vadd.f32 0.0, %v4296
        %v4298 = vpop.f32.mrb[0].mxu0
        %v4299 = vpop.f32.mrb[0].mxu0
        %v4300 = vadd.f32 0.0, %v4299
        %v4301 = vpop.f32.mrb[0].mxu0
        %4302 = vmatprep.mubr.bf16.mxu0 0
        %4303 = vmatmul.mubr.bf16.gmra.mrb[0].mxu0 %v4019
        %v4304 = vpop.f32.mrb[0].mxu0
        %v4305 = vadd.f32 0.0, %v4304
        %v4306 = vpop.f32.mrb[0].mxu0
        %v4307 = vpop.f32.mrb[0].mxu0
        %v4308 = vadd.f32 0.0, %v4307
        %v4309 = vpop.f32.mrb[0].mxu0
        %4310 = vmatprep.mubr.bf16.mxu0 0
        %4311 = vmatmul.mubr.bf16.gmra.mrb[0].mxu0 %v4022
        %v4312 = vpop.f32.mrb[0].mxu0
        %v4313 = vadd.f32 0.0, %v4312
        %v4314 = vpop.f32.mrb[0].mxu0
        %v4315 = vpop.f32.mrb[0].mxu0
        %v4316 = vadd.f32 0.0, %v4315
        %v4317 = vpop.f32.mrb[0].mxu0
        %4318 = vmatprep.mubr.bf16.mxu0 0
        %4319 = vmatmul.mubr.bf16.gmra.mrb[0].mxu0 %v4025
        %v4320 = vpop.f32.mrb[0].mxu0
        %v4321 = vadd.f32 0.0, %v4320
        %v4322 = vpop.f32.mrb[0].mxu0
        %v4323 = vpop.f32.mrb[0].mxu0
        %v4324 = vadd.f32 0.0, %v4323
        %v4325 = vpop.f32.mrb[0].mxu0
        %4326 = vmatprep.mubr.bf16.mxu0 0
        %4327 = vmatmul.mubr.bf16.gmra.mrb[0].mxu0 %v4233
        %v4328 = vpop.f32.mrb[0].mxu0
        %v4329 = vadd.f32 0.0, %v4328
        %v4330 = vpop.f32.mrb[0].mxu0
        %v4331 = vpop.f32.mrb[0].mxu0
        %v4332 = vadd.f32 0.0, %v4331
        %v4333 = vpop.f32.mrb[0].mxu0
        %4334 = vdwg.mxu0
        %v4335 = vadd.f32 %v4168, %v4273
        %v4336 = vadd.f32 %v4171, %v4276
        %v4337 = vadd.f32 %v4176, %v4281
        %v4338 = vadd.f32 %v4179, %v4284
        %v4339 = vadd.f32 %v4184, %v4289
        %v4340 = vadd.f32 %v4187, %v4292
        %v4341 = vadd.f32 %v4192, %v4297
        %v4342 = vadd.f32 %v4195, %v4300
        %v4343 = vadd.f32 %v4200, %v4305
        %v4344 = vadd.f32 %v4203, %v4308
        %v4345 = vadd.f32 %v4208, %v4313
        %v4346 = vadd.f32 %v4211, %v4316
        %v4347 = vadd.f32 %v4216, %v4321
        %v4348 = vadd.f32 %v4219, %v4324
        %v4349 = vadd.f32 %v4224, %v4329
        %v4350 = vadd.f32 %v4227, %v4332
        %vm4351 = vsmask.f32 7424
        %v4352 = vshrl.u32 %v3980, 16
        %v4354 = vshll.u32 %v3980, 16
        %v4356 = vrot.slane %v4354, 1
        %v4357 = vor.u32 %v4352, %v4356
        %v4359 = vshll.u32 %v3981, 16
        %v4361 = vrot.slane %v4359, 1
        %v4362 = vsel %vm4351, %v4357, %v4361
        %v4363 = vshrl.u32 %v3982, 16
        %v4365 = vshll.u32 %v3982, 16
        %v4367 = vrot.slane %v4365, 1
        %v4368 = vor.u32 %v4363, %v4367
        %v4370 = vshll.u32 %v3983, 16
        %v4372 = vrot.slane %v4370, 1
        %v4373 = vsel %vm4351, %v4368, %v4372
        %v4374 = vshrl.u32 %v3984, 16
        %v4376 = vshll.u32 %v3984, 16
        %v4378 = vrot.slane %v4376, 1
        %v4379 = vor.u32 %v4374, %v4378
        %v4381 = vshll.u32 %v3985, 16
        %v4383 = vrot.slane %v4381, 1
        %v4384 = vsel %vm4351, %v4379, %v4383
        %v4385 = vshrl.u32 %v3986, 16
        %v4387 = vshll.u32 %v3986, 16
        %v4389 = vrot.slane %v4387, 1
        %v4390 = vor.u32 %v4385, %v4389
        %v4392 = vshll.u32 %v3987, 16
        %v4394 = vrot.slane %v4392, 1
        %v4395 = vsel %vm4351, %v4390, %v4394
        %v4396 = vshrl.u32 %v3988, 16
        %v4398 = vshll.u32 %v3988, 16
        %v4400 = vrot.slane %v4398, 1
        %v4401 = vor.u32 %v4396, %v4400
        %v4403 = vshll.u32 %v3989, 16
        %v4405 = vrot.slane %v4403, 1
        %v4406 = vsel %vm4351, %v4401, %v4405
        %v4407 = vshrl.u32 %v3990, 16
        %v4409 = vshll.u32 %v3990, 16
        %v4411 = vrot.slane %v4409, 1
        %v4412 = vor.u32 %v4407, %v4411
        %v4414 = vshll.u32 %v3991, 16
        %v4416 = vrot.slane %v4414, 1
        %v4417 = vsel %vm4351, %v4412, %v4416
        %v4418 = vshrl.u32 %v3992, 16
        %v4420 = vshll.u32 %v3992, 16
        %v4422 = vrot.slane %v4420, 1
        %v4423 = vor.u32 %v4418, %v4422
        %v4425 = vshll.u32 %v3993, 16
        %v4427 = vrot.slane %v4425, 1
        %v4428 = vsel %vm4351, %v4423, %v4427
        %v4429 = vshrl.u32 %v3994, 16
        %v4431 = vshll.u32 %v3994, 16
        %v4433 = vrot.slane %v4431, 1
        %v4434 = vor.u32 %v4429, %v4433
        %v4436 = vshll.u32 %v3995, 16
        %v4438 = vrot.slane %v4436, 1
        %v4439 = vsel %vm4351, %v4434, %v4438
        %s4440 = scalar_lea.vmem %s3, 2
        %v4441 = vld [vmem:[%s4440] sm:$0x3]
        %v4443 = vsel %vm504, %v4362, 0
        %v4446 = vsel %vm504, %v4373, 0
        %v4449 = vsel %vm504, %v4384, 0
        %v4452 = vsel %vm504, %v4395, 0
        %v4455 = vsel %vm504, %v4406, 0
        %v4458 = vsel %vm504, %v4417, 0
        %v4461 = vsel %vm504, %v4428, 0
        %v4464 = vsel %vm504, %v4439, 0
        %v4467 = vsel %vm565, %v4441, 0
        %4469 = vmatprep.subr.bf16.mxu0 0
        %4470 = vmatpush1.bf16.msra.mxu0 %v4467
        %4471 = vmatprep.subr.bf16.mxu0 0
        %4472 = vmatpush1.bf16.msra.mxu0 0
        %4473 = vmatprep.subr.bf16.mxu0 0
        %4474 = vmatpush1.bf16.msra.mxu0 0
        %4475 = vmatprep.subr.bf16.mxu0 0
        %4476 = vmatpush1.bf16.msra.mxu0 0
        %4477 = vmatprep.subr.bf16.mxu0 0
        %4478 = vmatpush1.bf16.msra.mxu0 0
        %4479 = vmatprep.subr.bf16.mxu0 0
        %4480 = vmatpush1.bf16.msra.mxu0 0
        %4481 = vmatprep.subr.bf16.mxu0 0
        %4482 = vmatpush1.bf16.msra.mxu0 0
        %4483 = vmatprep.subr.bf16.mxu0 0
        %4484 = vmatpush1.bf16.msra.mxu0 0
        %4485 = vmatprep.subr.bf16.mxu0 0
        %4486 = vmatpush1.bf16.msra.mxu0 0
        %4487 = vmatprep.subr.bf16.mxu0 0
        %4488 = vmatpush1.bf16.msra.mxu0 0
        %4489 = vmatprep.subr.bf16.mxu0 0
        %4490 = vmatpush1.bf16.msra.mxu0 0
        %4491 = vmatprep.subr.bf16.mxu0 0
        %4492 = vmatpush1.bf16.msra.mxu0 0
        %4493 = vmatprep.subr.bf16.mxu0 0
        %4494 = vmatpush1.bf16.msra.mxu0 0
        %4495 = vmatprep.subr.bf16.mxu0 0
        %4496 = vmatpush1.bf16.msra.mxu0 0
        %4497 = vmatprep.subr.bf16.mxu0 0
        %4498 = vmatpush1.bf16.msra.mxu0 0
        %4499 = vmatprep.subr.bf16.mxu0 0
        %4500 = vmatpush1.bf16.msra.mxu0 0
        %4501 = vmatprep.mubr.bf16.mxu0 0
        %4502 = vmatmul.mubr.bf16.gmra.mrb[0].mxu0 %v4443
        %v4503 = vpop.f32.mrb[0].mxu0
        %v4504 = vadd.f32 0.0, %v4503
        %v4505 = vpop.f32.mrb[0].mxu0
        %v4506 = vpop.f32.mrb[0].mxu0
        %v4507 = vadd.f32 0.0, %v4506
        %v4508 = vpop.f32.mrb[0].mxu0
        %4509 = vmatprep.mubr.bf16.mxu0 0
        %4510 = vmatmul.mubr.bf16.gmra.mrb[0].mxu0 %v4446
        %v4511 = vpop.f32.mrb[0].mxu0
        %v4512 = vadd.f32 0.0, %v4511
        %v4513 = vpop.f32.mrb[0].mxu0
        %v4514 = vpop.f32.mrb[0].mxu0
        %v4515 = vadd.f32 0.0, %v4514
        %v4516 = vpop.f32.mrb[0].mxu0
        %4517 = vmatprep.mubr.bf16.mxu0 0
        %4518 = vmatmul.mubr.bf16.gmra.mrb[0].mxu0 %v4449
        %v4519 = vpop.f32.mrb[0].mxu0
        %v4520 = vadd.f32 0.0, %v4519
        %v4521 = vpop.f32.mrb[0].mxu0
        %v4522 = vpop.f32.mrb[0].mxu0
        %v4523 = vadd.f32 0.0, %v4522
        %v4524 = vpop.f32.mrb[0].mxu0
        %4525 = vmatprep.mubr.bf16.mxu0 0
        %4526 = vmatmul.mubr.bf16.gmra.mrb[0].mxu0 %v4452
        %v4527 = vpop.f32.mrb[0].mxu0
        %v4528 = vadd.f32 0.0, %v4527
        %v4529 = vpop.f32.mrb[0].mxu0
        %v4530 = vpop.f32.mrb[0].mxu0
        %v4531 = vadd.f32 0.0, %v4530
        %v4532 = vpop.f32.mrb[0].mxu0
        %4533 = vmatprep.mubr.bf16.mxu0 0
        %4534 = vmatmul.mubr.bf16.gmra.mrb[0].mxu0 %v4455
        %v4535 = vpop.f32.mrb[0].mxu0
        %v4536 = vadd.f32 0.0, %v4535
        %v4537 = vpop.f32.mrb[0].mxu0
        %v4538 = vpop.f32.mrb[0].mxu0
        %v4539 = vadd.f32 0.0, %v4538
        %v4540 = vpop.f32.mrb[0].mxu0
        %4541 = vmatprep.mubr.bf16.mxu0 0
        %4542 = vmatmul.mubr.bf16.gmra.mrb[0].mxu0 %v4458
        %v4543 = vpop.f32.mrb[0].mxu0
        %v4544 = vadd.f32 0.0, %v4543
        %v4545 = vpop.f32.mrb[0].mxu0
        %v4546 = vpop.f32.mrb[0].mxu0
        %v4547 = vadd.f32 0.0, %v4546
        %v4548 = vpop.f32.mrb[0].mxu0
        %4549 = vmatprep.mubr.bf16.mxu0 0
        %4550 = vmatmul.mubr.bf16.gmra.mrb[0].mxu0 %v4461
        %v4551 = vpop.f32.mrb[0].mxu0
        %v4552 = vadd.f32 0.0, %v4551
        %v4553 = vpop.f32.mrb[0].mxu0
        %v4554 = vpop.f32.mrb[0].mxu0
        %v4555 = vadd.f32 0.0, %v4554
        %v4556 = vpop.f32.mrb[0].mxu0
        %4557 = vmatprep.mubr.bf16.mxu0 0
        %4558 = vmatmul.mubr.bf16.gmra.mrb[0].mxu0 %v4464
        %v4559 = vpop.f32.mrb[0].mxu0
        %v4560 = vadd.f32 0.0, %v4559
        %v4561 = vpop.f32.mrb[0].mxu0
        %v4562 = vpop.f32.mrb[0].mxu0
        %v4563 = vadd.f32 0.0, %v4562
        %v4564 = vpop.f32.mrb[0].mxu0
        %4565 = vdwg.mxu0
        %v4566 = vadd.f32 %v4335, %v4504
        %v4567 = vadd.f32 %v4336, %v4507
        %v4568 = vadd.f32 %v4337, %v4512
        %v4569 = vadd.f32 %v4338, %v4515
        %v4570 = vadd.f32 %v4339, %v4520
        %v4571 = vadd.f32 %v4340, %v4523
        %v4572 = vadd.f32 %v4341, %v4528
        %v4573 = vadd.f32 %v4342, %v4531
        %v4574 = vadd.f32 %v4343, %v4536
        %v4575 = vadd.f32 %v4344, %v4539
        %v4576 = vadd.f32 %v4345, %v4544
        %v4577 = vadd.f32 %v4346, %v4547
        %v4578 = vadd.f32 %v4347, %v4552
        %v4579 = vadd.f32 %v4348, %v4555
        %v4580 = vadd.f32 %v4349, %v4560
        %v4581 = vadd.f32 %v4350, %v4563
        %v4582 = vshrl.u32 %v3996, 16
        %v4584 = vshll.u32 %v3996, 16
        %v4586 = vrot.slane %v4584, 1
        %v4587 = vor.u32 %v4582, %v4586
        %v4589 = vshll.u32 %v3997, 16
        %v4591 = vrot.slane %v4589, 1
        %v4592 = vsel %vm4351, %v4587, %v4591
        %s4593 = scalar_lea.vmem %s3, 8
        %v4594 = vld [vmem:[%s4593] sm:$0x3]
        %v4596 = vsel %vm504, %v4592, 0
        %v4599 = vsel %vm565, %v4594, 0
        %4601 = vmatprep.subr.bf16.mxu0 0
        %4602 = vmatpush1.bf16.msra.mxu0 %v4599
        %4603 = vmatprep.subr.bf16.mxu0 0
        %4604 = vmatpush1.bf16.msra.mxu0 0
        %4605 = vmatprep.subr.bf16.mxu0 0
        %4606 = vmatpush1.bf16.msra.mxu0 0
        %4607 = vmatprep.subr.bf16.mxu0 0
        %4608 = vmatpush1.bf16.msra.mxu0 0
        %4609 = vmatprep.subr.bf16.mxu0 0
        %4610 = vmatpush1.bf16.msra.mxu0 0
        %4611 = vmatprep.subr.bf16.mxu0 0
        %4612 = vmatpush1.bf16.msra.mxu0 0
        %4613 = vmatprep.subr.bf16.mxu0 0
        %4614 = vmatpush1.bf16.msra.mxu0 0
        %4615 = vmatprep.subr.bf16.mxu0 0
        %4616 = vmatpush1.bf16.msra.mxu0 0
        %4617 = vmatprep.subr.bf16.mxu0 0
        %4618 = vmatpush1.bf16.msra.mxu0 0
        %4619 = vmatprep.subr.bf16.mxu0 0
        %4620 = vmatpush1.bf16.msra.mxu0 0
        %4621 = vmatprep.subr.bf16.mxu0 0
        %4622 = vmatpush1.bf16.msra.mxu0 0
        %4623 = vmatprep.subr.bf16.mxu0 0
        %4624 = vmatpush1.bf16.msra.mxu0 0
        %4625 = vmatprep.subr.bf16.mxu0 0
        %4626 = vmatpush1.bf16.msra.mxu0 0
        %4627 = vmatprep.subr.bf16.mxu0 0
        %4628 = vmatpush1.bf16.msra.mxu0 0
        %4629 = vmatprep.subr.bf16.mxu0 0
        %4630 = vmatpush1.bf16.msra.mxu0 0
        %4631 = vmatprep.subr.bf16.mxu0 0
        %4632 = vmatpush1.bf16.msra.mxu0 0
        %4633 = vmatprep.mubr.bf16.mxu0 0
        %4634 = vmatmul.mubr.bf16.gmra.mrb[0].mxu0 %v4446
        %v4635 = vpop.f32.mrb[0].mxu0
        %v4636 = vadd.f32 0.0, %v4635
        %v4637 = vpop.f32.mrb[0].mxu0
        %v4638 = vpop.f32.mrb[0].mxu0
        %v4639 = vadd.f32 0.0, %v4638
        %v4640 = vpop.f32.mrb[0].mxu0
        %4641 = vmatprep.mubr.bf16.mxu0 0
        %4642 = vmatmul.mubr.bf16.gmra.mrb[0].mxu0 %v4449
        %v4643 = vpop.f32.mrb[0].mxu0
        %v4644 = vadd.f32 0.0, %v4643
        %v4645 = vpop.f32.mrb[0].mxu0
        %v4646 = vpop.f32.mrb[0].mxu0
        %v4647 = vadd.f32 0.0, %v4646
        %v4648 = vpop.f32.mrb[0].mxu0
        %4649 = vmatprep.mubr.bf16.mxu0 0
        %4650 = vmatmul.mubr.bf16.gmra.mrb[0].mxu0 %v4452
        %v4651 = vpop.f32.mrb[0].mxu0
        %v4652 = vadd.f32 0.0, %v4651
        %v4653 = vpop.f32.mrb[0].mxu0
        %v4654 = vpop.f32.mrb[0].mxu0
        %v4655 = vadd.f32 0.0, %v4654
        %v4656 = vpop.f32.mrb[0].mxu0
        %4657 = vmatprep.mubr.bf16.mxu0 0
        %4658 = vmatmul.mubr.bf16.gmra.mrb[0].mxu0 %v4455
        %v4659 = vpop.f32.mrb[0].mxu0
        %v4660 = vadd.f32 0.0, %v4659
        %v4661 = vpop.f32.mrb[0].mxu0
        %v4662 = vpop.f32.mrb[0].mxu0
        %v4663 = vadd.f32 0.0, %v4662
        %v4664 = vpop.f32.mrb[0].mxu0
        %4665 = vmatprep.mubr.bf16.mxu0 0
        %4666 = vmatmul.mubr.bf16.gmra.mrb[0].mxu0 %v4458
        %v4667 = vpop.f32.mrb[0].mxu0
        %v4668 = vadd.f32 0.0, %v4667
        %v4669 = vpop.f32.mrb[0].mxu0
        %v4670 = vpop.f32.mrb[0].mxu0
        %v4671 = vadd.f32 0.0, %v4670
        %v4672 = vpop.f32.mrb[0].mxu0
        %4673 = vmatprep.mubr.bf16.mxu0 0
        %4674 = vmatmul.mubr.bf16.gmra.mrb[0].mxu0 %v4461
        %v4675 = vpop.f32.mrb[0].mxu0
        %v4676 = vadd.f32 0.0, %v4675
        %v4677 = vpop.f32.mrb[0].mxu0
        %v4678 = vpop.f32.mrb[0].mxu0
        %v4679 = vadd.f32 0.0, %v4678
        %v4680 = vpop.f32.mrb[0].mxu0
        %4681 = vmatprep.mubr.bf16.mxu0 0
        %4682 = vmatmul.mubr.bf16.gmra.mrb[0].mxu0 %v4464
        %v4683 = vpop.f32.mrb[0].mxu0
        %v4684 = vadd.f32 0.0, %v4683
        %v4685 = vpop.f32.mrb[0].mxu0
        %v4686 = vpop.f32.mrb[0].mxu0
        %v4687 = vadd.f32 0.0, %v4686
        %v4688 = vpop.f32.mrb[0].mxu0
        %4689 = vmatprep.mubr.bf16.mxu0 0
        %4690 = vmatmul.mubr.bf16.gmra.mrb[0].mxu0 %v4596
        %v4691 = vpop.f32.mrb[0].mxu0
        %v4692 = vadd.f32 0.0, %v4691
        %v4693 = vpop.f32.mrb[0].mxu0
        %v4694 = vpop.f32.mrb[0].mxu0
        %v4695 = vadd.f32 0.0, %v4694
        %v4696 = vpop.f32.mrb[0].mxu0
        %4697 = vdwg.mxu0
        %v4698 = vadd.f32 %v4566, %v4636
        %v4699 = vadd.f32 %v4567, %v4639
        %v4700 = vadd.f32 %v4568, %v4644
        %v4701 = vadd.f32 %v4569, %v4647
        %v4702 = vadd.f32 %v4570, %v4652
        %v4703 = vadd.f32 %v4571, %v4655
        %v4704 = vadd.f32 %v4572, %v4660
        %v4705 = vadd.f32 %v4573, %v4663
        %v4706 = vadd.f32 %v4574, %v4668
        %v4707 = vadd.f32 %v4575, %v4671
        %v4708 = vadd.f32 %v4576, %v4676
        %v4709 = vadd.f32 %v4577, %v4679
        %v4710 = vadd.f32 %v4578, %v4684
        %v4711 = vadd.f32 %v4579, %v4687
        %v4712 = vadd.f32 %v4580, %v4692
        %v4713 = vadd.f32 %v4581, %v4695
        %v4714 = vshrl.u32 %v3998, 16
        %v4716 = vshll.u32 %v3998, 16
        %v4718 = vrot.slane %v4716, 1
        %v4719 = vor.u32 %v4714, %v4718
        %v4721 = vshll.u32 %v3999, 16
        %v4723 = vrot.slane %v4721, 1
        %v4724 = vsel %vm4351, %v4719, %v4723
        %s4725 = scalar_lea.vmem %s3, 14
        %v4726 = vld [vmem:[%s4725] sm:$0x3]
        %v4728 = vsel %vm504, %v4724, 0
        %v4731 = vsel %vm565, %v4726, 0
        %4733 = vmatprep.subr.bf16.mxu0 0
        %4734 = vmatpush1.bf16.msra.mxu0 %v4731
        %4735 = vmatprep.subr.bf16.mxu0 0
        %4736 = vmatpush1.bf16.msra.mxu0 0
        %4737 = vmatprep.subr.bf16.mxu0 0
        %4738 = vmatpush1.bf16.msra.mxu0 0
        %4739 = vmatprep.subr.bf16.mxu0 0
        %4740 = vmatpush1.bf16.msra.mxu0 0
        %4741 = vmatprep.subr.bf16.mxu0 0
        %4742 = vmatpush1.bf16.msra.mxu0 0
        %4743 = vmatprep.subr.bf16.mxu0 0
        %4744 = vmatpush1.bf16.msra.mxu0 0
        %4745 = vmatprep.subr.bf16.mxu0 0
        %4746 = vmatpush1.bf16.msra.mxu0 0
        %4747 = vmatprep.subr.bf16.mxu0 0
        %4748 = vmatpush1.bf16.msra.mxu0 0
        %4749 = vmatprep.subr.bf16.mxu0 0
        %4750 = vmatpush1.bf16.msra.mxu0 0
        %4751 = vmatprep.subr.bf16.mxu0 0
        %4752 = vmatpush1.bf16.msra.mxu0 0
        %4753 = vmatprep.subr.bf16.mxu0 0
        %4754 = vmatpush1.bf16.msra.mxu0 0
        %4755 = vmatprep.subr.bf16.mxu0 0
        %4756 = vmatpush1.bf16.msra.mxu0 0
        %4757 = vmatprep.subr.bf16.mxu0 0
        %4758 = vmatpush1.bf16.msra.mxu0 0
        %4759 = vmatprep.subr.bf16.mxu0 0
        %4760 = vmatpush1.bf16.msra.mxu0 0
        %4761 = vmatprep.subr.bf16.mxu0 0
        %4762 = vmatpush1.bf16.msra.mxu0 0
        %4763 = vmatprep.subr.bf16.mxu0 0
        %4764 = vmatpush1.bf16.msra.mxu0 0
        %4765 = vmatprep.mubr.bf16.mxu0 0
        %4766 = vmatmul.mubr.bf16.gmra.mrb[0].mxu0 %v4449
        %v4767 = vpop.f32.mrb[0].mxu0
        %v4768 = vadd.f32 0.0, %v4767
        %v4769 = vpop.f32.mrb[0].mxu0
        %v4770 = vpop.f32.mrb[0].mxu0
        %v4771 = vadd.f32 0.0, %v4770
        %v4772 = vpop.f32.mrb[0].mxu0
        %4773 = vmatprep.mubr.bf16.mxu0 0
        %4774 = vmatmul.mubr.bf16.gmra.mrb[0].mxu0 %v4452
        %v4775 = vpop.f32.mrb[0].mxu0
        %v4776 = vadd.f32 0.0, %v4775
        %v4777 = vpop.f32.mrb[0].mxu0
        %v4778 = vpop.f32.mrb[0].mxu0
        %v4779 = vadd.f32 0.0, %v4778
        %v4780 = vpop.f32.mrb[0].mxu0
        %4781 = vmatprep.mubr.bf16.mxu0 0
        %4782 = vmatmul.mubr.bf16.gmra.mrb[0].mxu0 %v4455
        %v4783 = vpop.f32.mrb[0].mxu0
        %v4784 = vadd.f32 0.0, %v4783
        %v4785 = vpop.f32.mrb[0].mxu0
        %v4786 = vpop.f32.mrb[0].mxu0
        %v4787 = vadd.f32 0.0, %v4786
        %v4788 = vpop.f32.mrb[0].mxu0
        %4789 = vmatprep.mubr.bf16.mxu0 0
        %4790 = vmatmul.mubr.bf16.gmra.mrb[0].mxu0 %v4458
        %v4791 = vpop.f32.mrb[0].mxu0
        %v4792 = vadd.f32 0.0, %v4791
        %v4793 = vpop.f32.mrb[0].mxu0
        %v4794 = vpop.f32.mrb[0].mxu0
        %v4795 = vadd.f32 0.0, %v4794
        %v4796 = vpop.f32.mrb[0].mxu0
        %4797 = vmatprep.mubr.bf16.mxu0 0
        %4798 = vmatmul.mubr.bf16.gmra.mrb[0].mxu0 %v4461
        %v4799 = vpop.f32.mrb[0].mxu0
        %v4800 = vadd.f32 0.0, %v4799
        %v4801 = vpop.f32.mrb[0].mxu0
        %v4802 = vpop.f32.mrb[0].mxu0
        %v4803 = vadd.f32 0.0, %v4802
        %v4804 = vpop.f32.mrb[0].mxu0
        %4805 = vmatprep.mubr.bf16.mxu0 0
        %4806 = vmatmul.mubr.bf16.gmra.mrb[0].mxu0 %v4464
        %v4807 = vpop.f32.mrb[0].mxu0
        %v4808 = vadd.f32 0.0, %v4807
        %v4809 = vpop.f32.mrb[0].mxu0
        %v4810 = vpop.f32.mrb[0].mxu0
        %v4811 = vadd.f32 0.0, %v4810
        %v4812 = vpop.f32.mrb[0].mxu0
        %4813 = vmatprep.mubr.bf16.mxu0 0
        %4814 = vmatmul.mubr.bf16.gmra.mrb[0].mxu0 %v4596
        %v4815 = vpop.f32.mrb[0].mxu0
        %v4816 = vadd.f32 0.0, %v4815
        %v4817 = vpop.f32.mrb[0].mxu0
        %v4818 = vpop.f32.mrb[0].mxu0
        %v4819 = vadd.f32 0.0, %v4818
        %v4820 = vpop.f32.mrb[0].mxu0
        %4821 = vmatprep.mubr.bf16.mxu0 0
        %4822 = vmatmul.mubr.bf16.gmra.mrb[0].mxu0 %v4728
        %v4823 = vpop.f32.mrb[0].mxu0
        %v4824 = vadd.f32 0.0, %v4823
        %v4825 = vpop.f32.mrb[0].mxu0
        %v4826 = vpop.f32.mrb[0].mxu0
        %v4827 = vadd.f32 0.0, %v4826
        %v4828 = vpop.f32.mrb[0].mxu0
        %4829 = vdwg.mxu0
        %v4830 = vadd.f32 %v4698, %v4768
        %v4831 = vadd.f32 %v4699, %v4771
        %v4832 = vadd.f32 %v4700, %v4776
        %v4833 = vadd.f32 %v4701, %v4779
        %v4834 = vadd.f32 %v4702, %v4784
        %v4835 = vadd.f32 %v4703, %v4787
        %v4836 = vadd.f32 %v4704, %v4792
        %v4837 = vadd.f32 %v4705, %v4795
        %v4838 = vadd.f32 %v4706, %v4800
        %v4839 = vadd.f32 %v4707, %v4803
        %v4840 = vadd.f32 %v4708, %v4808
        %v4841 = vadd.f32 %v4709, %v4811
        %v4842 = vadd.f32 %v4710, %v4816
        %v4843 = vadd.f32 %v4711, %v4819
        %v4844 = vadd.f32 %v4712, %v4824
        %v4845 = vadd.f32 %v4713, %v4827
        %vm4862 = vcmask 1046528
        %v4863 = vrot.slane %v3980, 1
        %v4864 = vrot.slane %v3981, 1
        %v4865 = vsel %vm4862, %v4863, %v4864
        %v4866 = vrot.slane %v3982, 1
        %v4867 = vrot.slane %v3983, 1
        %v4868 = vsel %vm4862, %v4866, %v4867
        %v4869 = vrot.slane %v3984, 1
        %v4870 = vrot.slane %v3985, 1
        %v4871 = vsel %vm4862, %v4869, %v4870
        %v4872 = vrot.slane %v3986, 1
        %v4873 = vrot.slane %v3987, 1
        %v4874 = vsel %vm4862, %v4872, %v4873
        %v4875 = vrot.slane %v3988, 1
        %v4876 = vrot.slane %v3989, 1
        %v4877 = vsel %vm4862, %v4875, %v4876
        %v4878 = vrot.slane %v3990, 1
        %v4879 = vrot.slane %v3991, 1
        %v4880 = vsel %vm4862, %v4878, %v4879
        %v4881 = vrot.slane %v3992, 1
        %v4882 = vrot.slane %v3993, 1
        %v4883 = vsel %vm4862, %v4881, %v4882
        %v4884 = vrot.slane %v3994, 1
        %v4885 = vrot.slane %v3995, 1
        %v4886 = vsel %vm4862, %v4884, %v4885
        %s4887 = scalar_lea.vmem %s3, 4
        %v4888 = vld [vmem:[%s4887] sm:$0x3]
        %v4890 = vsel %vm504, %v4865, 0
        %v4893 = vsel %vm504, %v4868, 0
        %v4896 = vsel %vm504, %v4871, 0
        %v4899 = vsel %vm504, %v4874, 0
        %v4902 = vsel %vm504, %v4877, 0
        %v4905 = vsel %vm504, %v4880, 0
        %v4908 = vsel %vm504, %v4883, 0
        %v4911 = vsel %vm504, %v4886, 0
        %v4914 = vsel %vm565, %v4888, 0
        %4916 = vmatprep.subr.bf16.mxu0 0
        %4917 = vmatpush1.bf16.msra.mxu0 %v4914
        %4918 = vmatprep.subr.bf16.mxu0 0
        %4919 = vmatpush1.bf16.msra.mxu0 0
        %4920 = vmatprep.subr.bf16.mxu0 0
        %4921 = vmatpush1.bf16.msra.mxu0 0
        %4922 = vmatprep.subr.bf16.mxu0 0
        %4923 = vmatpush1.bf16.msra.mxu0 0
        %4924 = vmatprep.subr.bf16.mxu0 0
        %4925 = vmatpush1.bf16.msra.mxu0 0
        %4926 = vmatprep.subr.bf16.mxu0 0
        %4927 = vmatpush1.bf16.msra.mxu0 0
        %4928 = vmatprep.subr.bf16.mxu0 0
        %4929 = vmatpush1.bf16.msra.mxu0 0
        %4930 = vmatprep.subr.bf16.mxu0 0
        %4931 = vmatpush1.bf16.msra.mxu0 0
        %4932 = vmatprep.subr.bf16.mxu0 0
        %4933 = vmatpush1.bf16.msra.mxu0 0
        %4934 = vmatprep.subr.bf16.mxu0 0
        %4935 = vmatpush1.bf16.msra.mxu0 0
        %4936 = vmatprep.subr.bf16.mxu0 0
        %4937 = vmatpush1.bf16.msra.mxu0 0
        %4938 = vmatprep.subr.bf16.mxu0 0
        %4939 = vmatpush1.bf16.msra.mxu0 0
        %4940 = vmatprep.subr.bf16.mxu0 0
        %4941 = vmatpush1.bf16.msra.mxu0 0
        %4942 = vmatprep.subr.bf16.mxu0 0
        %4943 = vmatpush1.bf16.msra.mxu0 0
        %4944 = vmatprep.subr.bf16.mxu0 0
        %4945 = vmatpush1.bf16.msra.mxu0 0
        %4946 = vmatprep.subr.bf16.mxu0 0
        %4947 = vmatpush1.bf16.msra.mxu0 0
        %4948 = vmatprep.mubr.bf16.mxu0 0
        %4949 = vmatmul.mubr.bf16.gmra.mrb[0].mxu0 %v4890
        %v4950 = vpop.f32.mrb[0].mxu0
        %v4951 = vadd.f32 0.0, %v4950
        %v4952 = vpop.f32.mrb[0].mxu0
        %v4953 = vpop.f32.mrb[0].mxu0
        %v4954 = vadd.f32 0.0, %v4953
        %v4955 = vpop.f32.mrb[0].mxu0
        %4956 = vmatprep.mubr.bf16.mxu0 0
        %4957 = vmatmul.mubr.bf16.gmra.mrb[0].mxu0 %v4893
        %v4958 = vpop.f32.mrb[0].mxu0
        %v4959 = vadd.f32 0.0, %v4958
        %v4960 = vpop.f32.mrb[0].mxu0
        %v4961 = vpop.f32.mrb[0].mxu0
        %v4962 = vadd.f32 0.0, %v4961
        %v4963 = vpop.f32.mrb[0].mxu0
        %4964 = vmatprep.mubr.bf16.mxu0 0
        %4965 = vmatmul.mubr.bf16.gmra.mrb[0].mxu0 %v4896
        %v4966 = vpop.f32.mrb[0].mxu0
        %v4967 = vadd.f32 0.0, %v4966
        %v4968 = vpop.f32.mrb[0].mxu0
        %v4969 = vpop.f32.mrb[0].mxu0
        %v4970 = vadd.f32 0.0, %v4969
        %v4971 = vpop.f32.mrb[0].mxu0
        %4972 = vmatprep.mubr.bf16.mxu0 0
        %4973 = vmatmul.mubr.bf16.gmra.mrb[0].mxu0 %v4899
        %v4974 = vpop.f32.mrb[0].mxu0
        %v4975 = vadd.f32 0.0, %v4974
        %v4976 = vpop.f32.mrb[0].mxu0
        %v4977 = vpop.f32.mrb[0].mxu0
        %v4978 = vadd.f32 0.0, %v4977
        %v4979 = vpop.f32.mrb[0].mxu0
        %4980 = vmatprep.mubr.bf16.mxu0 0
        %4981 = vmatmul.mubr.bf16.gmra.mrb[0].mxu0 %v4902
        %v4982 = vpop.f32.mrb[0].mxu0
        %v4983 = vadd.f32 0.0, %v4982
        %v4984 = vpop.f32.mrb[0].mxu0
        %v4985 = vpop.f32.mrb[0].mxu0
        %v4986 = vadd.f32 0.0, %v4985
        %v4987 = vpop.f32.mrb[0].mxu0
        %4988 = vmatprep.mubr.bf16.mxu0 0
        %4989 = vmatmul.mubr.bf16.gmra.mrb[0].mxu0 %v4905
        %v4990 = vpop.f32.mrb[0].mxu0
        %v4991 = vadd.f32 0.0, %v4990
        %v4992 = vpop.f32.mrb[0].mxu0
        %v4993 = vpop.f32.mrb[0].mxu0
        %v4994 = vadd.f32 0.0, %v4993
        %v4995 = vpop.f32.mrb[0].mxu0
        %4996 = vmatprep.mubr.bf16.mxu0 0
        %4997 = vmatmul.mubr.bf16.gmra.mrb[0].mxu0 %v4908
        %v4998 = vpop.f32.mrb[0].mxu0
        %v4999 = vadd.f32 0.0, %v4998
        %v5000 = vpop.f32.mrb[0].mxu0
        %v5001 = vpop.f32.mrb[0].mxu0
        %v5002 = vadd.f32 0.0, %v5001
        %v5003 = vpop.f32.mrb[0].mxu0
        %5004 = vmatprep.mubr.bf16.mxu0 0
        %5005 = vmatmul.mubr.bf16.gmra.mrb[0].mxu0 %v4911
        %v5006 = vpop.f32.mrb[0].mxu0
        %v5007 = vadd.f32 0.0, %v5006
        %v5008 = vpop.f32.mrb[0].mxu0
        %v5009 = vpop.f32.mrb[0].mxu0
        %v5010 = vadd.f32 0.0, %v5009
        %v5011 = vpop.f32.mrb[0].mxu0
        %5012 = vdwg.mxu0
        %v5013 = vadd.f32 %v4830, %v4951
        %v5014 = vadd.f32 %v4831, %v4954
        %v5015 = vadd.f32 %v4832, %v4959
        %v5016 = vadd.f32 %v4833, %v4962
        %v5017 = vadd.f32 %v4834, %v4967
        %v5018 = vadd.f32 %v4835, %v4970
        %v5019 = vadd.f32 %v4836, %v4975
        %v5020 = vadd.f32 %v4837, %v4978
        %v5021 = vadd.f32 %v4838, %v4983
        %v5022 = vadd.f32 %v4839, %v4986
        %v5023 = vadd.f32 %v4840, %v4991
        %v5024 = vadd.f32 %v4841, %v4994
        %v5025 = vadd.f32 %v4842, %v4999
        %v5026 = vadd.f32 %v4843, %v5002
        %v5027 = vadd.f32 %v4844, %v5007
        %v5028 = vadd.f32 %v4845, %v5010
        %v5031 = vrot.slane %v3996, 1
        %v5032 = vrot.slane %v3997, 1
        %v5033 = vsel %vm4862, %v5031, %v5032
        %s5034 = scalar_lea.vmem %s3, 10
        %v5035 = vld [vmem:[%s5034] sm:$0x3]
        %v5037 = vsel %vm504, %v5033, 0
        %v5040 = vsel %vm565, %v5035, 0
        %5042 = vmatprep.subr.bf16.mxu0 0
        %5043 = vmatpush1.bf16.msra.mxu0 %v5040
        %5044 = vmatprep.subr.bf16.mxu0 0
        %5045 = vmatpush1.bf16.msra.mxu0 0
        %5046 = vmatprep.subr.bf16.mxu0 0
        %5047 = vmatpush1.bf16.msra.mxu0 0
        %5048 = vmatprep.subr.bf16.mxu0 0
        %5049 = vmatpush1.bf16.msra.mxu0 0
        %5050 = vmatprep.subr.bf16.mxu0 0
        %5051 = vmatpush1.bf16.msra.mxu0 0
        %5052 = vmatprep.subr.bf16.mxu0 0
        %5053 = vmatpush1.bf16.msra.mxu0 0
        %5054 = vmatprep.subr.bf16.mxu0 0
        %5055 = vmatpush1.bf16.msra.mxu0 0
        %5056 = vmatprep.subr.bf16.mxu0 0
        %5057 = vmatpush1.bf16.msra.mxu0 0
        %5058 = vmatprep.subr.bf16.mxu0 0
        %5059 = vmatpush1.bf16.msra.mxu0 0
        %5060 = vmatprep.subr.bf16.mxu0 0
        %5061 = vmatpush1.bf16.msra.mxu0 0
        %5062 = vmatprep.subr.bf16.mxu0 0
        %5063 = vmatpush1.bf16.msra.mxu0 0
        %5064 = vmatprep.subr.bf16.mxu0 0
        %5065 = vmatpush1.bf16.msra.mxu0 0
        %5066 = vmatprep.subr.bf16.mxu0 0
        %5067 = vmatpush1.bf16.msra.mxu0 0
        %5068 = vmatprep.subr.bf16.mxu0 0
        %5069 = vmatpush1.bf16.msra.mxu0 0
        %5070 = vmatprep.subr.bf16.mxu0 0
        %5071 = vmatpush1.bf16.msra.mxu0 0
        %5072 = vmatprep.subr.bf16.mxu0 0
        %5073 = vmatpush1.bf16.msra.mxu0 0
        %5074 = vmatprep.mubr.bf16.mxu0 0
        %5075 = vmatmul.mubr.bf16.gmra.mrb[0].mxu0 %v4893
        %v5076 = vpop.f32.mrb[0].mxu0
        %v5077 = vadd.f32 0.0, %v5076
        %v5078 = vpop.f32.mrb[0].mxu0
        %v5079 = vpop.f32.mrb[0].mxu0
        %v5080 = vadd.f32 0.0, %v5079
        %v5081 = vpop.f32.mrb[0].mxu0
        %5082 = vmatprep.mubr.bf16.mxu0 0
        %5083 = vmatmul.mubr.bf16.gmra.mrb[0].mxu0 %v4896
        %v5084 = vpop.f32.mrb[0].mxu0
        %v5085 = vadd.f32 0.0, %v5084
        %v5086 = vpop.f32.mrb[0].mxu0
        %v5087 = vpop.f32.mrb[0].mxu0
        %v5088 = vadd.f32 0.0, %v5087
        %v5089 = vpop.f32.mrb[0].mxu0
        %5090 = vmatprep.mubr.bf16.mxu0 0
        %5091 = vmatmul.mubr.bf16.gmra.mrb[0].mxu0 %v4899
        %v5092 = vpop.f32.mrb[0].mxu0
        %v5093 = vadd.f32 0.0, %v5092
        %v5094 = vpop.f32.mrb[0].mxu0
        %v5095 = vpop.f32.mrb[0].mxu0
        %v5096 = vadd.f32 0.0, %v5095
        %v5097 = vpop.f32.mrb[0].mxu0
        %5098 = vmatprep.mubr.bf16.mxu0 0
        %5099 = vmatmul.mubr.bf16.gmra.mrb[0].mxu0 %v4902
        %v5100 = vpop.f32.mrb[0].mxu0
        %v5101 = vadd.f32 0.0, %v5100
        %v5102 = vpop.f32.mrb[0].mxu0
        %v5103 = vpop.f32.mrb[0].mxu0
        %v5104 = vadd.f32 0.0, %v5103
        %v5105 = vpop.f32.mrb[0].mxu0
        %5106 = vmatprep.mubr.bf16.mxu0 0
        %5107 = vmatmul.mubr.bf16.gmra.mrb[0].mxu0 %v4905
        %v5108 = vpop.f32.mrb[0].mxu0
        %v5109 = vadd.f32 0.0, %v5108
        %v5110 = vpop.f32.mrb[0].mxu0
        %v5111 = vpop.f32.mrb[0].mxu0
        %v5112 = vadd.f32 0.0, %v5111
        %v5113 = vpop.f32.mrb[0].mxu0
        %5114 = vmatprep.mubr.bf16.mxu0 0
        %5115 = vmatmul.mubr.bf16.gmra.mrb[0].mxu0 %v4908
        %v5116 = vpop.f32.mrb[0].mxu0
        %v5117 = vadd.f32 0.0, %v5116
        %v5118 = vpop.f32.mrb[0].mxu0
        %v5119 = vpop.f32.mrb[0].mxu0
        %v5120 = vadd.f32 0.0, %v5119
        %v5121 = vpop.f32.mrb[0].mxu0
        %5122 = vmatprep.mubr.bf16.mxu0 0
        %5123 = vmatmul.mubr.bf16.gmra.mrb[0].mxu0 %v4911
        %v5124 = vpop.f32.mrb[0].mxu0
        %v5125 = vadd.f32 0.0, %v5124
        %v5126 = vpop.f32.mrb[0].mxu0
        %v5127 = vpop.f32.mrb[0].mxu0
        %v5128 = vadd.f32 0.0, %v5127
        %v5129 = vpop.f32.mrb[0].mxu0
        %5130 = vmatprep.mubr.bf16.mxu0 0
        %5131 = vmatmul.mubr.bf16.gmra.mrb[0].mxu0 %v5037
        %v5132 = vpop.f32.mrb[0].mxu0
        %v5133 = vadd.f32 0.0, %v5132
        %v5134 = vpop.f32.mrb[0].mxu0
        %v5135 = vpop.f32.mrb[0].mxu0
        %v5136 = vadd.f32 0.0, %v5135
        %v5137 = vpop.f32.mrb[0].mxu0
        %5138 = vdwg.mxu0
        %v5139 = vadd.f32 %v5013, %v5077
        %v5140 = vadd.f32 %v5014, %v5080
        %v5141 = vadd.f32 %v5015, %v5085
        %v5142 = vadd.f32 %v5016, %v5088
        %v5143 = vadd.f32 %v5017, %v5093
        %v5144 = vadd.f32 %v5018, %v5096
        %v5145 = vadd.f32 %v5019, %v5101
        %v5146 = vadd.f32 %v5020, %v5104
        %v5147 = vadd.f32 %v5021, %v5109
        %v5148 = vadd.f32 %v5022, %v5112
        %v5149 = vadd.f32 %v5023, %v5117
        %v5150 = vadd.f32 %v5024, %v5120
        %v5151 = vadd.f32 %v5025, %v5125
        %v5152 = vadd.f32 %v5026, %v5128
        %v5153 = vadd.f32 %v5027, %v5133
        %v5154 = vadd.f32 %v5028, %v5136
        %v5157 = vrot.slane %v3998, 1
        %v5158 = vrot.slane %v3999, 1
        %v5159 = vsel %vm4862, %v5157, %v5158
        %s5160 = scalar_lea.vmem %s3, 16
        %v5161 = vld [vmem:[%s5160] sm:$0x3]
        %v5163 = vsel %vm504, %v5159, 0
        %v5166 = vsel %vm565, %v5161, 0
        %5168 = vmatprep.subr.bf16.mxu0 0
        %5169 = vmatpush1.bf16.msra.mxu0 %v5166
        %5170 = vmatprep.subr.bf16.mxu0 0
        %5171 = vmatpush1.bf16.msra.mxu0 0
        %5172 = vmatprep.subr.bf16.mxu0 0
        %5173 = vmatpush1.bf16.msra.mxu0 0
        %5174 = vmatprep.subr.bf16.mxu0 0
        %5175 = vmatpush1.bf16.msra.mxu0 0
        %5176 = vmatprep.subr.bf16.mxu0 0
        %5177 = vmatpush1.bf16.msra.mxu0 0
        %5178 = vmatprep.subr.bf16.mxu0 0
        %5179 = vmatpush1.bf16.msra.mxu0 0
        %5180 = vmatprep.subr.bf16.mxu0 0
        %5181 = vmatpush1.bf16.msra.mxu0 0
        %5182 = vmatprep.subr.bf16.mxu0 0
        %5183 = vmatpush1.bf16.msra.mxu0 0
        %5184 = vmatprep.subr.bf16.mxu0 0
        %5185 = vmatpush1.bf16.msra.mxu0 0
        %5186 = vmatprep.subr.bf16.mxu0 0
        %5187 = vmatpush1.bf16.msra.mxu0 0
        %5188 = vmatprep.subr.bf16.mxu0 0
        %5189 = vmatpush1.bf16.msra.mxu0 0
        %5190 = vmatprep.subr.bf16.mxu0 0
        %5191 = vmatpush1.bf16.msra.mxu0 0
        %5192 = vmatprep.subr.bf16.mxu0 0
        %5193 = vmatpush1.bf16.msra.mxu0 0
        %5194 = vmatprep.subr.bf16.mxu0 0
        %5195 = vmatpush1.bf16.msra.mxu0 0
        %5196 = vmatprep.subr.bf16.mxu0 0
        %5197 = vmatpush1.bf16.msra.mxu0 0
        %5198 = vmatprep.subr.bf16.mxu0 0
        %5199 = vmatpush1.bf16.msra.mxu0 0
        %5200 = vmatprep.mubr.bf16.mxu0 0
        %5201 = vmatmul.mubr.bf16.gmra.mrb[0].mxu0 %v4896
        %v5202 = vpop.f32.mrb[0].mxu0
        %v5203 = vadd.f32 0.0, %v5202
        %v5204 = vpop.f32.mrb[0].mxu0
        %v5205 = vpop.f32.mrb[0].mxu0
        %v5206 = vadd.f32 0.0, %v5205
        %v5207 = vpop.f32.mrb[0].mxu0
        %5208 = vmatprep.mubr.bf16.mxu0 0
        %5209 = vmatmul.mubr.bf16.gmra.mrb[0].mxu0 %v4899
        %v5210 = vpop.f32.mrb[0].mxu0
        %v5211 = vadd.f32 0.0, %v5210
        %v5212 = vpop.f32.mrb[0].mxu0
        %v5213 = vpop.f32.mrb[0].mxu0
        %v5214 = vadd.f32 0.0, %v5213
        %v5215 = vpop.f32.mrb[0].mxu0
        %5216 = vmatprep.mubr.bf16.mxu0 0
        %5217 = vmatmul.mubr.bf16.gmra.mrb[0].mxu0 %v4902
        %v5218 = vpop.f32.mrb[0].mxu0
        %v5219 = vadd.f32 0.0, %v5218
        %v5220 = vpop.f32.mrb[0].mxu0
        %v5221 = vpop.f32.mrb[0].mxu0
        %v5222 = vadd.f32 0.0, %v5221
        %v5223 = vpop.f32.mrb[0].mxu0
        %5224 = vmatprep.mubr.bf16.mxu0 0
        %5225 = vmatmul.mubr.bf16.gmra.mrb[0].mxu0 %v4905
        %v5226 = vpop.f32.mrb[0].mxu0
        %v5227 = vadd.f32 0.0, %v5226
        %v5228 = vpop.f32.mrb[0].mxu0
        %v5229 = vpop.f32.mrb[0].mxu0
        %v5230 = vadd.f32 0.0, %v5229
        %v5231 = vpop.f32.mrb[0].mxu0
        %5232 = vmatprep.mubr.bf16.mxu0 0
        %5233 = vmatmul.mubr.bf16.gmra.mrb[0].mxu0 %v4908
        %v5234 = vpop.f32.mrb[0].mxu0
        %v5235 = vadd.f32 0.0, %v5234
        %v5236 = vpop.f32.mrb[0].mxu0
        %v5237 = vpop.f32.mrb[0].mxu0
        %v5238 = vadd.f32 0.0, %v5237
        %v5239 = vpop.f32.mrb[0].mxu0
        %5240 = vmatprep.mubr.bf16.mxu0 0
        %5241 = vmatmul.mubr.bf16.gmra.mrb[0].mxu0 %v4911
        %v5242 = vpop.f32.mrb[0].mxu0
        %v5243 = vadd.f32 0.0, %v5242
        %v5244 = vpop.f32.mrb[0].mxu0
        %v5245 = vpop.f32.mrb[0].mxu0
        %v5246 = vadd.f32 0.0, %v5245
        %v5247 = vpop.f32.mrb[0].mxu0
        %5248 = vmatprep.mubr.bf16.mxu0 0
        %5249 = vmatmul.mubr.bf16.gmra.mrb[0].mxu0 %v5037
        %v5250 = vpop.f32.mrb[0].mxu0
        %v5251 = vadd.f32 0.0, %v5250
        %v5252 = vpop.f32.mrb[0].mxu0
        %v5253 = vpop.f32.mrb[0].mxu0
        %v5254 = vadd.f32 0.0, %v5253
        %v5255 = vpop.f32.mrb[0].mxu0
        %5256 = vmatprep.mubr.bf16.mxu0 0
        %5257 = vmatmul.mubr.bf16.gmra.mrb[0].mxu0 %v5163
        %v5258 = vpop.f32.mrb[0].mxu0
        %v5259 = vadd.f32 0.0, %v5258
        %v5260 = vpop.f32.mrb[0].mxu0
        %v5261 = vpop.f32.mrb[0].mxu0
        %v5262 = vadd.f32 0.0, %v5261
        %v5263 = vpop.f32.mrb[0].mxu0
        %5264 = vdwg.mxu0
        %v5265 = vadd.f32 %v5139, %v5203
        %v5266 = vadd.f32 %v5140, %v5206
        %v5267 = vadd.f32 %v5141, %v5211
        %v5268 = vadd.f32 %v5142, %v5214
        %v5269 = vadd.f32 %v5143, %v5219
        %v5270 = vadd.f32 %v5144, %v5222
        %v5271 = vadd.f32 %v5145, %v5227
        %v5272 = vadd.f32 %v5146, %v5230
        %v5273 = vadd.f32 %v5147, %v5235
        %v5274 = vadd.f32 %v5148, %v5238
        %v5275 = vadd.f32 %v5149, %v5243
        %v5276 = vadd.f32 %v5150, %v5246
        %v5277 = vadd.f32 %v5151, %v5251
        %v5278 = vadd.f32 %v5152, %v5254
        %v5279 = vadd.f32 %v5153, %v5259
        %v5280 = vadd.f32 %v5154, %v5262
        %v5305 = vrot.slane %v291, 5
        %v5306 = vrot.slane %v5305, 4
        %v5307 = vrot.slane %v292, 5
        %v5308 = vsel %vm2629, %v5306, %v5307
        %v5309 = vrot.slane %v5307, 4
        %v5310 = vrot.slane %v293, 5
        %v5311 = vsel %vm2629, %v5309, %v5310
        %v5312 = vrot.slane %v296, 5
        %v5313 = vrot.slane %v5312, 4
        %v5314 = vrot.slane %v297, 5
        %v5315 = vsel %vm2629, %v5313, %v5314
        %v5316 = vrot.slane %v5314, 4
        %v5317 = vrot.slane %v298, 5
        %v5318 = vsel %vm2629, %v5316, %v5317
        %v5319 = vrot.slane %v301, 5
        %v5320 = vrot.slane %v5319, 4
        %v5321 = vrot.slane %v302, 5
        %v5322 = vsel %vm2629, %v5320, %v5321
        %v5323 = vrot.slane %v5321, 4
        %v5324 = vrot.slane %v303, 5
        %v5325 = vsel %vm2629, %v5323, %v5324
        %v5326 = vrot.slane %v306, 5
        %v5327 = vrot.slane %v5326, 4
        %v5328 = vrot.slane %v307, 5
        %v5329 = vsel %vm2629, %v5327, %v5328
        %v5330 = vrot.slane %v5328, 4
        %v5331 = vrot.slane %v308, 5
        %v5332 = vsel %vm2629, %v5330, %v5331
        %v5333 = vrot.slane %v311, 5
        %v5334 = vrot.slane %v5333, 4
        %v5335 = vrot.slane %v312, 5
        %v5336 = vsel %vm2629, %v5334, %v5335
        %v5337 = vrot.slane %v5335, 4
        %v5338 = vrot.slane %v313, 5
        %v5339 = vsel %vm2629, %v5337, %v5338
        %v5340 = vrot.slane %v316, 5
        %v5341 = vrot.slane %v5340, 4
        %v5342 = vrot.slane %v317, 5
        %v5343 = vsel %vm2629, %v5341, %v5342
        %v5344 = vrot.slane %v5342, 4
        %v5345 = vrot.slane %v318, 5
        %v5346 = vsel %vm2629, %v5344, %v5345
        %v5347 = vrot.slane %v321, 5
        %v5348 = vrot.slane %v5347, 4
        %v5349 = vrot.slane %v322, 5
        %v5350 = vsel %vm2629, %v5348, %v5349
        %v5351 = vrot.slane %v5349, 4
        %v5352 = vrot.slane %v323, 5
        %v5353 = vsel %vm2629, %v5351, %v5352
        %v5354 = vrot.slane %v326, 5
        %v5355 = vrot.slane %v5354, 4
        %v5356 = vrot.slane %v327, 5
        %v5357 = vsel %vm2629, %v5355, %v5356
        %v5358 = vrot.slane %v5356, 4
        %v5359 = vrot.slane %v328, 5
        %v5360 = vsel %vm2629, %v5358, %v5359
        %v5361 = vld [vmem:[%s4] sm:$0x3]
        %v5362 = vunpack.c.l.b16 %v5308
        %v5363 = vunpack.c.l.b16 %v5311
        %v5364 = vunpack.c.l.b16 %v5315
        %v5365 = vunpack.c.l.b16 %v5318
        %v5366 = vunpack.c.l.b16 %v5322
        %v5367 = vunpack.c.l.b16 %v5325
        %v5368 = vunpack.c.l.b16 %v5329
        %v5369 = vunpack.c.l.b16 %v5332
        %v5370 = vunpack.c.l.b16 %v5336
        %v5371 = vunpack.c.l.b16 %v5339
        %v5372 = vunpack.c.l.b16 %v5343
        %v5373 = vunpack.c.l.b16 %v5346
        %v5374 = vunpack.c.l.b16 %v5350
        %v5375 = vunpack.c.l.b16 %v5353
        %v5376 = vunpack.c.l.b16 %v5357
        %v5377 = vunpack.c.l.b16 %v5360
        %v5378 = vpack.c.b16 %v5363, %v5362
        %v5379 = vpack.c.b16 %v5365, %v5364
        %v5380 = vpack.c.b16 %v5367, %v5366
        %v5381 = vpack.c.b16 %v5369, %v5368
        %v5382 = vpack.c.b16 %v5371, %v5370
        %v5383 = vpack.c.b16 %v5373, %v5372
        %v5384 = vpack.c.b16 %v5375, %v5374
        %v5385 = vpack.c.b16 %v5377, %v5376
        %v5387 = vsel %vm504, %v5378, 0
        %v5390 = vsel %vm504, %v5379, 0
        %v5393 = vsel %vm504, %v5380, 0
        %v5396 = vsel %vm504, %v5381, 0
        %v5399 = vsel %vm504, %v5382, 0
        %v5402 = vsel %vm504, %v5383, 0
        %v5405 = vsel %vm504, %v5384, 0
        %v5408 = vsel %vm504, %v5385, 0
        %v5411 = vsel %vm565, %v5361, 0
        %5413 = vmatprep.subr.bf16.mxu0 0
        %5414 = vmatpush1.bf16.msra.mxu0 %v5411
        %5415 = vmatprep.subr.bf16.mxu0 0
        %5416 = vmatpush1.bf16.msra.mxu0 0
        %5417 = vmatprep.subr.bf16.mxu0 0
        %5418 = vmatpush1.bf16.msra.mxu0 0
        %5419 = vmatprep.subr.bf16.mxu0 0
        %5420 = vmatpush1.bf16.msra.mxu0 0
        %5421 = vmatprep.subr.bf16.mxu0 0
        %5422 = vmatpush1.bf16.msra.mxu0 0
        %5423 = vmatprep.subr.bf16.mxu0 0
        %5424 = vmatpush1.bf16.msra.mxu0 0
        %5425 = vmatprep.subr.bf16.mxu0 0
        %5426 = vmatpush1.bf16.msra.mxu0 0
        %5427 = vmatprep.subr.bf16.mxu0 0
        %5428 = vmatpush1.bf16.msra.mxu0 0
        %5429 = vmatprep.subr.bf16.mxu0 0
        %5430 = vmatpush1.bf16.msra.mxu0 0
        %5431 = vmatprep.subr.bf16.mxu0 0
        %5432 = vmatpush1.bf16.msra.mxu0 0
        %5433 = vmatprep.subr.bf16.mxu0 0
        %5434 = vmatpush1.bf16.msra.mxu0 0
        %5435 = vmatprep.subr.bf16.mxu0 0
        %5436 = vmatpush1.bf16.msra.mxu0 0
        %5437 = vmatprep.subr.bf16.mxu0 0
        %5438 = vmatpush1.bf16.msra.mxu0 0
        %5439 = vmatprep.subr.bf16.mxu0 0
        %5440 = vmatpush1.bf16.msra.mxu0 0
        %5441 = vmatprep.subr.bf16.mxu0 0
        %5442 = vmatpush1.bf16.msra.mxu0 0
        %5443 = vmatprep.subr.bf16.mxu0 0
        %5444 = vmatpush1.bf16.msra.mxu0 0
        %5445 = vmatprep.mubr.bf16.mxu0 0
        %5446 = vmatmul.mubr.bf16.gmra.mrb[0].mxu0 %v5387
        %v5447 = vpop.f32.mrb[0].mxu0
        %v5448 = vadd.f32 0.0, %v5447
        %v5449 = vpop.f32.mrb[0].mxu0
        %v5450 = vpop.f32.mrb[0].mxu0
        %v5451 = vadd.f32 0.0, %v5450
        %v5452 = vpop.f32.mrb[0].mxu0
        %5453 = vmatprep.mubr.bf16.mxu0 0
        %5454 = vmatmul.mubr.bf16.gmra.mrb[0].mxu0 %v5390
        %v5455 = vpop.f32.mrb[0].mxu0
        %v5456 = vadd.f32 0.0, %v5455
        %v5457 = vpop.f32.mrb[0].mxu0
        %v5458 = vpop.f32.mrb[0].mxu0
        %v5459 = vadd.f32 0.0, %v5458
        %v5460 = vpop.f32.mrb[0].mxu0
        %5461 = vmatprep.mubr.bf16.mxu0 0
        %5462 = vmatmul.mubr.bf16.gmra.mrb[0].mxu0 %v5393
        %v5463 = vpop.f32.mrb[0].mxu0
        %v5464 = vadd.f32 0.0, %v5463
        %v5465 = vpop.f32.mrb[0].mxu0
        %v5466 = vpop.f32.mrb[0].mxu0
        %v5467 = vadd.f32 0.0, %v5466
        %v5468 = vpop.f32.mrb[0].mxu0
        %5469 = vmatprep.mubr.bf16.mxu0 0
        %5470 = vmatmul.mubr.bf16.gmra.mrb[0].mxu0 %v5396
        %v5471 = vpop.f32.mrb[0].mxu0
        %v5472 = vadd.f32 0.0, %v5471
        %v5473 = vpop.f32.mrb[0].mxu0
        %v5474 = vpop.f32.mrb[0].mxu0
        %v5475 = vadd.f32 0.0, %v5474
        %v5476 = vpop.f32.mrb[0].mxu0
        %5477 = vmatprep.mubr.bf16.mxu0 0
        %5478 = vmatmul.mubr.bf16.gmra.mrb[0].mxu0 %v5399
        %v5479 = vpop.f32.mrb[0].mxu0
        %v5480 = vadd.f32 0.0, %v5479
        %v5481 = vpop.f32.mrb[0].mxu0
        %v5482 = vpop.f32.mrb[0].mxu0
        %v5483 = vadd.f32 0.0, %v5482
        %v5484 = vpop.f32.mrb[0].mxu0
        %5485 = vmatprep.mubr.bf16.mxu0 0
        %5486 = vmatmul.mubr.bf16.gmra.mrb[0].mxu0 %v5402
        %v5487 = vpop.f32.mrb[0].mxu0
        %v5488 = vadd.f32 0.0, %v5487
        %v5489 = vpop.f32.mrb[0].mxu0
        %v5490 = vpop.f32.mrb[0].mxu0
        %v5491 = vadd.f32 0.0, %v5490
        %v5492 = vpop.f32.mrb[0].mxu0
        %5493 = vmatprep.mubr.bf16.mxu0 0
        %5494 = vmatmul.mubr.bf16.gmra.mrb[0].mxu0 %v5405
        %v5495 = vpop.f32.mrb[0].mxu0
        %v5496 = vadd.f32 0.0, %v5495
        %v5497 = vpop.f32.mrb[0].mxu0
        %v5498 = vpop.f32.mrb[0].mxu0
        %v5499 = vadd.f32 0.0, %v5498
        %v5500 = vpop.f32.mrb[0].mxu0
        %5501 = vmatprep.mubr.bf16.mxu0 0
        %5502 = vmatmul.mubr.bf16.gmra.mrb[0].mxu0 %v5408
        %v5503 = vpop.f32.mrb[0].mxu0
        %v5504 = vadd.f32 0.0, %v5503
        %v5505 = vpop.f32.mrb[0].mxu0
        %v5506 = vpop.f32.mrb[0].mxu0
        %v5507 = vadd.f32 0.0, %v5506
        %v5508 = vpop.f32.mrb[0].mxu0
        %5509 = vdwg.mxu0
        %v5510 = vadd.f32 %v5265, %v5448
        %v5511 = vadd.f32 %v5266, %v5451
        %v5512 = vadd.f32 %v5267, %v5456
        %v5513 = vadd.f32 %v5268, %v5459
        %v5514 = vadd.f32 %v5269, %v5464
        %v5515 = vadd.f32 %v5270, %v5467
        %v5516 = vadd.f32 %v5271, %v5472
        %v5517 = vadd.f32 %v5272, %v5475
        %v5518 = vadd.f32 %v5273, %v5480
        %v5519 = vadd.f32 %v5274, %v5483
        %v5520 = vadd.f32 %v5275, %v5488
        %v5521 = vadd.f32 %v5276, %v5491
        %v5522 = vadd.f32 %v5277, %v5496
        %v5523 = vadd.f32 %v5278, %v5499
        %v5524 = vadd.f32 %v5279, %v5504
        %v5525 = vadd.f32 %v5280, %v5507
        %v5526 = vadd.f32 %v5510, %v5512
        %v5527 = vadd.f32 %v5511, %v5513
        %v5528 = vadd.f32 %v5514, %v5516
        %v5529 = vadd.f32 %v5515, %v5517
        %v5530 = vadd.f32 %v5518, %v5520
        %v5531 = vadd.f32 %v5519, %v5521
        %v5532 = vadd.f32 %v5522, %v5524
        %v5533 = vadd.f32 %v5523, %v5525
        %v5542 = vcombine.high %v5526, %v5526
        %v5544 = vunpack.c.l.s4 1983009808
        %v5545 = vunpack.c.0.s8 %v5544
        %v5546 = vlaneseq
        %v5547 = vshrl.u32 %v5546, 7
        %v5548 = vsub.s32 %v5545, %v5547
        %v5549 = vrot.slane %v5526, %v5548
        %v5551 = vunpack.c.l.s4 1983009808
        %v5552 = vunpack.c.0.s8 %v5551
        %v5553 = vlaneseq
        %v5554 = vshrl.u32 %v5553, 7
        %v5555 = vsub.s32 %v5552, %v5554
        %v5556 = vrot.slane %v5542, %v5555
        %v5557 = vcombine.high %v5549, %v5549
        %v5558 = vcombine.high %v5556, %v5556
        %v5559 = vcombine.high %v5527, %v5527
        %v5561 = vunpack.c.l.s4 1983009808
        %v5562 = vunpack.c.0.s8 %v5561
        %v5563 = vlaneseq
        %v5564 = vshrl.u32 %v5563, 7
        %v5565 = vsub.s32 %v5562, %v5564
        %v5566 = vrot.slane %v5527, %v5565
        %v5568 = vunpack.c.l.s4 1983009808
        %v5569 = vunpack.c.0.s8 %v5568
        %v5570 = vlaneseq
        %v5571 = vshrl.u32 %v5570, 7
        %v5572 = vsub.s32 %v5569, %v5571
        %v5573 = vrot.slane %v5559, %v5572
        %v5574 = vcombine.high %v5566, %v5566
        %v5575 = vcombine.high %v5573, %v5573
        %v5576 = vcombine.high %v5528, %v5528
        %v5578 = vunpack.c.l.s4 1983009808
        %v5579 = vunpack.c.0.s8 %v5578
        %v5580 = vlaneseq
        %v5581 = vshrl.u32 %v5580, 7
        %v5582 = vsub.s32 %v5579, %v5581
        %v5583 = vrot.slane %v5528, %v5582
        %v5585 = vunpack.c.l.s4 1983009808
        %v5586 = vunpack.c.0.s8 %v5585
        %v5587 = vlaneseq
        %v5588 = vshrl.u32 %v5587, 7
        %v5589 = vsub.s32 %v5586, %v5588
        %v5590 = vrot.slane %v5576, %v5589
        %v5591 = vcombine.high %v5583, %v5583
        %v5592 = vcombine.high %v5590, %v5590
        %v5593 = vcombine.high %v5529, %v5529
        %v5595 = vunpack.c.l.s4 1983009808
        %v5596 = vunpack.c.0.s8 %v5595
        %v5597 = vlaneseq
        %v5598 = vshrl.u32 %v5597, 7
        %v5599 = vsub.s32 %v5596, %v5598
        %v5600 = vrot.slane %v5529, %v5599
        %v5602 = vunpack.c.l.s4 1983009808
        %v5603 = vunpack.c.0.s8 %v5602
        %v5604 = vlaneseq
        %v5605 = vshrl.u32 %v5604, 7
        %v5606 = vsub.s32 %v5603, %v5605
        %v5607 = vrot.slane %v5593, %v5606
        %v5608 = vcombine.high %v5600, %v5600
        %v5609 = vcombine.high %v5607, %v5607
        %v5610 = vcombine.high %v5530, %v5530
        %v5612 = vunpack.c.l.s4 1983009808
        %v5613 = vunpack.c.0.s8 %v5612
        %v5614 = vlaneseq
        %v5615 = vshrl.u32 %v5614, 7
        %v5616 = vsub.s32 %v5613, %v5615
        %v5617 = vrot.slane %v5530, %v5616
        %v5619 = vunpack.c.l.s4 1983009808
        %v5620 = vunpack.c.0.s8 %v5619
        %v5621 = vlaneseq
        %v5622 = vshrl.u32 %v5621, 7
        %v5623 = vsub.s32 %v5620, %v5622
        %v5624 = vrot.slane %v5610, %v5623
        %v5625 = vcombine.high %v5617, %v5617
        %v5626 = vcombine.high %v5624, %v5624
        %v5627 = vcombine.high %v5531, %v5531
        %v5629 = vunpack.c.l.s4 1983009808
        %v5630 = vunpack.c.0.s8 %v5629
        %v5631 = vlaneseq
        %v5632 = vshrl.u32 %v5631, 7
        %v5633 = vsub.s32 %v5630, %v5632
        %v5634 = vrot.slane %v5531, %v5633
        %v5636 = vunpack.c.l.s4 1983009808
        %v5637 = vunpack.c.0.s8 %v5636
        %v5638 = vlaneseq
        %v5639 = vshrl.u32 %v5638, 7
        %v5640 = vsub.s32 %v5637, %v5639
        %v5641 = vrot.slane %v5627, %v5640
        %v5642 = vcombine.high %v5634, %v5634
        %v5643 = vcombine.high %v5641, %v5641
        %v5644 = vcombine.high %v5532, %v5532
        %v5646 = vunpack.c.l.s4 1983009808
        %v5647 = vunpack.c.0.s8 %v5646
        %v5648 = vlaneseq
        %v5649 = vshrl.u32 %v5648, 7
        %v5650 = vsub.s32 %v5647, %v5649
        %v5651 = vrot.slane %v5532, %v5650
        %v5653 = vunpack.c.l.s4 1983009808
        %v5654 = vunpack.c.0.s8 %v5653
        %v5655 = vlaneseq
        %v5656 = vshrl.u32 %v5655, 7
        %v5657 = vsub.s32 %v5654, %v5656
        %v5658 = vrot.slane %v5644, %v5657
        %v5659 = vcombine.high %v5651, %v5651
        %v5660 = vcombine.high %v5658, %v5658
        %v5661 = vcombine.high %v5533, %v5533
        %v5663 = vunpack.c.l.s4 1983009808
        %v5664 = vunpack.c.0.s8 %v5663
        %v5665 = vlaneseq
        %v5666 = vshrl.u32 %v5665, 7
        %v5667 = vsub.s32 %v5664, %v5666
        %v5668 = vrot.slane %v5533, %v5667
        %v5670 = vunpack.c.l.s4 1983009808
        %v5671 = vunpack.c.0.s8 %v5670
        %v5672 = vlaneseq
        %v5673 = vshrl.u32 %v5672, 7
        %v5674 = vsub.s32 %v5671, %v5673
        %v5675 = vrot.slane %v5661, %v5674
        %v5676 = vcombine.high %v5668, %v5668
        %v5677 = vcombine.high %v5675, %v5675
        %v5710 = vrot.slane %v5549, 7
        %v5711 = vrot.slane %v5710, 2
        %v5712 = vrot.slane %v5557, 7
        %v5713 = vrot.slane %v5712, 2
        %v5714 = vrot.slane %v5556, 7
        %v5715 = vrot.slane %v5714, 2
        %v5716 = vrot.slane %v5558, 7
        %v5717 = vrot.slane %v5716, 2
        %v5718 = vrot.slane %v5566, 7
        %v5719 = vrot.slane %v5718, 2
        %v5720 = vrot.slane %v5574, 7
        %v5721 = vrot.slane %v5720, 2
        %v5722 = vrot.slane %v5573, 7
        %v5723 = vrot.slane %v5722, 2
        %v5724 = vrot.slane %v5575, 7
        %v5725 = vrot.slane %v5724, 2
        %v5726 = vrot.slane %v5583, 7
        %v5727 = vrot.slane %v5726, 2
        %v5728 = vrot.slane %v5591, 7
        %v5729 = vrot.slane %v5728, 2
        %v5730 = vrot.slane %v5590, 7
        %v5731 = vrot.slane %v5730, 2
        %v5732 = vrot.slane %v5592, 7
        %v5733 = vrot.slane %v5732, 2
        %v5734 = vrot.slane %v5600, 7
        %v5735 = vrot.slane %v5734, 2
        %v5736 = vrot.slane %v5608, 7
        %v5737 = vrot.slane %v5736, 2
        %v5738 = vrot.slane %v5607, 7
        %v5739 = vrot.slane %v5738, 2
        %v5740 = vrot.slane %v5609, 7
        %v5741 = vrot.slane %v5740, 2
        %v5742 = vrot.slane %v5617, 7
        %v5743 = vrot.slane %v5742, 2
        %v5744 = vrot.slane %v5625, 7
        %v5745 = vrot.slane %v5744, 2
        %v5746 = vrot.slane %v5624, 7
        %v5747 = vrot.slane %v5746, 2
        %v5748 = vrot.slane %v5626, 7
        %v5749 = vrot.slane %v5748, 2
        %v5750 = vrot.slane %v5634, 7
        %v5751 = vrot.slane %v5750, 2
        %v5752 = vrot.slane %v5642, 7
        %v5753 = vrot.slane %v5752, 2
        %v5754 = vrot.slane %v5641, 7
        %v5755 = vrot.slane %v5754, 2
        %v5756 = vrot.slane %v5643, 7
        %v5757 = vrot.slane %v5756, 2
        %v5758 = vrot.slane %v5651, 7
        %v5759 = vrot.slane %v5758, 2
        %v5760 = vrot.slane %v5659, 7
        %v5761 = vrot.slane %v5760, 2
        %v5762 = vrot.slane %v5658, 7
        %v5763 = vrot.slane %v5762, 2
        %v5764 = vrot.slane %v5660, 7
        %v5765 = vrot.slane %v5764, 2
        %v5766 = vrot.slane %v5668, 7
        %v5767 = vrot.slane %v5766, 2
        %v5768 = vrot.slane %v5676, 7
        %v5769 = vrot.slane %v5768, 2
        %v5770 = vrot.slane %v5675, 7
        %v5771 = vrot.slane %v5770, 2
        %v5772 = vrot.slane %v5677, 7
        %v5773 = vrot.slane %v5772, 2
        %v5806 = vadd.f32 %v5549, %v5711
        %v5807 = vadd.f32 %v5557, %v5713
        %v5808 = vadd.f32 %v5556, %v5715
        %v5809 = vadd.f32 %v5558, %v5717
        %v5810 = vadd.f32 %v5566, %v5719
        %v5811 = vadd.f32 %v5574, %v5721
        %v5812 = vadd.f32 %v5573, %v5723
        %v5813 = vadd.f32 %v5575, %v5725
        %v5814 = vadd.f32 %v5583, %v5727
        %v5815 = vadd.f32 %v5591, %v5729
        %v5816 = vadd.f32 %v5590, %v5731
        %v5817 = vadd.f32 %v5592, %v5733
        %v5818 = vadd.f32 %v5600, %v5735
        %v5819 = vadd.f32 %v5608, %v5737
        %v5820 = vadd.f32 %v5607, %v5739
        %v5821 = vadd.f32 %v5609, %v5741
        %v5822 = vadd.f32 %v5617, %v5743
        %v5823 = vadd.f32 %v5625, %v5745
        %v5824 = vadd.f32 %v5624, %v5747
        %v5825 = vadd.f32 %v5626, %v5749
        %v5826 = vadd.f32 %v5634, %v5751
        %v5827 = vadd.f32 %v5642, %v5753
        %v5828 = vadd.f32 %v5641, %v5755
        %v5829 = vadd.f32 %v5643, %v5757
        %v5830 = vadd.f32 %v5651, %v5759
        %v5831 = vadd.f32 %v5659, %v5761
        %v5832 = vadd.f32 %v5658, %v5763
        %v5833 = vadd.f32 %v5660, %v5765
        %v5834 = vadd.f32 %v5668, %v5767
        %v5835 = vadd.f32 %v5676, %v5769
        %v5836 = vadd.f32 %v5675, %v5771
        %v5837 = vadd.f32 %v5677, %v5773
        %v5838 = vmul.f32 %v5806, 0.25
        %v5839 = vmul.f32 %v5807, 0.25
        %v5840 = vmul.f32 %v5808, 0.25
        %v5841 = vmul.f32 %v5809, 0.25
        %v5842 = vmul.f32 %v5810, 0.25
        %v5843 = vmul.f32 %v5811, 0.25
        %v5844 = vmul.f32 %v5812, 0.25
        %v5845 = vmul.f32 %v5813, 0.25
        %v5846 = vmul.f32 %v5814, 0.25
        %v5847 = vmul.f32 %v5815, 0.25
        %v5848 = vmul.f32 %v5816, 0.25
        %v5849 = vmul.f32 %v5817, 0.25
        %v5850 = vmul.f32 %v5818, 0.25
        %v5851 = vmul.f32 %v5819, 0.25
        %v5852 = vmul.f32 %v5820, 0.25
        %v5853 = vmul.f32 %v5821, 0.25
        %v5854 = vmul.f32 %v5822, 0.25
        %v5855 = vmul.f32 %v5823, 0.25
        %v5856 = vmul.f32 %v5824, 0.25
        %v5857 = vmul.f32 %v5825, 0.25
        %v5858 = vmul.f32 %v5826, 0.25
        %v5859 = vmul.f32 %v5827, 0.25
        %v5860 = vmul.f32 %v5828, 0.25
        %v5861 = vmul.f32 %v5829, 0.25
        %v5862 = vmul.f32 %v5830, 0.25
        %v5863 = vmul.f32 %v5831, 0.25
        %v5864 = vmul.f32 %v5832, 0.25
        %v5865 = vmul.f32 %v5833, 0.25
        %v5866 = vmul.f32 %v5834, 0.25
        %v5867 = vmul.f32 %v5835, 0.25
        %v5868 = vmul.f32 %v5836, 0.25
        %v5869 = vmul.f32 %v5837, 0.25
        %v5870 = vld [vmem:[%s5] sm:$0x1]
        %v5872 = vlaneseq
        %v5873 = vshrl.u32 %v5872, 7
        %v5874 = vsub.s32 0, %v5873
        %v5875 = vrot.slane %v5870, %v5874
        %v5876 = vcombine.high %v5875, %v5875
        %v5878 = vunpack.c.l.s4 1983009808
        %v5879 = vunpack.c.0.s8 %v5878
        %v5880 = vlaneseq
        %v5881 = vshrl.u32 %v5880, 7
        %v5882 = vsub.s32 %v5879, %v5881
        %v5883 = vrot.slane %v5875, %v5882
        %v5885 = vunpack.c.l.s4 1983009808
        %v5886 = vunpack.c.0.s8 %v5885
        %v5887 = vlaneseq
        %v5888 = vshrl.u32 %v5887, 7
        %v5889 = vsub.s32 %v5886, %v5888
        %v5890 = vrot.slane %v5876, %v5889
        %v5891 = vcombine.high %v5883, %v5883
        %v5892 = vcombine.high %v5890, %v5890
        %v5893 = vrot.slane %v5883, 1
        %v5894 = vrot.slane %v5891, 1
        %v5895 = vrot.slane %v5890, 1
        %v5896 = vrot.slane %v5892, 1
        %v5905 = vadd.f32 %v5838, %v5883
        %v5906 = vadd.f32 %v5839, %v5893
        %v5907 = vadd.f32 %v5840, %v5891
        %v5908 = vadd.f32 %v5841, %v5894
        %v5909 = vadd.f32 %v5842, %v5890
        %v5910 = vadd.f32 %v5843, %v5895
        %v5911 = vadd.f32 %v5844, %v5892
        %v5912 = vadd.f32 %v5845, %v5896
        %v5913 = vadd.f32 %v5846, %v5883
        %v5914 = vadd.f32 %v5847, %v5893
        %v5915 = vadd.f32 %v5848, %v5891
        %v5916 = vadd.f32 %v5849, %v5894
        %v5917 = vadd.f32 %v5850, %v5890
        %v5918 = vadd.f32 %v5851, %v5895
        %v5919 = vadd.f32 %v5852, %v5892
        %v5920 = vadd.f32 %v5853, %v5896
        %v5921 = vadd.f32 %v5854, %v5883
        %v5922 = vadd.f32 %v5855, %v5893
        %v5923 = vadd.f32 %v5856, %v5891
        %v5924 = vadd.f32 %v5857, %v5894
        %v5925 = vadd.f32 %v5858, %v5890
        %v5926 = vadd.f32 %v5859, %v5895
        %v5927 = vadd.f32 %v5860, %v5892
        %v5928 = vadd.f32 %v5861, %v5896
        %v5929 = vadd.f32 %v5862, %v5883
        %v5930 = vadd.f32 %v5863, %v5893
        %v5931 = vadd.f32 %v5864, %v5891
        %v5932 = vadd.f32 %v5865, %v5894
        %v5933 = vadd.f32 %v5866, %v5890
        %v5934 = vadd.f32 %v5867, %v5895
        %v5935 = vadd.f32 %v5868, %v5892
        %v5936 = vadd.f32 %v5869, %v5896
        %v5969 = vlaneseq
        %v5970 = vshrl.u32 %v5969, 7
        %v5971 = vsub.s32 0, %v5970
        %v5972 = vrot.slane %v5905, %v5971
        %v5973 = vlaneseq
        %v5974 = vshrl.u32 %v5973, 7
        %v5975 = vsub.s32 0, %v5974
        %v5976 = vrot.slane %v5906, %v5975
        %v5977 = vlaneseq
        %v5978 = vshrl.u32 %v5977, 7
        %v5979 = vsub.s32 0, %v5978
        %v5980 = vrot.slane %v5907, %v5979
        %v5981 = vlaneseq
        %v5982 = vshrl.u32 %v5981, 7
        %v5983 = vsub.s32 0, %v5982
        %v5984 = vrot.slane %v5908, %v5983
        %v5985 = vlaneseq
        %v5986 = vshrl.u32 %v5985, 7
        %v5987 = vsub.s32 0, %v5986
        %v5988 = vrot.slane %v5909, %v5987
        %v5989 = vlaneseq
        %v5990 = vshrl.u32 %v5989, 7
        %v5991 = vsub.s32 0, %v5990
        %v5992 = vrot.slane %v5910, %v5991
        %v5993 = vlaneseq
        %v5994 = vshrl.u32 %v5993, 7
        %v5995 = vsub.s32 0, %v5994
        %v5996 = vrot.slane %v5911, %v5995
        %v5997 = vlaneseq
        %v5998 = vshrl.u32 %v5997, 7
        %v5999 = vsub.s32 0, %v5998
        %v6000 = vrot.slane %v5912, %v5999
        %v6001 = vlaneseq
        %v6002 = vshrl.u32 %v6001, 7
        %v6003 = vsub.s32 0, %v6002
        %v6004 = vrot.slane %v5913, %v6003
        %v6005 = vlaneseq
        %v6006 = vshrl.u32 %v6005, 7
        %v6007 = vsub.s32 0, %v6006
        %v6008 = vrot.slane %v5914, %v6007
        %v6009 = vlaneseq
        %v6010 = vshrl.u32 %v6009, 7
        %v6011 = vsub.s32 0, %v6010
        %v6012 = vrot.slane %v5915, %v6011
        %v6013 = vlaneseq
        %v6014 = vshrl.u32 %v6013, 7
        %v6015 = vsub.s32 0, %v6014
        %v6016 = vrot.slane %v5916, %v6015
        %v6017 = vlaneseq
        %v6018 = vshrl.u32 %v6017, 7
        %v6019 = vsub.s32 0, %v6018
        %v6020 = vrot.slane %v5917, %v6019
        %v6021 = vlaneseq
        %v6022 = vshrl.u32 %v6021, 7
        %v6023 = vsub.s32 0, %v6022
        %v6024 = vrot.slane %v5918, %v6023
        %v6025 = vlaneseq
        %v6026 = vshrl.u32 %v6025, 7
        %v6027 = vsub.s32 0, %v6026
        %v6028 = vrot.slane %v5919, %v6027
        %v6029 = vlaneseq
        %v6030 = vshrl.u32 %v6029, 7
        %v6031 = vsub.s32 0, %v6030
        %v6032 = vrot.slane %v5920, %v6031
        %v6033 = vlaneseq
        %v6034 = vshrl.u32 %v6033, 7
        %v6035 = vsub.s32 0, %v6034
        %v6036 = vrot.slane %v5921, %v6035
        %v6037 = vlaneseq
        %v6038 = vshrl.u32 %v6037, 7
        %v6039 = vsub.s32 0, %v6038
        %v6040 = vrot.slane %v5922, %v6039
        %v6041 = vlaneseq
        %v6042 = vshrl.u32 %v6041, 7
        %v6043 = vsub.s32 0, %v6042
        %v6044 = vrot.slane %v5923, %v6043
        %v6045 = vlaneseq
        %v6046 = vshrl.u32 %v6045, 7
        %v6047 = vsub.s32 0, %v6046
        %v6048 = vrot.slane %v5924, %v6047
        %v6049 = vlaneseq
        %v6050 = vshrl.u32 %v6049, 7
        %v6051 = vsub.s32 0, %v6050
        %v6052 = vrot.slane %v5925, %v6051
        %v6053 = vlaneseq
        %v6054 = vshrl.u32 %v6053, 7
        %v6055 = vsub.s32 0, %v6054
        %v6056 = vrot.slane %v5926, %v6055
        %v6057 = vlaneseq
        %v6058 = vshrl.u32 %v6057, 7
        %v6059 = vsub.s32 0, %v6058
        %v6060 = vrot.slane %v5927, %v6059
        %v6061 = vlaneseq
        %v6062 = vshrl.u32 %v6061, 7
        %v6063 = vsub.s32 0, %v6062
        %v6064 = vrot.slane %v5928, %v6063
        %v6065 = vlaneseq
        %v6066 = vshrl.u32 %v6065, 7
        %v6067 = vsub.s32 0, %v6066
        %v6068 = vrot.slane %v5929, %v6067
        %v6069 = vlaneseq
        %v6070 = vshrl.u32 %v6069, 7
        %v6071 = vsub.s32 0, %v6070
        %v6072 = vrot.slane %v5930, %v6071
        %v6073 = vlaneseq
        %v6074 = vshrl.u32 %v6073, 7
        %v6075 = vsub.s32 0, %v6074
        %v6076 = vrot.slane %v5931, %v6075
        %v6077 = vlaneseq
        %v6078 = vshrl.u32 %v6077, 7
        %v6079 = vsub.s32 0, %v6078
        %v6080 = vrot.slane %v5932, %v6079
        %v6081 = vlaneseq
        %v6082 = vshrl.u32 %v6081, 7
        %v6083 = vsub.s32 0, %v6082
        %v6084 = vrot.slane %v5933, %v6083
        %v6085 = vlaneseq
        %v6086 = vshrl.u32 %v6085, 7
        %v6087 = vsub.s32 0, %v6086
        %v6088 = vrot.slane %v5934, %v6087
        %v6089 = vlaneseq
        %v6090 = vshrl.u32 %v6089, 7
        %v6091 = vsub.s32 0, %v6090
        %v6092 = vrot.slane %v5935, %v6091
        %v6093 = vlaneseq
        %v6094 = vshrl.u32 %v6093, 7
        %v6095 = vsub.s32 0, %v6094
        %v6096 = vrot.slane %v5936, %v6095
        %vm6097 = vcmask 1041409
        %v6098 = vsel %vm6097, %v5976, %v5972
        %vm6099 = vcmask 1042434
        %v6100 = vsel %vm6099, %v5980, %v6098
        %vm6101 = vcmask 1043459
        %v6102 = vsel %vm6101, %v5984, %v6100
        %vm6103 = vcmask 1044484
        %v6104 = vsel %vm6103, %v5988, %v6102
        %vm6105 = vcmask 1045509
        %v6106 = vsel %vm6105, %v5992, %v6104
        %vm6107 = vcmask 1046534
        %v6108 = vsel %vm6107, %v5996, %v6106
        %vm6109 = vcmask 1047559
        %v6110 = vsel %vm6109, %v6000, %v6108
        %v6111 = vsel %vm6097, %v6008, %v6004
        %v6112 = vsel %vm6099, %v6012, %v6111
        %v6113 = vsel %vm6101, %v6016, %v6112
        %v6114 = vsel %vm6103, %v6020, %v6113
        %v6115 = vsel %vm6105, %v6024, %v6114
        %v6116 = vsel %vm6107, %v6028, %v6115
        %v6117 = vsel %vm6109, %v6032, %v6116
        %v6118 = vsel %vm6097, %v6040, %v6036
        %v6119 = vsel %vm6099, %v6044, %v6118
        %v6120 = vsel %vm6101, %v6048, %v6119
        %v6121 = vsel %vm6103, %v6052, %v6120
        %v6122 = vsel %vm6105, %v6056, %v6121
        %v6123 = vsel %vm6107, %v6060, %v6122
        %v6124 = vsel %vm6109, %v6064, %v6123
        %v6125 = vsel %vm6097, %v6072, %v6068
        %v6126 = vsel %vm6099, %v6076, %v6125
        %v6127 = vsel %vm6101, %v6080, %v6126
        %v6128 = vsel %vm6103, %v6084, %v6127
        %v6129 = vsel %vm6105, %v6088, %v6128
        %v6130 = vsel %vm6107, %v6092, %v6129
        %v6131 = vsel %vm6109, %v6096, %v6130
        %vm6136 = vcmask 64512
        %6137 = vst.msk [vmem:[%s268] sm:$0xff] %vm6136, %v6110
        %6138 = vst.msk [vmem:[%s268 + $0x8] sm:$0xff] %vm6136, %v6117
        %6139 = vst.msk [vmem:[%s268 + $0x10] sm:$0xff] %vm6136, %v6124
        %6140 = vst.msk [vmem:[%s268 + $0x18] sm:$0xff] %vm6136, %v6131
        %s6141 = sand.u32 %s177, 1
        %s6142 = scalar_lea.sflag [#allocation3], %s6141
        %s6143 = sand.u32 %s177, 1
        %s6144 = smul.addr %s6143, 32
        %s6145 = scalar_lea.vmem [#allocation2], %s6144
        // Predicated region
        $region45: #{tpu_custom_call.1} parent=43 // pred_check
          %p6146 = pneg %p187
        $region46: #{tpu_custom_call.1} parent=43 // pred_check_branch
          %6148 = sbr.rel (%p6146) target = $region48
        $region47: #{tpu_custom_call.1} parent=43 // pred_region
          %s6149 = smul.u32 4, %s25
          %s6151 = ssub.s32 512, 512
          %6152 = vsyncadd %s6142, %s6151
          %s6153 = smul.addr %s24, 8
          %s6154 = sadd.s32 %s6149, %s6153
          %s6155 = smul.addr %s6154, 128
          %s6156 = scalar_lea.hbm %s6, %s6155
          %s6157 = sshll.u32 %s6145, 4
          %s6158 = int_to_ptr.vmem [resolvable:$true] %s6157
          %6163 = dma.vmem_to_hbm [thread:$0]  %s6158, 512, %s6156, %s6142, 128, 128, 8
        $region48: #{tpu_custom_call.1} parent=43 // pred_fallthru
          _
      $region44: #{tpu_custom_call.1} parent=5 // pred_fallthru
        _
      %p6164 = scmp.le.s32.totalorder 2, %s15
      // Predicated region
      $region49: #{tpu_custom_call.1} parent=5 // pred_check
        %p6165 = pneg %p6164
      $region50: #{tpu_custom_call.1} parent=5 // pred_check_branch
        %6167 = sbr.rel (%p6165) target = $region52
      $region51: #{tpu_custom_call.1} parent=5 // pred_region
        %s6168 = ssub.s32 %s15, 2
        // Predicated region
        $region53: #{tpu_custom_call.1} parent=51 // pred_check
          %p6169 = pneg %p193
        $region54: #{tpu_custom_call.1} parent=51 // pred_check_branch
          %6171 = sbr.rel (%p6169) target = $region56
        $region55: #{tpu_custom_call.1} parent=51 // pred_region
          %s6172 = sand.u32 %s178, 1
          %s6173 = scalar_lea.sflag [#allocation3], %s6172
          %s6174 = sand.u32 %s178, 1
          %s6175 = smul.addr %s6174, 32
          %s6176 = scalar_lea.vmem [#allocation2], %s6175
          %6177 = dma.done %s6173, 512
        $region56: #{tpu_custom_call.1} parent=51 // pred_fallthru
          _
      $region52: #{tpu_custom_call.1} parent=5 // pred_fallthru
        _
    $region6: #{tpu_custom_call.1} parent=1 // loop_footer
      %s19 = sadd.s32 1, %s15
    $region7: #{tpu_custom_call.1} parent=1 // loop_footer_branch
      %14 = sbr.rel target = $region3
    $region8: #{tpu_custom_call.1} parent=1 // loop_exit
      _
    %6178 = vsyncpa [#allocation3], 1
    %s6179 = scalar_lea.sflag [#allocation3], 1
    %6180 = vsyncpa %s6179, 1

</llo_original>
